<compile_context>
chip_gen: v7x
topology: tpu7x:2x2x1
jax: 0.10.0
libtpu: 0.0.40
codegen_flags: <defaults>
</compile_context>

<pallas_src>
import functools
import math

import jax
import jax.numpy as jnp
from jax import lax
from jax.experimental import pallas as pl
from jax.experimental.pallas import tpu as pltpu


_VMEM_LIMIT = 64 * 1024 * 1024
_NT_DIMS = (((1,), (1,)), ((), ()))     # contract last dims: a @ b.T


# ----------------------------------------------------------------------------
# small helpers
# ----------------------------------------------------------------------------
def _layer_norm(y, gamma, beta, eps=1e-12):
    mu = jnp.mean(y, axis=-1, keepdims=True)
    var = jnp.mean(jnp.square(y - mu), axis=-1, keepdims=True)
    return (y - mu) * lax.rsqrt(var + eps) * gamma + beta


def _const_spec(shape, ngrid):
    """BlockSpec for a weight identical for every grid step (stays resident)."""
    zeros = (0,) * len(shape)
    if ngrid == 1:
        return pl.BlockSpec(shape, lambda b: zeros)
    return pl.BlockSpec(shape, lambda b, s: zeros)


def _seq_tile(S):
    for ts in (512, 256, 128):
        if S % ts == 0:
            return ts
    return S


def _largest_divisor(n, cap):
    for d in range(min(n, cap), 0, -1):
        if n % d == 0:
            return d
    return 1


# ----------------------------------------------------------------------------
# Kernel 1: embeddings LayerNorm (embedding gathers/sums are JAX glue).
# ----------------------------------------------------------------------------
def _layernorm_kernel(x_ref, g_ref, b_ref, o_ref):
    o_ref[0] = _layer_norm(x_ref[0].astype(jnp.float32),
                           g_ref[...], b_ref[...]).astype(o_ref.dtype)


def layernorm(x, gamma, beta):
    B, S, H = x.shape
    ts = _seq_tile(S)
    return pl.pallas_call(
        _layernorm_kernel,
        out_shape=jax.ShapeDtypeStruct((B, S, H), jnp.bfloat16),
        grid_spec=pltpu.PrefetchScalarGridSpec(
            num_scalar_prefetch=0,
            grid=(B, S // ts),
            in_specs=[pl.BlockSpec((1, ts, H), lambda b, s: (b, s, 0)),
                      _const_spec((1, H), 2),
                      _const_spec((1, H), 2)],
            out_specs=pl.BlockSpec((1, ts, H), lambda b, s: (b, s, 0)),
        ),
        compiler_params=pltpu.CompilerParams(
            dimension_semantics=("parallel", "parallel"),
            vmem_limit_bytes=_VMEM_LIMIT),
    )(x, gamma, beta)


# ----------------------------------------------------------------------------
# Kernel 2: fused BERT self-attention block
#   y = LayerNorm(x + Wo @ MHA(x))   (packed QKV, additive key-padding mask)
# ----------------------------------------------------------------------------
def _attention_block_kernel(x_ref, wqkv_ref, bqkv_ref, wo_ref, bo_ref,
                            g_ref, beta_ref, bias_ref, o_ref, ctx_ref, *, num_heads):
    x = x_ref[0]                                            # (S, H) bf16
    S, H = x.shape
    dh = H // num_heads

    # single packed QKV matmul (bf16 operands, f32 acc); 1/sqrt(dh) folded into Wq/bq
    qkv = jnp.dot(x, wqkv_ref[...], preferred_element_type=jnp.float32) + bqkv_ref[...]
    bias = bias_ref[0]                                      # (1, S) additive key mask

    # TODO(synk): per-head slices are 64 lanes wide (odd heads start at lane 64);
    # padding each head block to 128 lanes would remove masked extracts/stores.
    for h in range(num_heads):                              # static unroll (<= 12)
        q = qkv[:, h * dh:(h + 1) * dh].astype(jnp.bfloat16)
        k = qkv[:, H + h * dh: H + (h + 1) * dh].astype(jnp.bfloat16)
        v = qkv[:, 2 * H + h * dh: 2 * H + (h + 1) * dh].astype(jnp.bfloat16)
        s = lax.dot_general(q, k, _NT_DIMS, preferred_element_type=jnp.float32) + bias
        s = s - jnp.max(s, axis=-1, keepdims=True)
        e = jnp.exp(s)
        p = (e * pl.reciprocal(jnp.sum(e, axis=-1, keepdims=True), approx=True)
             ).astype(jnp.bfloat16)
        # stash per-head context at its column offset; ONE big Wo matmul afterwards
        ctx_ref[:, h * dh:(h + 1) * dh] = jnp.dot(
            p, v, preferred_element_type=jnp.float32)

    attn = jnp.dot(ctx_ref[...].astype(jnp.bfloat16), wo_ref[...],
                   preferred_element_type=jnp.float32) + bo_ref[...]
    y = x.astype(jnp.float32) + attn
    o_ref[0] = _layer_norm(y, g_ref[...], beta_ref[...]).astype(o_ref.dtype)


def attention_block(x, attn_bias, lp, num_heads):
    B, S, H = x.shape
    kernel = functools.partial(_attention_block_kernel, num_heads=num_heads)
    # TODO(synk): for v7x add a q-row grid axis (needs a separate K/V pass) so both
    # TensorCores are fed when B is small.
    return pl.pallas_call(
        kernel,
        out_shape=jax.ShapeDtypeStruct((B, S, H), jnp.bfloat16),
        grid_spec=pltpu.PrefetchScalarGridSpec(
            num_scalar_prefetch=0,
            grid=(B,),
            in_specs=[
                pl.BlockSpec((1, S, H), lambda b: (b, 0, 0)),
                _const_spec((H, 3 * H), 1),
                _const_spec((1, 3 * H), 1),
                _const_spec((H, H), 1),
                _const_spec((1, H), 1),
                _const_spec((1, H), 1),
                _const_spec((1, H), 1),
                pl.BlockSpec((1, 1, S), lambda b: (b, 0, 0)),
            ],
            out_specs=pl.BlockSpec((1, S, H), lambda b: (b, 0, 0)),
            scratch_shapes=[pltpu.VMEM((S, H), jnp.float32)],
        ),
        compiler_params=pltpu.CompilerParams(
            dimension_semantics=("parallel",),
            vmem_limit_bytes=_VMEM_LIMIT),
    )(x, lp["wqkv"], lp["bqkv"], lp["wo"], lp["bo"], lp["ln1_g"], lp["ln1_b"], attn_bias)


# ----------------------------------------------------------------------------
# Kernel 3: fused BERT feed-forward block
#   y = LayerNorm(x + W2 @ gelu(W1 @ x))
# ----------------------------------------------------------------------------
def _ffn_block_kernel(x_ref, w1_ref, b1_ref, w2_ref, b2_ref, g_ref, beta_ref, o_ref):
    x = x_ref[0]                                            # (ts, H) bf16
    h = jnp.dot(x, w1_ref[...], preferred_element_type=jnp.float32) + b1_ref[...]
    # TODO(synk): HF BERT default is exact erf-GELU; tanh approximation kept for robust lowering.
    h = jax.nn.gelu(h, approximate=True).astype(jnp.bfloat16)
    y = (jnp.dot(h, w2_ref[...], preferred_element_type=jnp.float32)
         + b2_ref[...] + x.astype(jnp.float32))
    o_ref[0] = _layer_norm(y, g_ref[...], beta_ref[...]).astype(o_ref.dtype)


def ffn_block(x, lp):
    B, S, H = x.shape
    I = lp["w1"].shape[1]
    ts = _seq_tile(S)
    return pl.pallas_call(
        _ffn_block_kernel,
        out_shape=jax.ShapeDtypeStruct((B, S, H), jnp.bfloat16),
        grid_spec=pltpu.PrefetchScalarGridSpec(
            num_scalar_prefetch=0,
            grid=(B, S // ts),
            in_specs=[
                pl.BlockSpec((1, ts, H), lambda b, s: (b, s, 0)),
                _const_spec((H, I), 2),
                _const_spec((1, I), 2),
                _const_spec((I, H), 2),
                _const_spec((1, H), 2),
                _const_spec((1, H), 2),
                _const_spec((1, H), 2),
            ],
            out_specs=pl.BlockSpec((1, ts, H), lambda b, s: (b, s, 0)),
        ),
        compiler_params=pltpu.CompilerParams(
            dimension_semantics=("parallel", "parallel"),
            vmem_limit_bytes=_VMEM_LIMIT),
    )(x, lp["w1"], lp["b1"], lp["w2"], lp["b2"], lp["ln2_g"], lp["ln2_b"])


# ----------------------------------------------------------------------------
# Kernel 4a: GlobalPointer entity head (rope=True, tril_mask=True), type-tiled.
#   per type t (packed columns [qa|qb|ka|kb]):
#     q_rot,k_rot assembled in VMEM -> one K=head_size matmul -> masks -> (S,S) plane
# ----------------------------------------------------------------------------
def _gp_rope_kernel(x_ref, w_ref, b_ref, cos_ref, sin_ref, mq_ref, mk_ref,
                    o_ref, rot_ref, *, t_tile, head_size, neg):
    x = x_ref[0]                                            # (S, H) bf16
    S = x.shape[0]
    hs, hh = head_size, head_size // 2

    # lane-dense projection for this type group (q columns pre-scaled by 1/sqrt(hs))
    proj = jnp.dot(x, w_ref[...], preferred_element_type=jnp.float32) + b_ref[...]
    cos = cos_ref[...]                                      # (S, hh)
    sin = sin_ref[...]

    # masks hoisted out of the type loop: query+key padding and strict lower triangle
    pad2d = mq_ref[0] * mk_ref[0]                           # (S,1)*(1,S) -> (S,S)
    row = lax.broadcasted_iota(jnp.int32, (S, S), 0)
    col = lax.broadcasted_iota(jnp.int32, (S, S), 1)
    add_plane = (pad2d - 1.0) * neg - jnp.where(row > col, neg, 0.0)

    for lt in range(t_tile):                                # small static unroll
        c0 = lt * 2 * hs
        qa = proj[:, c0:c0 + hh]
        qb = proj[:, c0 + hh:c0 + hs]
        ka = proj[:, c0 + hs:c0 + hs + hh]
        kb = proj[:, c0 + hs + hh:c0 + 2 * hs]
        # RoPE on wrapper-side de-interleaved halves (aligned FMAs, no lane shuffle);
        # rotated q|k assembled contiguously so the logits are ONE K=head_size matmul.
        rot_ref[lt, :, 0:hh] = qa * cos - qb * sin
        rot_ref[lt, :, hh:hs] = qb * cos + qa * sin
        rot_ref[lt, :, hs:hs + hh] = ka * cos - kb * sin
        rot_ref[lt, :, hs + hh:2 * hs] = kb * cos + ka * sin
        lg = lax.dot_general(rot_ref[lt, :, :hs].astype(jnp.bfloat16),
                             rot_ref[lt, :, hs:].astype(jnp.bfloat16),
                             _NT_DIMS, preferred_element_type=jnp.float32)
        o_ref[0, lt] = (lg * pad2d + add_plane).astype(o_ref.dtype)


def gp_rope_heads(x, mask_q, mask_k, W, b, cos, sin, *, num_types, head_size):
    B, S, H = x.shape
    hh = head_size // 2
    t_tile = _largest_divisor(num_types, 4)
    neg = 1e12 / math.sqrt(head_size)       # mask constant pre-divided by sqrt(hs)
    kernel = functools.partial(_gp_rope_kernel, t_tile=t_tile,
                               head_size=head_size, neg=neg)
    # TODO(synk): logits kept f32 to preserve the reference output dtype; bf16 stores
    # would halve the dominant (B,T,S,S) HBM writeback.
    return pl.pallas_call(
        kernel,
        out_shape=jax.ShapeDtypeStruct((B, num_types, S, S), jnp.float32),
        grid_spec=pltpu.PrefetchScalarGridSpec(
            num_scalar_prefetch=0,
            grid=(B, num_types // t_tile),
            in_specs=[
                pl.BlockSpec((1, S, H), lambda b, t: (b, 0, 0)),
                pl.BlockSpec((H, t_tile * 2 * head_size), lambda b, t: (0, t)),
                pl.BlockSpec((1, t_tile * 2 * head_size), lambda b, t: (0, t)),
                _const_spec((S, hh), 2),
                _const_spec((S, hh), 2),
                pl.BlockSpec((1, S, 1), lambda b, t: (b, 0, 0)),
                pl.BlockSpec((1, 1, S), lambda b, t: (b, 0, 0)),
            ],
            out_specs=pl.BlockSpec((1, t_tile, S, S), lambda b, t: (b, t, 0, 0)),
            scratch_shapes=[pltpu.VMEM((t_tile, S, 2 * head_size), jnp.float32)],
        ),
        compiler_params=pltpu.CompilerParams(
            dimension_semantics=("parallel", "parallel"),
            vmem_limit_bytes=_VMEM_LIMIT),
    )(x, W, b, cos, sin, mask_q, mask_k)


# ----------------------------------------------------------------------------
# Kernel 4b: GlobalPointer relation heads (rope=False, tril_mask=False), type-tiled.
#   per type: 128-lane-aligned q/k slices -> one K=head_size matmul -> pad mask.
# ----------------------------------------------------------------------------
def _gp_plain_kernel(x_ref, w_ref, b_ref, mq_ref, mk_ref, o_ref,
                     *, t_tile, head_size, neg):
    x = x_ref[0]                                            # (S, H) bf16
    hs = head_size
    proj = jnp.dot(x, w_ref[...], preferred_element_type=jnp.float32) + b_ref[...]
    pad2d = mq_ref[0] * mk_ref[0]                           # (S, S)
    add_plane = (pad2d - 1.0) * neg
    for lt in range(t_tile):
        c0 = lt * 2 * hs
        q = proj[:, c0:c0 + hs].astype(jnp.bfloat16)        # lane-aligned (128-wide)
        k = proj[:, c0 + hs:c0 + 2 * hs].astype(jnp.bfloat16)
        lg = lax.dot_general(q, k, _NT_DIMS, preferred_element_type=jnp.float32)
        o_ref[0, lt] = (lg * pad2d + add_plane).astype(o_ref.dtype)


def gp_plain_heads(x, mask_q, mask_k, W, b, *, num_types, head_size):
    B, S, H = x.shape
    t_tile = _largest_divisor(num_types, 4)
    neg = 1e12 / math.sqrt(head_size)
    kernel = functools.partial(_gp_plain_kernel, t_tile=t_tile,
                               head_size=head_size, neg=neg)
    return pl.pallas_call(
        kernel,
        out_shape=jax.ShapeDtypeStruct((B, num_types, S, S), jnp.float32),
        grid_spec=pltpu.PrefetchScalarGridSpec(
            num_scalar_prefetch=0,
            grid=(B, num_types // t_tile),
            in_specs=[
                pl.BlockSpec((1, S, H), lambda b, t: (b, 0, 0)),
                pl.BlockSpec((H, t_tile * 2 * head_size), lambda b, t: (0, t)),
                pl.BlockSpec((1, t_tile * 2 * head_size), lambda b, t: (0, t)),
                pl.BlockSpec((1, S, 1), lambda b, t: (b, 0, 0)),
                pl.BlockSpec((1, 1, S), lambda b, t: (b, 0, 0)),
            ],
            out_specs=pl.BlockSpec((1, t_tile, S, S), lambda b, t: (b, t, 0, 0)),
        ),
        compiler_params=pltpu.CompilerParams(
            dimension_semantics=("parallel", "parallel"),
            vmem_limit_bytes=_VMEM_LIMIT),
    )(x, W, b, mask_q, mask_k)


# ----------------------------------------------------------------------------
# Wrapper-side packing (done ONCE, outside the forward):
#   * bf16 weights, scale folds (1/sqrt(dh) into Wq/bq, 1/sqrt(hs) into GP q columns)
#   * GP weights type-major: rope types as [qa|qb|ka|kb] (even/odd de-interleaved),
#     plain types as [q|k].  The de-interleave is the same permutation on q and k,
#     so the pairwise logits are unchanged.
# ----------------------------------------------------------------------------
def _rope_tables(seq_len, head_size):
    hh = head_size // 2
    k = jnp.arange(hh, dtype=jnp.float32)
    inv_freq = jnp.power(10000.0, -2.0 * k / head_size)
    ang = jnp.arange(seq_len, dtype=jnp.float32)[:, None] * inv_freq[None, :]
    return jnp.cos(ang), jnp.sin(ang)                       # each (seq_len, hh)


def _pack_gp_rope(w, b, n, hs, scale):
    H = w.shape[0]
    w4 = w.reshape(H, n, 2, hs)                             # (H, types, q/k, head)
    b4 = b.reshape(n, 2, hs)
    qa, qb = w4[:, :, 0, 0::2] * scale, w4[:, :, 0, 1::2] * scale
    ka, kb = w4[:, :, 1, 0::2], w4[:, :, 1, 1::2]
    W = jnp.stack([qa, qb, ka, kb], axis=2).reshape(H, n * 2 * hs)
    bqa, bqb = b4[:, 0, 0::2] * scale, b4[:, 0, 1::2] * scale
    bka, bkb = b4[:, 1, 0::2], b4[:, 1, 1::2]
    bias = jnp.stack([bqa, bqb, bka, bkb], axis=1).reshape(1, n * 2 * hs)
    return W.astype(jnp.bfloat16), bias.astype(jnp.float32)


def _pack_gp_plain(w, b, n, hs, scale):
    H = w.shape[0]
    w4 = w.reshape(H, n, 2, hs).at[:, :, 0, :].multiply(scale)
    b4 = b.reshape(n, 2, hs).at[:, 0, :].multiply(scale)
    return (w4.reshape(H, n * 2 * hs).astype(jnp.bfloat16),
            b4.reshape(1, n * 2 * hs).astype(jnp.float32))


def prepare_params(params, cfg):
    H, hs, nh = cfg["hidden_size"], cfg["head_size"], cfg["num_heads"]
    dh = H // nh
    bf = jnp.bfloat16
    # fold 1/sqrt(dh) into the Wq/bq third of the packed QKV weight (exact)
    qkv_scale = jnp.concatenate([jnp.full((H,), 1.0 / math.sqrt(dh), jnp.float32),
                                 jnp.ones((2 * H,), jnp.float32)])[None, :]
    layers = []
    for lp in params["layers"]:
        layers.append({
            "wqkv": (lp["wqkv"] * qkv_scale).astype(bf),
            "bqkv": (lp["bqkv"] * qkv_scale).astype(jnp.float32),
            "wo": lp["wo"].astype(bf), "bo": lp["bo"],
            "ln1_g": lp["ln1_g"], "ln1_b": lp["ln1_b"],
            "w1": lp["w1"].astype(bf), "b1": lp["b1"],
            "w2": lp["w2"].astype(bf), "b2": lp["b2"],
            "ln2_g": lp["ln2_g"], "ln2_b": lp["ln2_b"],
        })
    gp_scale = 1.0 / math.sqrt(hs)
    ent_w, ent_b = _pack_gp_rope(params["ent_w"], params["ent_b"],
                                 cfg["entity_types_num"], hs, gp_scale)
    rh_w, rh_b = _pack_gp_plain(params["rel_head_w"], params["rel_head_b"],
                                cfg["relation_num"], hs, gp_scale)
    rt_w, rt_b = _pack_gp_plain(params["rel_tail_w"], params["rel_tail_b"],
                                cfg["relation_num"], hs, gp_scale)
    cos, sin = _rope_tables(cfg["max_position"], hs)
    return {
        "word_emb": params["word_emb"], "pos_emb": params["pos_emb"],
        "tok_emb": params["tok_emb"],
        "emb_ln_g": params["emb_ln_g"], "emb_ln_b": params["emb_ln_b"],
        "layers": layers,
        "ent_w": ent_w, "ent_b": ent_b,
        "rel_w": jnp.concatenate([rh_w, rt_w], axis=1),
        "rel_b": jnp.concatenate([rh_b, rt_b], axis=1),
        "cos": cos, "sin": sin,
    }


# ----------------------------------------------------------------------------
# Full forward (JAX glue: embedding gathers, mask shaping, output splits).
# ----------------------------------------------------------------------------
def global_pointer_for_rel_forward(input_ids, attention_mask, token_type_ids, prep, cfg):
    B, S = input_ids.shape
    hs = cfg["head_size"]
    n_ent, n_rel = cfg["entity_types_num"], cfg["relation_num"]
    amask = attention_mask.astype(jnp.float32)

    # ---- BERT embeddings (gathers in JAX glue; LayerNorm in Pallas) ----
    emb = (prep["word_emb"][input_ids]
           + prep["pos_emb"][:S][None, :, :]
           + prep["tok_emb"][token_type_ids])
    hstate = layernorm(emb, prep["emb_ln_g"], prep["emb_ln_b"])        # bf16

    attn_bias = ((1.0 - amask) * -10000.0)[:, None, :]                 # (B, 1, S)
    for lp in prep["layers"]:
        hstate = attention_block(hstate, attn_bias, lp, cfg["num_heads"])
        hstate = ffn_block(hstate, lp)

    # ---- GlobalPointer heads (padding masks both query and key axes) ----
    mask_q = amask[:, :, None]                                         # (B, S, 1)
    mask_k = amask[:, None, :]                                         # (B, 1, S)
    cos, sin = prep["cos"][:S], prep["sin"][:S]

    ent = gp_rope_heads(hstate, mask_q, mask_k, prep["ent_w"], prep["ent_b"],
                        cos, sin, num_types=n_ent, head_size=hs)
    rel = gp_plain_heads(hstate, mask_q, mask_k, prep["rel_w"], prep["rel_b"],
                         num_types=2 * n_rel, head_size=hs)
    return {
        "entity_logits": ent,                  # (B, n_ent, S, S)  rope + tril mask
        "head_logits": rel[:, :n_rel],         # (B, n_rel, S, S)
        "tail_logits": rel[:, n_rel:],         # (B, n_rel, S, S)
    }


# ----------------------------------------------------------------------------
# Deterministic synthetic parameters (shapes follow BertModel + GlobalPointer).
# ----------------------------------------------------------------------------
def init_params(key, cfg):
    H, I = cfg["hidden_size"], cfg["intermediate_size"]
    hs = cfg["head_size"]

    def nrm(k, shape, scale=0.02):
        return (scale * jax.random.normal(k, shape)).astype(jnp.float32)

    ki = iter(jax.random.split(key, 16 + 8 * cfg["num_layers"]))
    params = {
        "word_emb": nrm(next(ki), (cfg["vocab_size"], H)),
        "pos_emb": nrm(next(ki), (cfg["max_position"], H)),
        "tok_emb": nrm(next(ki), (2, H)),
        "emb_ln_g": jnp.ones((1, H), jnp.float32),
        "emb_ln_b": jnp.zeros((1, H), jnp.float32),
        "layers": [],
    }
    for _ in range(cfg["num_layers"]):
        params["layers"].append({
            "wqkv": nrm(next(ki), (H, 3 * H)),      # [Wq | Wk | Wv] packed, (in, out)
            "bqkv": nrm(next(ki), (1, 3 * H)),
            "wo": nrm(next(ki), (H, H)),
            "bo": nrm(next(ki), (1, H)),
            "ln1_g": jnp.ones((1, H), jnp.float32),
            "ln1_b": jnp.zeros((1, H), jnp.float32),
            "w1": nrm(next(ki), (H, I)),
            "b1": nrm(next(ki), (1, I)),
            "w2": nrm(next(ki), (I, H)),
            "b2": nrm(next(ki), (1, H)),
            "ln2_g": jnp.ones((1, H), jnp.float32),
            "ln2_b": jnp.zeros((1, H), jnp.float32),
        })
    # GlobalPointer dense layers in their natural (torch) layout: per type [q | k].
    params["ent_w"] = nrm(next(ki), (H, cfg["entity_types_num"] * 2 * hs))
    params["ent_b"] = nrm(next(ki), (cfg["entity_types_num"] * 2 * hs,))
    params["rel_head_w"] = nrm(next(ki), (H, cfg["relation_num"] * 2 * hs))
    params["rel_head_b"] = nrm(next(ki), (cfg["relation_num"] * 2 * hs,))
    params["rel_tail_w"] = nrm(next(ki), (H, cfg["relation_num"] * 2 * hs))
    params["rel_tail_b"] = nrm(next(ki), (cfg["relation_num"] * 2 * hs,))
    return params


if __name__ == "__main__":
    B, S = 2, 16
    cfg = dict(
        vocab_size=64,
        max_position=64,
        hidden_size=128,
        intermediate_size=512,
        num_layers=2,
        num_heads=2,
        head_size=64,
        entity_types_num=2,
        relation_num=3,
    )

    key = jax.random.PRNGKey(0)
    k_param, k_ids = jax.random.split(key)
    params = init_params(k_param, cfg)
    prep = prepare_params(params, cfg)        # packing hoisted out of the forward

    input_ids = jax.random.randint(k_ids, (B, S), 0, cfg["vocab_size"])
    token_type_ids = jnp.zeros((B, S), jnp.int32)
    # exercise padding masking: last 3 tokens of batch element 1 are padding
    attention_mask = jnp.ones((B, S), jnp.float32).at[1, S - 3:].set(0.0)

    # TODO(synk): all dropout layers are treated as identity (inference mode).
    fwd = jax.jit(functools.partial(global_pointer_for_rel_forward, cfg=cfg))
    outputs = jax.block_until_ready(fwd(input_ids, attention_mask, token_type_ids, prep))

    ent, head, tail = outputs["entity_logits"], outputs["head_logits"], outputs["tail_logits"]
    assert ent.shape == (B, cfg["entity_types_num"], S, S), ent.shape
    assert head.shape == (B, cfg["relation_num"], S, S), head.shape
    assert tail.shape == (B, cfg["relation_num"], S, S), tail.shape
    assert ent.dtype == jnp.float32
    assert bool(jnp.all(jnp.isfinite(ent)) & jnp.all(jnp.isfinite(head)) & jnp.all(jnp.isfinite(tail)))
    # entity head: strictly-lower-triangular pairs are masked out (tril_mask=True)
    assert float(ent[0, 0, 5, 2]) < -1e10
    # padded key position masked, and padded query row masked (both axes)
    assert float(head[1, 0, 0, S - 1]) < -1e10
    assert float(tail[1, 0, S - 1, 0]) < -1e10
    # unmasked logits stay at a regular scale
    assert abs(float(head[0, 0, 3, 5])) < 1e6
    print("KERNEL_OK")
</pallas_src>

<mosaic_0001>
module attributes {stable_mosaic.version = 11 : i64} {
  func.func @_layernorm_kernel(%arg0: i32, %arg1: i32, %arg2: memref<1x16x128xf32, #tpu.memory_space<vmem>>, %arg3: memref<1x128xf32, #tpu.memory_space<vmem>>, %arg4: memref<1x128xf32, #tpu.memory_space<vmem>>, %arg5: memref<1x16x128xbf16, #tpu.memory_space<vmem>>) attributes {dimension_semantics = [#tpu.dimension_semantics<parallel>, #tpu.dimension_semantics<parallel>], iteration_bounds = array<i64: 2, 1>, scalar_prefetch = 0 : i64, scratch_operands = 0 : i64, tpu.core_type = #tpu.core_type<tc>, window_params = [{transform_indices = @transform_0, window_bounds = array<i64: 1, 16, 128>}, {pipeline_mode = #tpu.pipeline_mode<synchronous>, transform_indices = @transform_1, window_bounds = array<i64: 1, 128>}, {pipeline_mode = #tpu.pipeline_mode<synchronous>, transform_indices = @transform_2, window_bounds = array<i64: 1, 128>}, {transform_indices = @transform_3, window_bounds = array<i64: 1, 16, 128>}]} {
    %c0 = arith.constant 0 : index
    %c0_0 = arith.constant 0 : index
    %c0_1 = arith.constant 0 : index
    %0 = vector.load %arg2[%c0, %c0_0, %c0_1] : memref<1x16x128xf32, #tpu.memory_space<vmem>>, vector<1x16x128xf32>
    %1 = vector.shape_cast %0 : vector<1x16x128xf32> to vector<16x128xf32>
    %c0_2 = arith.constant 0 : index
    %c0_3 = arith.constant 0 : index
    %2 = vector.load %arg3[%c0_2, %c0_3] : memref<1x128xf32, #tpu.memory_space<vmem>>, vector<1x128xf32>
    %c0_4 = arith.constant 0 : index
    %c0_5 = arith.constant 0 : index
    %3 = vector.load %arg4[%c0_4, %c0_5] : memref<1x128xf32, #tpu.memory_space<vmem>>, vector<1x128xf32>
    %cst = arith.constant dense<0.000000e+00> : vector<16xf32>
    %4 = vector.multi_reduction <add>, %1, %cst [1] : vector<16x128xf32> to vector<16xf32>
    %5 = vector.shape_cast %4 : vector<16xf32> to vector<16x1xf32>
    %cst_6 = arith.constant 1.280000e+02 : f32
    %6 = vector.broadcast %cst_6 : f32 to vector<16x1xf32>
    %7 = arith.divf %5, %6 : vector<16x1xf32>
    %8 = vector.broadcast %7 : vector<16x1xf32> to vector<16x128xf32>
    %9 = arith.subf %1, %8 : vector<16x128xf32>
    %10 = arith.mulf %9, %9 : vector<16x128xf32>
    %cst_7 = arith.constant dense<0.000000e+00> : vector<16xf32>
    %11 = vector.multi_reduction <add>, %10, %cst_7 [1] : vector<16x128xf32> to vector<16xf32>
    %12 = vector.shape_cast %11 : vector<16xf32> to vector<16x1xf32>
    %cst_8 = arith.constant 1.280000e+02 : f32
    %13 = vector.broadcast %cst_8 : f32 to vector<16x1xf32>
    %14 = arith.divf %12, %13 : vector<16x1xf32>
    %15 = vector.broadcast %7 : vector<16x1xf32> to vector<16x128xf32>
    %16 = arith.subf %1, %15 : vector<16x128xf32>
    %cst_9 = arith.constant 9.99999996E-13 : f32
    %17 = vector.broadcast %cst_9 : f32 to vector<16x1xf32>
    %18 = arith.addf %14, %17 : vector<16x1xf32>
    %19 = math.rsqrt %18 : vector<16x1xf32>
    %20 = vector.broadcast %19 : vector<16x1xf32> to vector<16x128xf32>
    %21 = arith.mulf %16, %20 : vector<16x128xf32>
    %22 = vector.broadcast %2 : vector<1x128xf32> to vector<16x128xf32>
    %23 = arith.mulf %21, %22 : vector<16x128xf32>
    %24 = vector.broadcast %3 : vector<1x128xf32> to vector<16x128xf32>
    %25 = arith.addf %23, %24 : vector<16x128xf32>
    %26 = arith.truncf %25 : vector<16x128xf32> to vector<16x128xbf16>
    %c0_10 = arith.constant 0 : index
    %c0_11 = arith.constant 0 : index
    %c0_12 = arith.constant 0 : index
    %27 = vector.load %arg5[%c0_10, %c0_11, %c0_12] : memref<1x16x128xbf16, #tpu.memory_space<vmem>>, vector<1x16x128xbf16>
    %28 = vector.shape_cast %27 : vector<1x16x128xbf16> to vector<16x128xbf16>
    %29 = vector.shape_cast %26 : vector<16x128xbf16> to vector<1x16x128xbf16>
    tpu.vector_store %arg5[%c0_10, %c0_11, %c0_12], %29 {strides = array<i32>} : memref<1x16x128xbf16, #tpu.memory_space<vmem>>, vector<1x16x128xbf16>,
    return
  }
  func.func @transform_0(%arg0: i32, %arg1: i32) -> (i32, i32, i32) {
    %c0_i32 = arith.constant 0 : i32
    %c0_i32_0 = arith.constant 0 : i32
    return %arg0, %arg1, %c0_i32 : i32, i32, i32
  }
  func.func @transform_1(%arg0: i32, %arg1: i32) -> (i32, i32) {
    %c0_i32 = arith.constant 0 : i32
    %c0_i32_0 = arith.constant 0 : i32
    %c0_i32_1 = arith.constant 0 : i32
    return %c0_i32, %c0_i32_0 : i32, i32
  }
  func.func @transform_2(%arg0: i32, %arg1: i32) -> (i32, i32) {
    %c0_i32 = arith.constant 0 : i32
    %c0_i32_0 = arith.constant 0 : i32
    %c0_i32_1 = arith.constant 0 : i32
    return %c0_i32, %c0_i32_0 : i32, i32
  }
  func.func @transform_3(%arg0: i32, %arg1: i32) -> (i32, i32, i32) {
    %c0_i32 = arith.constant 0 : i32
    %c0_i32_0 = arith.constant 0 : i32
    return %arg0, %arg1, %c0_i32 : i32, i32, i32
  }
}

module attributes {stable_mosaic.version = 11 : i64} {
  func.func @_ffn_block_kernel(%arg0: i32, %arg1: i32, %arg2: memref<1x16x128xbf16, #tpu.memory_space<vmem>>, %arg3: memref<128x512xbf16, #tpu.memory_space<vmem>>, %arg4: memref<1x512xf32, #tpu.memory_space<vmem>>, %arg5: memref<512x128xbf16, #tpu.memory_space<vmem>>, %arg6: memref<1x128xf32, #tpu.memory_space<vmem>>, %arg7: memref<1x128xf32, #tpu.memory_space<vmem>>, %arg8: memref<1x128xf32, #tpu.memory_space<vmem>>, %arg9: memref<1x16x128xbf16, #tpu.memory_space<vmem>>) attributes {dimension_semantics = [#tpu.dimension_semantics<parallel>, #tpu.dimension_semantics<parallel>], iteration_bounds = array<i64: 2, 1>, scalar_prefetch = 0 : i64, scratch_operands = 0 : i64, tpu.core_type = #tpu.core_type<tc>, window_params = [{transform_indices = @transform_0, window_bounds = array<i64: 1, 16, 128>}, {pipeline_mode = #tpu.pipeline_mode<synchronous>, transform_indices = @transform_1, window_bounds = array<i64: 128, 512>}, {pipeline_mode = #tpu.pipeline_mode<synchronous>, transform_indices = @transform_2, window_bounds = array<i64: 1, 512>}, {pipeline_mode = #tpu.pipeline_mode<synchronous>, transform_indices = @transform_3, window_bounds = array<i64: 512, 128>}, {pipeline_mode = #tpu.pipeline_mode<synchronous>, transform_indices = @transform_4, window_bounds = array<i64: 1, 128>}, {pipeline_mode = #tpu.pipeline_mode<synchronous>, transform_indices = @transform_5, window_bounds = array<i64: 1, 128>}, {pipeline_mode = #tpu.pipeline_mode<synchronous>, transform_indices = @transform_6, window_bounds = array<i64: 1, 128>}, {transform_indices = @transform_7, window_bounds = array<i64: 1, 16, 128>}]} {
    %c0 = arith.constant 0 : index
    %c0_0 = arith.constant 0 : index
    %c0_1 = arith.constant 0 : index
    %0 = vector.load %arg2[%c0, %c0_0, %c0_1] : memref<1x16x128xbf16, #tpu.memory_space<vmem>>, vector<1x16x128xbf16>
    %1 = vector.shape_cast %0 : vector<1x16x128xbf16> to vector<16x128xbf16>
    %c0_2 = arith.constant 0 : index
    %c0_3 = arith.constant 0 : index
    %2 = vector.load %arg3[%c0_2, %c0_3] : memref<128x512xbf16, #tpu.memory_space<vmem>>, vector<128x512xbf16>
    %cst = arith.constant dense<0.000000e+00> : vector<16x512xf32>
    %3 = tpu.matmul %1, %2, %cst {dimension_numbers = #tpu.dot_dimension_numbers<[1], [0], [0], [1], [0, 0, 1, 1], [], []>} : vector<16x128xbf16>, vector<128x512xbf16>, vector<16x512xf32> -> vector<16x512xf32>
    %c0_4 = arith.constant 0 : index
    %c0_5 = arith.constant 0 : index
    %4 = vector.load %arg4[%c0_4, %c0_5] : memref<1x512xf32, #tpu.memory_space<vmem>>, vector<1x512xf32>
    %5 = vector.broadcast %4 : vector<1x512xf32> to vector<16x512xf32>
    %6 = arith.addf %3, %5 : vector<16x512xf32>
    %7 = arith.mulf %6, %6 : vector<16x512xf32>
    %8 = arith.mulf %6, %7 : vector<16x512xf32>
    %cst_6 = arith.constant 4.471500e-02 : f32
    %9 = vector.broadcast %cst_6 : f32 to vector<16x512xf32>
    %10 = arith.mulf %9, %8 : vector<16x512xf32>
    %11 = arith.addf %6, %10 : vector<16x512xf32>
    %cst_7 = arith.constant 0.797884583 : f32
    %12 = vector.broadcast %cst_7 : f32 to vector<16x512xf32>
    %13 = arith.mulf %12, %11 : vector<16x512xf32>
    %14 = math.tanh %13 : vector<16x512xf32>
    %cst_8 = arith.constant 1.000000e+00 : f32
    %15 = vector.broadcast %cst_8 : f32 to vector<16x512xf32>
    %16 = arith.addf %15, %14 : vector<16x512xf32>
    %cst_9 = arith.constant 5.000000e-01 : f32
    %17 = vector.broadcast %cst_9 : f32 to vector<16x512xf32>
    %18 = arith.mulf %17, %16 : vector<16x512xf32>
    %19 = arith.mulf %6, %18 : vector<16x512xf32>
    %20 = arith.truncf %19 : vector<16x512xf32> to vector<16x512xbf16>
    %c0_10 = arith.constant 0 : index
    %c0_11 = arith.constant 0 : index
    %21 = vector.load %arg5[%c0_10, %c0_11] : memref<512x128xbf16, #tpu.memory_space<vmem>>, vector<512x128xbf16>
    %cst_12 = arith.constant dense<0.000000e+00> : vector<16x128xf32>
    %22 = tpu.matmul %20, %21, %cst_12 {dimension_numbers = #tpu.dot_dimension_numbers<[1], [0], [0], [1], [0, 0, 1, 1], [], []>} : vector<16x512xbf16>, vector<512x128xbf16>, vector<16x128xf32> -> vector<16x128xf32>
    %c0_13 = arith.constant 0 : index
    %c0_14 = arith.constant 0 : index
    %23 = vector.load %arg6[%c0_13, %c0_14] : memref<1x128xf32, #tpu.memory_space<vmem>>, vector<1x128xf32>
    %24 = vector.broadcast %23 : vector<1x128xf32> to vector<16x128xf32>
    %25 = arith.addf %22, %24 : vector<16x128xf32>
    %26 = arith.extf %1 : vector<16x128xbf16> to vector<16x128xf32>
    %27 = arith.addf %25, %26 : vector<16x128xf32>
    %c0_15 = arith.constant 0 : index
    %c0_16 = arith.constant 0 : index
    %28 = vector.load %arg7[%c0_15, %c0_16] : memref<1x128xf32, #tpu.memory_space<vmem>>, vector<1x128xf32>
    %c0_17 = arith.constant 0 : index
    %c0_18 = arith.constant 0 : index
    %29 = vector.load %arg8[%c0_17, %c0_18] : memref<1x128xf32, #tpu.memory_space<vmem>>, vector<1x128xf32>
    %cst_19 = arith.constant dense<0.000000e+00> : vector<16xf32>
    %30 = vector.multi_reduction <add>, %27, %cst_19 [1] : vector<16x128xf32> to vector<16xf32>
    %31 = vector.shape_cast %30 : vector<16xf32> to vector<16x1xf32>
    %cst_20 = arith.constant 1.280000e+02 : f32
    %32 = vector.broadcast %cst_20 : f32 to vector<16x1xf32>
    %33 = arith.divf %31, %32 : vector<16x1xf32>
    %34 = vector.broadcast %33 : vector<16x1xf32> to vector<16x128xf32>
    %35 = arith.subf %27, %34 : vector<16x128xf32>
    %36 = arith.mulf %35, %35 : vector<16x128xf32>
    %cst_21 = arith.constant dense<0.000000e+00> : vector<16xf32>
    %37 = vector.multi_reduction <add>, %36, %cst_21 [1] : vector<16x128xf32> to vector<16xf32>
    %38 = vector.shape_cast %37 : vector<16xf32> to vector<16x1xf32>
    %cst_22 = arith.constant 1.280000e+02 : f32
    %39 = vector.broadcast %cst_22 : f32 to vector<16x1xf32>
    %40 = arith.divf %38, %39 : vector<16x1xf32>
    %41 = vector.broadcast %33 : vector<16x1xf32> to vector<16x128xf32>
    %42 = arith.subf %27, %41 : vector<16x128xf32>
    %cst_23 = arith.constant 9.99999996E-13 : f32
    %43 = vector.broadcast %cst_23 : f32 to vector<16x1xf32>
    %44 = arith.addf %40, %43 : vector<16x1xf32>
    %45 = math.rsqrt %44 : vector<16x1xf32>
    %46 = vector.broadcast %45 : vector<16x1xf32> to vector<16x128xf32>
    %47 = arith.mulf %42, %46 : vector<16x128xf32>
    %48 = vector.broadcast %28 : vector<1x128xf32> to vector<16x128xf32>
    %49 = arith.mulf %47, %48 : vector<16x128xf32>
    %50 = vector.broadcast %29 : vector<1x128xf32> to vector<16x128xf32>
    %51 = arith.addf %49, %50 : vector<16x128xf32>
    %52 = arith.truncf %51 : vector<16x128xf32> to vector<16x128xbf16>
    %c0_24 = arith.constant 0 : index
    %c0_25 = arith.constant 0 : index
    %c0_26 = arith.constant 0 : index
    %53 = vector.load %arg9[%c0_24, %c0_25, %c0_26] : memref<1x16x128xbf16, #tpu.memory_space<vmem>>, vector<1x16x128xbf16>
    %54 = vector.shape_cast %53 : vector<1x16x128xbf16> to vector<16x128xbf16>
    %55 = vector.shape_cast %52 : vector<16x128xbf16> to vector<1x16x128xbf16>
    tpu.vector_store %arg9[%c0_24, %c0_25, %c0_26], %55 {strides = array<i32>} : memref<1x16x128xbf16, #tpu.memory_space<vmem>>, vector<1x16x128xbf16>,
    return
  }
  func.func @transform_0(%arg0: i32, %arg1: i32) -> (i32, i32, i32) {
    %c0_i32 = arith.constant 0 : i32
    %c0_i32_0 = arith.constant 0 : i32
    return %arg0, %arg1, %c0_i32 : i32, i32, i32
  }
  func.func @transform_1(%arg0: i32, %arg1: i32) -> (i32, i32) {
    %c0_i32 = arith.constant 0 : i32
    %c0_i32_0 = arith.constant 0 : i32
    %c0_i32_1 = arith.constant 0 : i32
    return %c0_i32, %c0_i32_0 : i32, i32
  }
  func.func @transform_2(%arg0: i32, %arg1: i32) -> (i32, i32) {
    %c0_i32 = arith.constant 0 : i32
    %c0_i32_0 = arith.constant 0 : i32
    %c0_i32_1 = arith.constant 0 : i32
    return %c0_i32, %c0_i32_0 : i32, i32
  }
  func.func @transform_3(%arg0: i32, %arg1: i32) -> (i32, i32) {
    %c0_i32 = arith.constant 0 : i32
    %c0_i32_0 = arith.constant 0 : i32
    %c0_i32_1 = arith.constant 0 : i32
    return %c0_i32, %c0_i32_0 : i32, i32
  }
  func.func @transform_4(%arg0: i32, %arg1: i32) -> (i32, i32) {
    %c0_i32 = arith.constant 0 : i32
    %c0_i32_0 = arith.constant 0 : i32
    %c0_i32_1 = arith.constant 0 : i32
    return %c0_i32, %c0_i32_0 : i32, i32
  }
  func.func @transform_5(%arg0: i32, %arg1: i32) -> (i32, i32) {
    %c0_i32 = arith.constant 0 : i32
    %c0_i32_0 = arith.constant 0 : i32
    %c0_i32_1 = arith.constant 0 : i32
    return %c0_i32, %c0_i32_0 : i32, i32
  }
  func.func @transform_6(%arg0: i32, %arg1: i32) -> (i32, i32) {
    %c0_i32 = arith.constant 0 : i32
    %c0_i32_0 = arith.constant 0 : i32
    %c0_i32_1 = arith.constant 0 : i32
    return %c0_i32, %c0_i32_0 : i32, i32
  }
  func.func @transform_7(%arg0: i32, %arg1: i32) -> (i32, i32, i32) {
    %c0_i32 = arith.constant 0 : i32
    %c0_i32_0 = arith.constant 0 : i32
    return %arg0, %arg1, %c0_i32 : i32, i32, i32
  }
}

module attributes {stable_mosaic.version = 11 : i64} {
  func.func @_attention_block_kernel(%arg0: i32, %arg1: memref<1x16x128xbf16, #tpu.memory_space<vmem>>, %arg2: memref<128x384xbf16, #tpu.memory_space<vmem>>, %arg3: memref<1x384xf32, #tpu.memory_space<vmem>>, %arg4: memref<128x128xbf16, #tpu.memory_space<vmem>>, %arg5: memref<1x128xf32, #tpu.memory_space<vmem>>, %arg6: memref<1x128xf32, #tpu.memory_space<vmem>>, %arg7: memref<1x128xf32, #tpu.memory_space<vmem>>, %arg8: memref<1x1x16xf32, #tpu.memory_space<vmem>>, %arg9: memref<1x16x128xbf16, #tpu.memory_space<vmem>>, %arg10: memref<16x128xf32, #tpu.memory_space<vmem>>) attributes {dimension_semantics = [#tpu.dimension_semantics<parallel>], iteration_bounds = array<i64: 2>, scalar_prefetch = 0 : i64, scratch_operands = 1 : i64, tpu.core_type = #tpu.core_type<tc>, window_params = [{transform_indices = @transform_0, window_bounds = array<i64: 1, 16, 128>}, {pipeline_mode = #tpu.pipeline_mode<synchronous>, transform_indices = @transform_1, window_bounds = array<i64: 128, 384>}, {pipeline_mode = #tpu.pipeline_mode<synchronous>, transform_indices = @transform_2, window_bounds = array<i64: 1, 384>}, {pipeline_mode = #tpu.pipeline_mode<synchronous>, transform_indices = @transform_3, window_bounds = array<i64: 128, 128>}, {pipeline_mode = #tpu.pipeline_mode<synchronous>, transform_indices = @transform_4, window_bounds = array<i64: 1, 128>}, {pipeline_mode = #tpu.pipeline_mode<synchronous>, transform_indices = @transform_5, window_bounds = array<i64: 1, 128>}, {pipeline_mode = #tpu.pipeline_mode<synchronous>, transform_indices = @transform_6, window_bounds = array<i64: 1, 128>}, {transform_indices = @transform_7, window_bounds = array<i64: 1, 1, 16>}, {transform_indices = @transform_8, window_bounds = array<i64: 1, 16, 128>}]} {
    %c0 = arith.constant 0 : index
    %c0_0 = arith.constant 0 : index
    %c0_1 = arith.constant 0 : index
    %0 = vector.load %arg1[%c0, %c0_0, %c0_1] : memref<1x16x128xbf16, #tpu.memory_space<vmem>>, vector<1x16x128xbf16>
    %1 = vector.shape_cast %0 : vector<1x16x128xbf16> to vector<16x128xbf16>
    %c0_2 = arith.constant 0 : index
    %c0_3 = arith.constant 0 : index
    %2 = vector.load %arg2[%c0_2, %c0_3] : memref<128x384xbf16, #tpu.memory_space<vmem>>, vector<128x384xbf16>
    %cst = arith.constant dense<0.000000e+00> : vector<16x384xf32>
    %3 = tpu.matmul %1, %2, %cst {dimension_numbers = #tpu.dot_dimension_numbers<[1], [0], [0], [1], [0, 0, 1, 1], [], []>} : vector<16x128xbf16>, vector<128x384xbf16>, vector<16x384xf32> -> vector<16x384xf32>
    %c0_4 = arith.constant 0 : index
    %c0_5 = arith.constant 0 : index
    %4 = vector.load %arg3[%c0_4, %c0_5] : memref<1x384xf32, #tpu.memory_space<vmem>>, vector<1x384xf32>
    %5 = vector.broadcast %4 : vector<1x384xf32> to vector<16x384xf32>
    %6 = arith.addf %3, %5 : vector<16x384xf32>
    %c0_6 = arith.constant 0 : index
    %c0_7 = arith.constant 0 : index
    %c0_8 = arith.constant 0 : index
    %7 = vector.load %arg8[%c0_6, %c0_7, %c0_8] : memref<1x1x16xf32, #tpu.memory_space<vmem>>, vector<1x1x16xf32>
    %8 = vector.shape_cast %7 : vector<1x1x16xf32> to vector<1x16xf32>
    %9 = vector.extract_strided_slice %6 {offsets = [0, 0], sizes = [16, 64], strides = [1, 1]} : vector<16x384xf32> to vector<16x64xf32>
    %10 = arith.truncf %9 : vector<16x64xf32> to vector<16x64xbf16>
    %11 = vector.extract_strided_slice %6 {offsets = [0, 128], sizes = [16, 64], strides = [1, 1]} : vector<16x384xf32> to vector<16x64xf32>
    %12 = arith.truncf %11 : vector<16x64xf32> to vector<16x64xbf16>
    %13 = vector.extract_strided_slice %6 {offsets = [0, 256], sizes = [16, 64], strides = [1, 1]} : vector<16x384xf32> to vector<16x64xf32>
    %14 = arith.truncf %13 : vector<16x64xf32> to vector<16x64xbf16>
    %cst_9 = arith.constant dense<0.000000e+00> : vector<16x16xf32>
    %15 = tpu.matmul %10, %12, %cst_9 {dimension_numbers = #tpu.dot_dimension_numbers<[1], [1], [0], [0], [0, 0, 1, 0], [], []>} : vector<16x64xbf16>, vector<16x64xbf16>, vector<16x16xf32> -> vector<16x16xf32>
    %16 = vector.broadcast %8 : vector<1x16xf32> to vector<16x16xf32>
    %17 = arith.addf %15, %16 : vector<16x16xf32>
    %cst_10 = arith.constant dense<0xFF800000> : vector<16xf32>
    %18 = vector.multi_reduction <maximumf>, %17, %cst_10 [1] : vector<16x16xf32> to vector<16xf32>
    %19 = vector.shape_cast %18 : vector<16xf32> to vector<16x1xf32>
    %20 = vector.broadcast %19 : vector<16x1xf32> to vector<16x16xf32>
    %21 = arith.subf %17, %20 : vector<16x16xf32>
    %22 = math.exp %21 : vector<16x16xf32>
    %cst_11 = arith.constant dense<0.000000e+00> : vector<16xf32>
    %23 = vector.multi_reduction <add>, %22, %cst_11 [1] : vector<16x16xf32> to vector<16xf32>
    %24 = vector.shape_cast %23 : vector<16xf32> to vector<16x1xf32>
    %25 = tpu.reciprocal %24 {approx = true} : vector<16x1xf32> -> vector<16x1xf32>
    %26 = vector.broadcast %25 : vector<16x1xf32> to vector<16x16xf32>
    %27 = arith.mulf %22, %26 : vector<16x16xf32>
    %28 = arith.truncf %27 : vector<16x16xf32> to vector<16x16xbf16>
    %cst_12 = arith.constant dense<0.000000e+00> : vector<16x64xf32>
    %29 = tpu.matmul %28, %14, %cst_12 {dimension_numbers = #tpu.dot_dimension_numbers<[1], [0], [0], [1], [0, 0, 1, 1], [], []>} : vector<16x16xbf16>, vector<16x64xbf16>, vector<16x64xf32> -> vector<16x64xf32>
    %c0_13 = arith.constant 0 : index
    %c0_14 = arith.constant 0 : index
    %30 = vector.load %arg10[%c0_13, %c0_14] : memref<16x128xf32, #tpu.memory_space<vmem>>, vector<16x64xf32>
    tpu.vector_store %arg10[%c0_13, %c0_14], %29 {strides = array<i32>} : memref<16x128xf32, #tpu.memory_space<vmem>>, vector<16x64xf32>,
    %31 = vector.extract_strided_slice %6 {offsets = [0, 64], sizes = [16, 64], strides = [1, 1]} : vector<16x384xf32> to vector<16x64xf32>
    %32 = arith.truncf %31 : vector<16x64xf32> to vector<16x64xbf16>
    %33 = vector.extract_strided_slice %6 {offsets = [0, 192], sizes = [16, 64], strides = [1, 1]} : vector<16x384xf32> to vector<16x64xf32>
    %34 = arith.truncf %33 : vector<16x64xf32> to vector<16x64xbf16>
    %35 = vector.extract_strided_slice %6 {offsets = [0, 320], sizes = [16, 64], strides = [1, 1]} : vector<16x384xf32> to vector<16x64xf32>
    %36 = arith.truncf %35 : vector<16x64xf32> to vector<16x64xbf16>
    %cst_15 = arith.constant dense<0.000000e+00> : vector<16x16xf32>
    %37 = tpu.matmul %32, %34, %cst_15 {dimension_numbers = #tpu.dot_dimension_numbers<[1], [1], [0], [0], [0, 0, 1, 0], [], []>} : vector<16x64xbf16>, vector<16x64xbf16>, vector<16x16xf32> -> vector<16x16xf32>
    %38 = vector.broadcast %8 : vector<1x16xf32> to vector<16x16xf32>
    %39 = arith.addf %37, %38 : vector<16x16xf32>
    %cst_16 = arith.constant dense<0xFF800000> : vector<16xf32>
    %40 = vector.multi_reduction <maximumf>, %39, %cst_16 [1] : vector<16x16xf32> to vector<16xf32>
    %41 = vector.shape_cast %40 : vector<16xf32> to vector<16x1xf32>
    %42 = vector.broadcast %41 : vector<16x1xf32> to vector<16x16xf32>
    %43 = arith.subf %39, %42 : vector<16x16xf32>
    %44 = math.exp %43 : vector<16x16xf32>
    %cst_17 = arith.constant dense<0.000000e+00> : vector<16xf32>
    %45 = vector.multi_reduction <add>, %44, %cst_17 [1] : vector<16x16xf32> to vector<16xf32>
    %46 = vector.shape_cast %45 : vector<16xf32> to vector<16x1xf32>
    %47 = tpu.reciprocal %46 {approx = true} : vector<16x1xf32> -> vector<16x1xf32>
    %48 = vector.broadcast %47 : vector<16x1xf32> to vector<16x16xf32>
    %49 = arith.mulf %44, %48 : vector<16x16xf32>
    %50 = arith.truncf %49 : vector<16x16xf32> to vector<16x16xbf16>
    %cst_18 = arith.constant dense<0.000000e+00> : vector<16x64xf32>
    %51 = tpu.matmul %50, %36, %cst_18 {dimension_numbers = #tpu.dot_dimension_numbers<[1], [0], [0], [1], [0, 0, 1, 1], [], []>} : vector<16x16xbf16>, vector<16x64xbf16>, vector<16x64xf32> -> vector<16x64xf32>
    %c0_19 = arith.constant 0 : index
    %c64 = arith.constant 64 : index
    %52 = vector.load %arg10[%c0_19, %c64] : memref<16x128xf32, #tpu.memory_space<vmem>>, vector<16x64xf32>
    tpu.vector_store %arg10[%c0_19, %c64], %51 {strides = array<i32>} : memref<16x128xf32, #tpu.memory_space<vmem>>, vector<16x64xf32>,
    %c0_20 = arith.constant 0 : index
    %c0_21 = arith.constant 0 : index
    %53 = vector.load %arg10[%c0_20, %c0_21] : memref<16x128xf32, #tpu.memory_space<vmem>>, vector<16x128xf32>
    %54 = arith.truncf %53 : vector<16x128xf32> to vector<16x128xbf16>
    %c0_22 = arith.constant 0 : index
    %c0_23 = arith.constant 0 : index
    %55 = vector.load %arg4[%c0_22, %c0_23] : memref<128x128xbf16, #tpu.memory_space<vmem>>, vector<128x128xbf16>
    %cst_24 = arith.constant dense<0.000000e+00> : vector<16x128xf32>
    %56 = tpu.matmul %54, %55, %cst_24 {dimension_numbers = #tpu.dot_dimension_numbers<[1], [0], [0], [1], [0, 0, 1, 1], [], []>} : vector<16x128xbf16>, vector<128x128xbf16>, vector<16x128xf32> -> vector<16x128xf32>
    %c0_25 = arith.constant 0 : index
    %c0_26 = arith.constant 0 : index
    %57 = vector.load %arg5[%c0_25, %c0_26] : memref<1x128xf32, #tpu.memory_space<vmem>>, vector<1x128xf32>
    %58 = vector.broadcast %57 : vector<1x128xf32> to vector<16x128xf32>
    %59 = arith.addf %56, %58 : vector<16x128xf32>
    %60 = arith.extf %1 : vector<16x128xbf16> to vector<16x128xf32>
    %61 = arith.addf %60, %59 : vector<16x128xf32>
    %c0_27 = arith.constant 0 : index
    %c0_28 = arith.constant 0 : index
    %62 = vector.load %arg6[%c0_27, %c0_28] : memref<1x128xf32, #tpu.memory_space<vmem>>, vector<1x128xf32>
    %c0_29 = arith.constant 0 : index
    %c0_30 = arith.constant 0 : index
    %63 = vector.load %arg7[%c0_29, %c0_30] : memref<1x128xf32, #tpu.memory_space<vmem>>, vector<1x128xf32>
    %cst_31 = arith.constant dense<0.000000e+00> : vector<16xf32>
    %64 = vector.multi_reduction <add>, %61, %cst_31 [1] : vector<16x128xf32> to vector<16xf32>
    %65 = vector.shape_cast %64 : vector<16xf32> to vector<16x1xf32>
    %cst_32 = arith.constant 1.280000e+02 : f32
    %66 = vector.broadcast %cst_32 : f32 to vector<16x1xf32>
    %67 = arith.divf %65, %66 : vector<16x1xf32>
    %68 = vector.broadcast %67 : vector<16x1xf32> to vector<16x128xf32>
    %69 = arith.subf %61, %68 : vector<16x128xf32>
    %70 = arith.mulf %69, %69 : vector<16x128xf32>
    %cst_33 = arith.constant dense<0.000000e+00> : vector<16xf32>
    %71 = vector.multi_reduction <add>, %70, %cst_33 [1] : vector<16x128xf32> to vector<16xf32>
    %72 = vector.shape_cast %71 : vector<16xf32> to vector<16x1xf32>
    %cst_34 = arith.constant 1.280000e+02 : f32
    %73 = vector.broadcast %cst_34 : f32 to vector<16x1xf32>
    %74 = arith.divf %72, %73 : vector<16x1xf32>
    %75 = vector.broadcast %67 : vector<16x1xf32> to vector<16x128xf32>
    %76 = arith.subf %61, %75 : vector<16x128xf32>
    %cst_35 = arith.constant 9.99999996E-13 : f32
    %77 = vector.broadcast %cst_35 : f32 to vector<16x1xf32>
    %78 = arith.addf %74, %77 : vector<16x1xf32>
    %79 = math.rsqrt %78 : vector<16x1xf32>
    %80 = vector.broadcast %79 : vector<16x1xf32> to vector<16x128xf32>
    %81 = arith.mulf %76, %80 : vector<16x128xf32>
    %82 = vector.broadcast %62 : vector<1x128xf32> to vector<16x128xf32>
    %83 = arith.mulf %81, %82 : vector<16x128xf32>
    %84 = vector.broadcast %63 : vector<1x128xf32> to vector<16x128xf32>
    %85 = arith.addf %83, %84 : vector<16x128xf32>
    %86 = arith.truncf %85 : vector<16x128xf32> to vector<16x128xbf16>
    %c0_36 = arith.constant 0 : index
    %c0_37 = arith.constant 0 : index
    %c0_38 = arith.constant 0 : index
    %87 = vector.load %arg9[%c0_36, %c0_37, %c0_38] : memref<1x16x128xbf16, #tpu.memory_space<vmem>>, vector<1x16x128xbf16>
    %88 = vector.shape_cast %87 : vector<1x16x128xbf16> to vector<16x128xbf16>
    %89 = vector.shape_cast %86 : vector<16x128xbf16> to vector<1x16x128xbf16>
    tpu.vector_store %arg9[%c0_36, %c0_37, %c0_38], %89 {strides = array<i32>} : memref<1x16x128xbf16, #tpu.memory_space<vmem>>, vector<1x16x128xbf16>,
    return
  }
  func.func @transform_0(%arg0: i32) -> (i32, i32, i32) {
    %c0_i32 = arith.constant 0 : i32
    %c0_i32_0 = arith.constant 0 : i32
    %c0_i32_1 = arith.constant 0 : i32
    return %arg0, %c0_i32, %c0_i32_0 : i32, i32, i32
  }
  func.func @transform_1(%arg0: i32) -> (i32, i32) {
    %c0_i32 = arith.constant 0 : i32
    %c0_i32_0 = arith.constant 0 : i32
    %c0_i32_1 = arith.constant 0 : i32
    return %c0_i32, %c0_i32_0 : i32, i32
  }
  func.func @transform_2(%arg0: i32) -> (i32, i32) {
    %c0_i32 = arith.constant 0 : i32
    %c0_i32_0 = arith.constant 0 : i32
    %c0_i32_1 = arith.constant 0 : i32
    return %c0_i32, %c0_i32_0 : i32, i32
  }
  func.func @transform_3(%arg0: i32) -> (i32, i32) {
    %c0_i32 = arith.constant 0 : i32
    %c0_i32_0 = arith.constant 0 : i32
    %c0_i32_1 = arith.constant 0 : i32
    return %c0_i32, %c0_i32_0 : i32, i32
  }
  func.func @transform_4(%arg0: i32) -> (i32, i32) {
    %c0_i32 = arith.constant 0 : i32
    %c0_i32_0 = arith.constant 0 : i32
    %c0_i32_1 = arith.constant 0 : i32
    return %c0_i32, %c0_i32_0 : i32, i32
  }
  func.func @transform_5(%arg0: i32) -> (i32, i32) {
    %c0_i32 = arith.constant 0 : i32
    %c0_i32_0 = arith.constant 0 : i32
    %c0_i32_1 = arith.constant 0 : i32
    return %c0_i32, %c0_i32_0 : i32, i32
  }
  func.func @transform_6(%arg0: i32) -> (i32, i32) {
    %c0_i32 = arith.constant 0 : i32
    %c0_i32_0 = arith.constant 0 : i32
    %c0_i32_1 = arith.constant 0 : i32
    return %c0_i32, %c0_i32_0 : i32, i32
  }
  func.func @transform_7(%arg0: i32) -> (i32, i32, i32) {
    %c0_i32 = arith.constant 0 : i32
    %c0_i32_0 = arith.constant 0 : i32
    %c0_i32_1 = arith.constant 0 : i32
    return %arg0, %c0_i32, %c0_i32_0 : i32, i32, i32
  }
  func.func @transform_8(%arg0: i32) -> (i32, i32, i32) {
    %c0_i32 = arith.constant 0 : i32
    %c0_i32_0 = arith.constant 0 : i32
    %c0_i32_1 = arith.constant 0 : i32
    return %arg0, %c0_i32, %c0_i32_0 : i32, i32, i32
  }
}

module attributes {stable_mosaic.version = 11 : i64} {
  func.func @_gp_plain_kernel(%arg0: i32, %arg1: i32, %arg2: memref<1x16x128xbf16, #tpu.memory_space<vmem>>, %arg3: memref<128x384xbf16, #tpu.memory_space<vmem>>, %arg4: memref<1x384xf32, #tpu.memory_space<vmem>>, %arg5: memref<1x16x1xf32, #tpu.memory_space<vmem>>, %arg6: memref<1x1x16xf32, #tpu.memory_space<vmem>>, %arg7: memref<1x3x16x16xf32, #tpu.memory_space<vmem>>) attributes {dimension_semantics = [#tpu.dimension_semantics<parallel>, #tpu.dimension_semantics<parallel>], iteration_bounds = array<i64: 2, 2>, scalar_prefetch = 0 : i64, scratch_operands = 0 : i64, tpu.core_type = #tpu.core_type<tc>, window_params = [{transform_indices = @transform_0, window_bounds = array<i64: 1, 16, 128>}, {transform_indices = @transform_1, window_bounds = array<i64: 128, 384>}, {transform_indices = @transform_2, window_bounds = array<i64: 1, 384>}, {transform_indices = @transform_3, window_bounds = array<i64: 1, 16, 1>}, {transform_indices = @transform_4, window_bounds = array<i64: 1, 1, 16>}, {transform_indices = @transform_5, window_bounds = array<i64: 1, 3, 16, 16>}]} {
    %c0 = arith.constant 0 : index
    %c0_0 = arith.constant 0 : index
    %c0_1 = arith.constant 0 : index
    %0 = vector.load %arg2[%c0, %c0_0, %c0_1] : memref<1x16x128xbf16, #tpu.memory_space<vmem>>, vector<1x16x128xbf16>
    %1 = vector.shape_cast %0 : vector<1x16x128xbf16> to vector<16x128xbf16>
    %c0_2 = arith.constant 0 : index
    %c0_3 = arith.constant 0 : index
    %2 = vector.load %arg3[%c0_2, %c0_3] : memref<128x384xbf16, #tpu.memory_space<vmem>>, vector<128x384xbf16>
    %cst = arith.constant dense<0.000000e+00> : vector<16x384xf32>
    %3 = tpu.matmul %1, %2, %cst {dimension_numbers = #tpu.dot_dimension_numbers<[1], [0], [0], [1], [0, 0, 1, 1], [], []>} : vector<16x128xbf16>, vector<128x384xbf16>, vector<16x384xf32> -> vector<16x384xf32>
    %c0_4 = arith.constant 0 : index
    %c0_5 = arith.constant 0 : index
    %4 = vector.load %arg4[%c0_4, %c0_5] : memref<1x384xf32, #tpu.memory_space<vmem>>, vector<1x384xf32>
    %5 = vector.broadcast %4 : vector<1x384xf32> to vector<16x384xf32>
    %6 = arith.addf %3, %5 : vector<16x384xf32>
    %c0_6 = arith.constant 0 : index
    %c0_7 = arith.constant 0 : index
    %c0_8 = arith.constant 0 : index
    %7 = vector.load %arg5[%c0_6, %c0_7, %c0_8] : memref<1x16x1xf32, #tpu.memory_space<vmem>>, vector<1x16x1xf32>
    %8 = vector.shape_cast %7 : vector<1x16x1xf32> to vector<16x1xf32>
    %c0_9 = arith.constant 0 : index
    %c0_10 = arith.constant 0 : index
    %c0_11 = arith.constant 0 : index
    %9 = vector.load %arg6[%c0_9, %c0_10, %c0_11] : memref<1x1x16xf32, #tpu.memory_space<vmem>>, vector<1x1x16xf32>
    %10 = vector.shape_cast %9 : vector<1x1x16xf32> to vector<1x16xf32>
    %11 = vector.broadcast %8 : vector<16x1xf32> to vector<16x16xf32>
    %12 = vector.broadcast %10 : vector<1x16xf32> to vector<16x16xf32>
    %13 = arith.mulf %11, %12 : vector<16x16xf32>
    %cst_12 = arith.constant 1.000000e+00 : f32
    %14 = vector.broadcast %cst_12 : f32 to vector<16x16xf32>
    %15 = arith.subf %13, %14 : vector<16x16xf32>
    %cst_13 = arith.constant 1.250000e+11 : f32
    %16 = vector.broadcast %cst_13 : f32 to vector<16x16xf32>
    %17 = arith.mulf %15, %16 : vector<16x16xf32>
    %18 = vector.extract_strided_slice %6 {offsets = [0, 0], sizes = [16, 64], strides = [1, 1]} : vector<16x384xf32> to vector<16x64xf32>
    %19 = arith.truncf %18 : vector<16x64xf32> to vector<16x64xbf16>
    %20 = vector.extract_strided_slice %6 {offsets = [0, 64], sizes = [16, 64], strides = [1, 1]} : vector<16x384xf32> to vector<16x64xf32>
    %21 = arith.truncf %20 : vector<16x64xf32> to vector<16x64xbf16>
    %cst_14 = arith.constant dense<0.000000e+00> : vector<16x16xf32>
    %22 = tpu.matmul %19, %21, %cst_14 {dimension_numbers = #tpu.dot_dimension_numbers<[1], [1], [0], [0], [0, 0, 1, 0], [], []>} : vector<16x64xbf16>, vector<16x64xbf16>, vector<16x16xf32> -> vector<16x16xf32>
    %23 = arith.mulf %22, %13 : vector<16x16xf32>
    %24 = arith.addf %23, %17 : vector<16x16xf32>
    %c0_15 = arith.constant 0 : index
    %c0_16 = arith.constant 0 : index
    %c0_17 = arith.constant 0 : index
    %c0_18 = arith.constant 0 : index
    %25 = vector.load %arg7[%c0_15, %c0_16, %c0_17, %c0_18] : memref<1x3x16x16xf32, #tpu.memory_space<vmem>>, vector<1x1x16x16xf32>
    %26 = vector.shape_cast %25 : vector<1x1x16x16xf32> to vector<16x16xf32>
    %27 = vector.shape_cast %24 : vector<16x16xf32> to vector<1x1x16x16xf32>
    tpu.vector_store %arg7[%c0_15, %c0_16, %c0_17, %c0_18], %27 {strides = array<i32>} : memref<1x3x16x16xf32, #tpu.memory_space<vmem>>, vector<1x1x16x16xf32>,
    %28 = vector.extract_strided_slice %6 {offsets = [0, 128], sizes = [16, 64], strides = [1, 1]} : vector<16x384xf32> to vector<16x64xf32>
    %29 = arith.truncf %28 : vector<16x64xf32> to vector<16x64xbf16>
    %30 = vector.extract_strided_slice %6 {offsets = [0, 192], sizes = [16, 64], strides = [1, 1]} : vector<16x384xf32> to vector<16x64xf32>
    %31 = arith.truncf %30 : vector<16x64xf32> to vector<16x64xbf16>
    %cst_19 = arith.constant dense<0.000000e+00> : vector<16x16xf32>
    %32 = tpu.matmul %29, %31, %cst_19 {dimension_numbers = #tpu.dot_dimension_numbers<[1], [1], [0], [0], [0, 0, 1, 0], [], []>} : vector<16x64xbf16>, vector<16x64xbf16>, vector<16x16xf32> -> vector<16x16xf32>
    %33 = arith.mulf %32, %13 : vector<16x16xf32>
    %34 = arith.addf %33, %17 : vector<16x16xf32>
    %c0_20 = arith.constant 0 : index
    %c1 = arith.constant 1 : index
    %c0_21 = arith.constant 0 : index
    %c0_22 = arith.constant 0 : index
    %35 = vector.load %arg7[%c0_20, %c1, %c0_21, %c0_22] : memref<1x3x16x16xf32, #tpu.memory_space<vmem>>, vector<1x1x16x16xf32>
    %36 = vector.shape_cast %35 : vector<1x1x16x16xf32> to vector<16x16xf32>
    %37 = vector.shape_cast %34 : vector<16x16xf32> to vector<1x1x16x16xf32>
    tpu.vector_store %arg7[%c0_20, %c1, %c0_21, %c0_22], %37 {strides = array<i32>} : memref<1x3x16x16xf32, #tpu.memory_space<vmem>>, vector<1x1x16x16xf32>,
    %38 = vector.extract_strided_slice %6 {offsets = [0, 256], sizes = [16, 64], strides = [1, 1]} : vector<16x384xf32> to vector<16x64xf32>
    %39 = arith.truncf %38 : vector<16x64xf32> to vector<16x64xbf16>
    %40 = vector.extract_strided_slice %6 {offsets = [0, 320], sizes = [16, 64], strides = [1, 1]} : vector<16x384xf32> to vector<16x64xf32>
    %41 = arith.truncf %40 : vector<16x64xf32> to vector<16x64xbf16>
    %cst_23 = arith.constant dense<0.000000e+00> : vector<16x16xf32>
    %42 = tpu.matmul %39, %41, %cst_23 {dimension_numbers = #tpu.dot_dimension_numbers<[1], [1], [0], [0], [0, 0, 1, 0], [], []>} : vector<16x64xbf16>, vector<16x64xbf16>, vector<16x16xf32> -> vector<16x16xf32>
    %43 = arith.mulf %42, %13 : vector<16x16xf32>
    %44 = arith.addf %43, %17 : vector<16x16xf32>
    %c0_24 = arith.constant 0 : index
    %c2 = arith.constant 2 : index
    %c0_25 = arith.constant 0 : index
    %c0_26 = arith.constant 0 : index
    %45 = vector.load %arg7[%c0_24, %c2, %c0_25, %c0_26] : memref<1x3x16x16xf32, #tpu.memory_space<vmem>>, vector<1x1x16x16xf32>
    %46 = vector.shape_cast %45 : vector<1x1x16x16xf32> to vector<16x16xf32>
    %47 = vector.shape_cast %44 : vector<16x16xf32> to vector<1x1x16x16xf32>
    tpu.vector_store %arg7[%c0_24, %c2, %c0_25, %c0_26], %47 {strides = array<i32>} : memref<1x3x16x16xf32, #tpu.memory_space<vmem>>, vector<1x1x16x16xf32>,
    return
  }
  func.func @transform_0(%arg0: i32, %arg1: i32) -> (i32, i32, i32) {
    %c0_i32 = arith.constant 0 : i32
    %c0_i32_0 = arith.constant 0 : i32
    %c0_i32_1 = arith.constant 0 : i32
    return %arg0, %c0_i32, %c0_i32_0 : i32, i32, i32
  }
  func.func @transform_1(%arg0: i32, %arg1: i32) -> (i32, i32) {
    %c0_i32 = arith.constant 0 : i32
    %c0_i32_0 = arith.constant 0 : i32
    return %c0_i32, %arg1 : i32, i32
  }
  func.func @transform_2(%arg0: i32, %arg1: i32) -> (i32, i32) {
    %c0_i32 = arith.constant 0 : i32
    %c0_i32_0 = arith.constant 0 : i32
    return %c0_i32, %arg1 : i32, i32
  }
  func.func @transform_3(%arg0: i32, %arg1: i32) -> (i32, i32, i32) {
    %c0_i32 = arith.constant 0 : i32
    %c0_i32_0 = arith.constant 0 : i32
    %c0_i32_1 = arith.constant 0 : i32
    return %arg0, %c0_i32, %c0_i32_0 : i32, i32, i32
  }
  func.func @transform_4(%arg0: i32, %arg1: i32) -> (i32, i32, i32) {
    %c0_i32 = arith.constant 0 : i32
    %c0_i32_0 = arith.constant 0 : i32
    %c0_i32_1 = arith.constant 0 : i32
    return %arg0, %c0_i32, %c0_i32_0 : i32, i32, i32
  }
  func.func @transform_5(%arg0: i32, %arg1: i32) -> (i32, i32, i32, i32) {
    %c0_i32 = arith.constant 0 : i32
    %c0_i32_0 = arith.constant 0 : i32
    %c0_i32_1 = arith.constant 0 : i32
    return %arg0, %arg1, %c0_i32, %c0_i32_0 : i32, i32, i32, i32
  }
}

module attributes {stable_mosaic.version = 11 : i64} {
  func.func @_gp_rope_kernel(%arg0: i32, %arg1: i32, %arg2: memref<1x16x128xbf16, #tpu.memory_space<vmem>>, %arg3: memref<128x256xbf16, #tpu.memory_space<vmem>>, %arg4: memref<1x256xf32, #tpu.memory_space<vmem>>, %arg5: memref<16x32xf32, #tpu.memory_space<vmem>>, %arg6: memref<16x32xf32, #tpu.memory_space<vmem>>, %arg7: memref<1x16x1xf32, #tpu.memory_space<vmem>>, %arg8: memref<1x1x16xf32, #tpu.memory_space<vmem>>, %arg9: memref<1x2x16x16xf32, #tpu.memory_space<vmem>>, %arg10: memref<2x16x128xf32, #tpu.memory_space<vmem>>) attributes {dimension_semantics = [#tpu.dimension_semantics<parallel>, #tpu.dimension_semantics<parallel>], iteration_bounds = array<i64: 2, 1>, scalar_prefetch = 0 : i64, scratch_operands = 1 : i64, tpu.core_type = #tpu.core_type<tc>, window_params = [{transform_indices = @transform_0, window_bounds = array<i64: 1, 16, 128>}, {transform_indices = @transform_1, window_bounds = array<i64: 128, 256>}, {transform_indices = @transform_2, window_bounds = array<i64: 1, 256>}, {pipeline_mode = #tpu.pipeline_mode<synchronous>, transform_indices = @transform_3, window_bounds = array<i64: 16, 32>}, {pipeline_mode = #tpu.pipeline_mode<synchronous>, transform_indices = @transform_4, window_bounds = array<i64: 16, 32>}, {transform_indices = @transform_5, window_bounds = array<i64: 1, 16, 1>}, {transform_indices = @transform_6, window_bounds = array<i64: 1, 1, 16>}, {transform_indices = @transform_7, window_bounds = array<i64: 1, 2, 16, 16>}]} {
    %c0 = arith.constant 0 : index
    %c0_0 = arith.constant 0 : index
    %c0_1 = arith.constant 0 : index
    %0 = vector.load %arg2[%c0, %c0_0, %c0_1] : memref<1x16x128xbf16, #tpu.memory_space<vmem>>, vector<1x16x128xbf16>
    %1 = vector.shape_cast %0 : vector<1x16x128xbf16> to vector<16x128xbf16>
    %c0_2 = arith.constant 0 : index
    %c0_3 = arith.constant 0 : index
    %2 = vector.load %arg3[%c0_2, %c0_3] : memref<128x256xbf16, #tpu.memory_space<vmem>>, vector<128x256xbf16>
    %cst = arith.constant dense<0.000000e+00> : vector<16x256xf32>
    %3 = tpu.matmul %1, %2, %cst {dimension_numbers = #tpu.dot_dimension_numbers<[1], [0], [0], [1], [0, 0, 1, 1], [], []>} : vector<16x128xbf16>, vector<128x256xbf16>, vector<16x256xf32> -> vector<16x256xf32>
    %c0_4 = arith.constant 0 : index
    %c0_5 = arith.constant 0 : index
    %4 = vector.load %arg4[%c0_4, %c0_5] : memref<1x256xf32, #tpu.memory_space<vmem>>, vector<1x256xf32>
    %5 = vector.broadcast %4 : vector<1x256xf32> to vector<16x256xf32>
    %6 = arith.addf %3, %5 : vector<16x256xf32>
    %c0_6 = arith.constant 0 : index
    %c0_7 = arith.constant 0 : index
    %7 = vector.load %arg5[%c0_6, %c0_7] : memref<16x32xf32, #tpu.memory_space<vmem>>, vector<16x32xf32>
    %c0_8 = arith.constant 0 : index
    %c0_9 = arith.constant 0 : index
    %8 = vector.load %arg6[%c0_8, %c0_9] : memref<16x32xf32, #tpu.memory_space<vmem>>, vector<16x32xf32>
    %c0_10 = arith.constant 0 : index
    %c0_11 = arith.constant 0 : index
    %c0_12 = arith.constant 0 : index
    %9 = vector.load %arg7[%c0_10, %c0_11, %c0_12] : memref<1x16x1xf32, #tpu.memory_space<vmem>>, vector<1x16x1xf32>
    %10 = vector.shape_cast %9 : vector<1x16x1xf32> to vector<16x1xf32>
    %c0_13 = arith.constant 0 : index
    %c0_14 = arith.constant 0 : index
    %c0_15 = arith.constant 0 : index
    %11 = vector.load %arg8[%c0_13, %c0_14, %c0_15] : memref<1x1x16xf32, #tpu.memory_space<vmem>>, vector<1x1x16xf32>
    %12 = vector.shape_cast %11 : vector<1x1x16xf32> to vector<1x16xf32>
    %13 = vector.broadcast %10 : vector<16x1xf32> to vector<16x16xf32>
    %14 = vector.broadcast %12 : vector<1x16xf32> to vector<16x16xf32>
    %15 = arith.mulf %13, %14 : vector<16x16xf32>
    %16 = tpu.iota {dimensions = array<i32: 0>} : vector<16x16xi32>
    %17 = tpu.iota {dimensions = array<i32: 1>} : vector<16x16xi32>
    %cst_16 = arith.constant 1.000000e+00 : f32
    %18 = vector.broadcast %cst_16 : f32 to vector<16x16xf32>
    %19 = arith.subf %15, %18 : vector<16x16xf32>
    %cst_17 = arith.constant 1.250000e+11 : f32
    %20 = vector.broadcast %cst_17 : f32 to vector<16x16xf32>
    %21 = arith.mulf %19, %20 : vector<16x16xf32>
    %22 = arith.cmpi sgt, %16, %17 : vector<16x16xi32>
    %cst_18 = arith.constant 1.250000e+11 : f32
    %cst_19 = arith.constant 0.000000e+00 : f32
    %23 = vector.broadcast %cst_18 : f32 to vector<16x16xf32>
    %24 = vector.broadcast %cst_19 : f32 to vector<16x16xf32>
    %25 = arith.select %22, %23, %24 : vector<16x16xi1>, vector<16x16xf32>
    %26 = arith.subf %21, %25 : vector<16x16xf32>
    %27 = vector.extract_strided_slice %6 {offsets = [0, 0], sizes = [16, 32], strides = [1, 1]} : vector<16x256xf32> to vector<16x32xf32>
    %28 = vector.extract_strided_slice %6 {offsets = [0, 32], sizes = [16, 32], strides = [1, 1]} : vector<16x256xf32> to vector<16x32xf32>
    %29 = vector.extract_strided_slice %6 {offsets = [0, 64], sizes = [16, 32], strides = [1, 1]} : vector<16x256xf32> to vector<16x32xf32>
    %30 = vector.extract_strided_slice %6 {offsets = [0, 96], sizes = [16, 32], strides = [1, 1]} : vector<16x256xf32> to vector<16x32xf32>
    %31 = arith.mulf %27, %7 : vector<16x32xf32>
    %32 = arith.mulf %28, %8 : vector<16x32xf32>
    %33 = arith.subf %31, %32 : vector<16x32xf32>
    %c0_20 = arith.constant 0 : index
    %c0_21 = arith.constant 0 : index
    %c0_22 = arith.constant 0 : index
    %34 = vector.load %arg10[%c0_20, %c0_21, %c0_22] : memref<2x16x128xf32, #tpu.memory_space<vmem>>, vector<1x16x32xf32>
    %35 = vector.shape_cast %34 : vector<1x16x32xf32> to vector<16x32xf32>
    %36 = vector.shape_cast %33 : vector<16x32xf32> to vector<1x16x32xf32>
    tpu.vector_store %arg10[%c0_20, %c0_21, %c0_22], %36 {strides = array<i32>} : memref<2x16x128xf32, #tpu.memory_space<vmem>>, vector<1x16x32xf32>,
    %37 = arith.mulf %28, %7 : vector<16x32xf32>
    %38 = arith.mulf %27, %8 : vector<16x32xf32>
    %39 = arith.addf %37, %38 : vector<16x32xf32>
    %c0_23 = arith.constant 0 : index
    %c0_24 = arith.constant 0 : index
    %c32 = arith.constant 32 : index
    %40 = vector.load %arg10[%c0_23, %c0_24, %c32] : memref<2x16x128xf32, #tpu.memory_space<vmem>>, vector<1x16x32xf32>
    %41 = vector.shape_cast %40 : vector<1x16x32xf32> to vector<16x32xf32>
    %42 = vector.shape_cast %39 : vector<16x32xf32> to vector<1x16x32xf32>
    tpu.vector_store %arg10[%c0_23, %c0_24, %c32], %42 {strides = array<i32>} : memref<2x16x128xf32, #tpu.memory_space<vmem>>, vector<1x16x32xf32>,
    %43 = arith.mulf %29, %7 : vector<16x32xf32>
    %44 = arith.mulf %30, %8 : vector<16x32xf32>
    %45 = arith.subf %43, %44 : vector<16x32xf32>
    %c0_25 = arith.constant 0 : index
    %c0_26 = arith.constant 0 : index
    %c64 = arith.constant 64 : index
    %46 = vector.load %arg10[%c0_25, %c0_26, %c64] : memref<2x16x128xf32, #tpu.memory_space<vmem>>, vector<1x16x32xf32>
    %47 = vector.shape_cast %46 : vector<1x16x32xf32> to vector<16x32xf32>
    %48 = vector.shape_cast %45 : vector<16x32xf32> to vector<1x16x32xf32>
    tpu.vector_store %arg10[%c0_25, %c0_26, %c64], %48 {strides = array<i32>} : memref<2x16x128xf32, #tpu.memory_space<vmem>>, vector<1x16x32xf32>,
    %49 = arith.mulf %30, %7 : vector<16x32xf32>
    %50 = arith.mulf %29, %8 : vector<16x32xf32>
    %51 = arith.addf %49, %50 : vector<16x32xf32>
    %c0_27 = arith.constant 0 : index
    %c0_28 = arith.constant 0 : index
    %c96 = arith.constant 96 : index
    %52 = vector.load %arg10[%c0_27, %c0_28, %c96] : memref<2x16x128xf32, #tpu.memory_space<vmem>>, vector<1x16x32xf32>
    %53 = vector.shape_cast %52 : vector<1x16x32xf32> to vector<16x32xf32>
    %54 = vector.shape_cast %51 : vector<16x32xf32> to vector<1x16x32xf32>
    tpu.vector_store %arg10[%c0_27, %c0_28, %c96], %54 {strides = array<i32>} : memref<2x16x128xf32, #tpu.memory_space<vmem>>, vector<1x16x32xf32>,
    %c0_29 = arith.constant 0 : index
    %c0_30 = arith.constant 0 : index
    %c0_31 = arith.constant 0 : index
    %55 = vector.load %arg10[%c0_29, %c0_30, %c0_31] : memref<2x16x128xf32, #tpu.memory_space<vmem>>, vector<1x16x64xf32>
    %56 = vector.shape_cast %55 : vector<1x16x64xf32> to vector<16x64xf32>
    %57 = arith.truncf %56 : vector<16x64xf32> to vector<16x64xbf16>
    %c0_32 = arith.constant 0 : index
    %c0_33 = arith.constant 0 : index
    %c64_34 = arith.constant 64 : index
    %58 = vector.load %arg10[%c0_32, %c0_33, %c64_34] : memref<2x16x128xf32, #tpu.memory_space<vmem>>, vector<1x16x64xf32>
    %59 = vector.shape_cast %58 : vector<1x16x64xf32> to vector<16x64xf32>
    %60 = arith.truncf %59 : vector<16x64xf32> to vector<16x64xbf16>
    %cst_35 = arith.constant dense<0.000000e+00> : vector<16x16xf32>
    %61 = tpu.matmul %57, %60, %cst_35 {dimension_numbers = #tpu.dot_dimension_numbers<[1], [1], [0], [0], [0, 0, 1, 0], [], []>} : vector<16x64xbf16>, vector<16x64xbf16>, vector<16x16xf32> -> vector<16x16xf32>
    %62 = arith.mulf %61, %15 : vector<16x16xf32>
    %63 = arith.addf %62, %26 : vector<16x16xf32>
    %c0_36 = arith.constant 0 : index
    %c0_37 = arith.constant 0 : index
    %c0_38 = arith.constant 0 : index
    %c0_39 = arith.constant 0 : index
    %64 = vector.load %arg9[%c0_36, %c0_37, %c0_38, %c0_39] : memref<1x2x16x16xf32, #tpu.memory_space<vmem>>, vector<1x1x16x16xf32>
    %65 = vector.shape_cast %64 : vector<1x1x16x16xf32> to vector<16x16xf32>
    %66 = vector.shape_cast %63 : vector<16x16xf32> to vector<1x1x16x16xf32>
    tpu.vector_store %arg9[%c0_36, %c0_37, %c0_38, %c0_39], %66 {strides = array<i32>} : memref<1x2x16x16xf32, #tpu.memory_space<vmem>>, vector<1x1x16x16xf32>,
    %67 = vector.extract_strided_slice %6 {offsets = [0, 128], sizes = [16, 32], strides = [1, 1]} : vector<16x256xf32> to vector<16x32xf32>
    %68 = vector.extract_strided_slice %6 {offsets = [0, 160], sizes = [16, 32], strides = [1, 1]} : vector<16x256xf32> to vector<16x32xf32>
    %69 = vector.extract_strided_slice %6 {offsets = [0, 192], sizes = [16, 32], strides = [1, 1]} : vector<16x256xf32> to vector<16x32xf32>
    %70 = vector.extract_strided_slice %6 {offsets = [0, 224], sizes = [16, 32], strides = [1, 1]} : vector<16x256xf32> to vector<16x32xf32>
    %71 = arith.mulf %67, %7 : vector<16x32xf32>
    %72 = arith.mulf %68, %8 : vector<16x32xf32>
    %73 = arith.subf %71, %72 : vector<16x32xf32>
    %c1 = arith.constant 1 : index
    %c0_40 = arith.constant 0 : index
    %c0_41 = arith.constant 0 : index
    %74 = vector.load %arg10[%c1, %c0_40, %c0_41] : memref<2x16x128xf32, #tpu.memory_space<vmem>>, vector<1x16x32xf32>
    %75 = vector.shape_cast %74 : vector<1x16x32xf32> to vector<16x32xf32>
    %76 = vector.shape_cast %73 : vector<16x32xf32> to vector<1x16x32xf32>
    tpu.vector_store %arg10[%c1, %c0_40, %c0_41], %76 {strides = array<i32>} : memref<2x16x128xf32, #tpu.memory_space<vmem>>, vector<1x16x32xf32>,
    %77 = arith.mulf %68, %7 : vector<16x32xf32>
    %78 = arith.mulf %67, %8 : vector<16x32xf32>
    %79 = arith.addf %77, %78 : vector<16x32xf32>
    %c1_42 = arith.constant 1 : index
    %c0_43 = arith.constant 0 : index
    %c32_44 = arith.constant 32 : index
    %80 = vector.load %arg10[%c1_42, %c0_43, %c32_44] : memref<2x16x128xf32, #tpu.memory_space<vmem>>, vector<1x16x32xf32>
    %81 = vector.shape_cast %80 : vector<1x16x32xf32> to vector<16x32xf32>
    %82 = vector.shape_cast %79 : vector<16x32xf32> to vector<1x16x32xf32>
    tpu.vector_store %arg10[%c1_42, %c0_43, %c32_44], %82 {strides = array<i32>} : memref<2x16x128xf32, #tpu.memory_space<vmem>>, vector<1x16x32xf32>,
    %83 = arith.mulf %69, %7 : vector<16x32xf32>
    %84 = arith.mulf %70, %8 : vector<16x32xf32>
    %85 = arith.subf %83, %84 : vector<16x32xf32>
    %c1_45 = arith.constant 1 : index
    %c0_46 = arith.constant 0 : index
    %c64_47 = arith.constant 64 : index
    %86 = vector.load %arg10[%c1_45, %c0_46, %c64_47] : memref<2x16x128xf32, #tpu.memory_space<vmem>>, vector<1x16x32xf32>
    %87 = vector.shape_cast %86 : vector<1x16x32xf32> to vector<16x32xf32>
    %88 = vector.shape_cast %85 : vector<16x32xf32> to vector<1x16x32xf32>
    tpu.vector_store %arg10[%c1_45, %c0_46, %c64_47], %88 {strides = array<i32>} : memref<2x16x128xf32, #tpu.memory_space<vmem>>, vector<1x16x32xf32>,
    %89 = arith.mulf %70, %7 : vector<16x32xf32>
    %90 = arith.mulf %69, %8 : vector<16x32xf32>
    %91 = arith.addf %89, %90 : vector<16x32xf32>
    %c1_48 = arith.constant 1 : index
    %c0_49 = arith.constant 0 : index
    %c96_50 = arith.constant 96 : index
    %92 = vector.load %arg10[%c1_48, %c0_49, %c96_50] : memref<2x16x128xf32, #tpu.memory_space<vmem>>, vector<1x16x32xf32>
    %93 = vector.shape_cast %92 : vector<1x16x32xf32> to vector<16x32xf32>
    %94 = vector.shape_cast %91 : vector<16x32xf32> to vector<1x16x32xf32>
    tpu.vector_store %arg10[%c1_48, %c0_49, %c96_50], %94 {strides = array<i32>} : memref<2x16x128xf32, #tpu.memory_space<vmem>>, vector<1x16x32xf32>,
    %c1_51 = arith.constant 1 : index
    %c0_52 = arith.constant 0 : index
    %c0_53 = arith.constant 0 : index
    %95 = vector.load %arg10[%c1_51, %c0_52, %c0_53] : memref<2x16x128xf32, #tpu.memory_space<vmem>>, vector<1x16x64xf32>
    %96 = vector.shape_cast %95 : vector<1x16x64xf32> to vector<16x64xf32>
    %97 = arith.truncf %96 : vector<16x64xf32> to vector<16x64xbf16>
    %c1_54 = arith.constant 1 : index
    %c0_55 = arith.constant 0 : index
    %c64_56 = arith.constant 64 : index
    %98 = vector.load %arg10[%c1_54, %c0_55, %c64_56] : memref<2x16x128xf32, #tpu.memory_space<vmem>>, vector<1x16x64xf32>
    %99 = vector.shape_cast %98 : vector<1x16x64xf32> to vector<16x64xf32>
    %100 = arith.truncf %99 : vector<16x64xf32> to vector<16x64xbf16>
    %cst_57 = arith.constant dense<0.000000e+00> : vector<16x16xf32>
    %101 = tpu.matmul %97, %100, %cst_57 {dimension_numbers = #tpu.dot_dimension_numbers<[1], [1], [0], [0], [0, 0, 1, 0], [], []>} : vector<16x64xbf16>, vector<16x64xbf16>, vector<16x16xf32> -> vector<16x16xf32>
    %102 = arith.mulf %101, %15 : vector<16x16xf32>
    %103 = arith.addf %102, %26 : vector<16x16xf32>
    %c0_58 = arith.constant 0 : index
    %c1_59 = arith.constant 1 : index
    %c0_60 = arith.constant 0 : index
    %c0_61 = arith.constant 0 : index
    %104 = vector.load %arg9[%c0_58, %c1_59, %c0_60, %c0_61] : memref<1x2x16x16xf32, #tpu.memory_space<vmem>>, vector<1x1x16x16xf32>
    %105 = vector.shape_cast %104 : vector<1x1x16x16xf32> to vector<16x16xf32>
    %106 = vector.shape_cast %103 : vector<16x16xf32> to vector<1x1x16x16xf32>
    tpu.vector_store %arg9[%c0_58, %c1_59, %c0_60, %c0_61], %106 {strides = array<i32>} : memref<1x2x16x16xf32, #tpu.memory_space<vmem>>, vector<1x1x16x16xf32>,
    return
  }
  func.func @transform_0(%arg0: i32, %arg1: i32) -> (i32, i32, i32) {
    %c0_i32 = arith.constant 0 : i32
    %c0_i32_0 = arith.constant 0 : i32
    %c0_i32_1 = arith.constant 0 : i32
    return %arg0, %c0_i32, %c0_i32_0 : i32, i32, i32
  }
  func.func @transform_1(%arg0: i32, %arg1: i32) -> (i32, i32) {
    %c0_i32 = arith.constant 0 : i32
    %c0_i32_0 = arith.constant 0 : i32
    return %c0_i32, %arg1 : i32, i32
  }
  func.func @transform_2(%arg0: i32, %arg1: i32) -> (i32, i32) {
    %c0_i32 = arith.constant 0 : i32
    %c0_i32_0 = arith.constant 0 : i32
    return %c0_i32, %arg1 : i32, i32
  }
  func.func @transform_3(%arg0: i32, %arg1: i32) -> (i32, i32) {
    %c0_i32 = arith.constant 0 : i32
    %c0_i32_0 = arith.constant 0 : i32
    %c0_i32_1 = arith.constant 0 : i32
    return %c0_i32, %c0_i32_0 : i32, i32
  }
  func.func @transform_4(%arg0: i32, %arg1: i32) -> (i32, i32) {
    %c0_i32 = arith.constant 0 : i32
    %c0_i32_0 = arith.constant 0 : i32
    %c0_i32_1 = arith.constant 0 : i32
    return %c0_i32, %c0_i32_0 : i32, i32
  }
  func.func @transform_5(%arg0: i32, %arg1: i32) -> (i32, i32, i32) {
    %c0_i32 = arith.constant 0 : i32
    %c0_i32_0 = arith.constant 0 : i32
    %c0_i32_1 = arith.constant 0 : i32
    return %arg0, %c0_i32, %c0_i32_0 : i32, i32, i32
  }
  func.func @transform_6(%arg0: i32, %arg1: i32) -> (i32, i32, i32) {
    %c0_i32 = arith.constant 0 : i32
    %c0_i32_0 = arith.constant 0 : i32
    %c0_i32_1 = arith.constant 0 : i32
    return %arg0, %c0_i32, %c0_i32_0 : i32, i32, i32
  }
  func.func @transform_7(%arg0: i32, %arg1: i32) -> (i32, i32, i32, i32) {
    %c0_i32 = arith.constant 0 : i32
    %c0_i32_0 = arith.constant 0 : i32
    %c0_i32_1 = arith.constant 0 : i32
    return %arg0, %arg1, %c0_i32, %c0_i32_0 : i32, i32, i32, i32
  }
}

</mosaic_0001>

<llo_original>
// kernel: global_pointer_for_rel_forward.7
$region0: #{global_pointer_for_rel_forward.7}
  #allocation0 [shape = 'u32[]', space=smem, size = 0x4, offset = 0x4, fixed_abs, tag = 'smem constant byte address 0x4 - core index']
  #allocation1 [shape = 'u32[144,128]{1,0:T(1,128)}', space=vmem, size = 0x12000, scoped, tag = 'internal scratch']
  %s0 = inlined_call_operand.hbm [shape: f32[2,16,128], index: 0, kind: input, shape index: {}]
  %s1 = inlined_call_operand.hbm [shape: f32[1,128], index: 1, kind: input, shape index: {}]
  %s2 = inlined_call_operand.hbm [shape: f32[1,128], index: 2, kind: input, shape index: {}]
  %s3 = inlined_call_operand.hbm [shape: bf16[2,16,128], index: 3, kind: output, shape index: {}]
  %s4 = sld [smem:[#allocation0]]
  $region57: #{global_pointer_for_rel_forward.7} parent=0
    _
  %s6 = ssub.s32 1, %s4
  %s7 = scalar_select 0, %s6, %s4
  $region1: #{global_pointer_for_rel_forward.7} parent=0
    #allocation2 [shape = 'u8[16384]{0}', space=vmem, size = 0x4000, scoped, tag = 'input window, operand 0']
    #allocation3 [shape = 's32[2]{0}', space=sflag, size = 0x8, scoped, tag = 'scoped memory for global_pointer_for_rel_forward.7']
    #allocation4 [shape = 's32[2]{0}', space=sflag, size = 0x8, scoped, tag = 'scoped memory for global_pointer_for_rel_forward.7']
    #allocation5 [shape = 'u8[512]{0}', space=vmem, size = 0x400, scoped, tag = 'input window, operand 1, single buffered']
    #allocation6 [shape = 's32[1]{0}', space=sflag, size = 0x4, scoped, tag = 'scoped memory for global_pointer_for_rel_forward.7']
    #allocation7 [shape = 'u8[512]{0}', space=vmem, size = 0x400, scoped, tag = 'input window, operand 2, single buffered']
    #allocation8 [shape = 'u8[8192]{0}', space=vmem, size = 0x2000, scoped, tag = 'output window, operand 0']
    %8 = vsyncpa [#allocation3], 0
    %s9 = scalar_lea.sflag [#allocation3], 1
    %10 = vsyncpa %s9, 0
    %11 = vsyncpa [#allocation6], 0
    %12 = vsyncpa [#allocation4], 0
    %s13 = scalar_lea.sflag [#allocation4], 1
    %14 = vsyncpa %s13, 0
    loop: start=0, step=1, limit=4
    $region2: #{global_pointer_for_rel_forward.7} parent=1 // loop_pre_header
      _
    $region3: #{global_pointer_for_rel_forward.7} parent=1 // loop_header
      %s16 = sphi 0, %s20
      %p17 = scmp.ge.s32.totalorder %s16, 4
      %s23 = sphi 0, %s35
      %s24 = sphi 0, %s31
      %s25 = sphi 0, %s23
      %s26 = sphi 0, %s24
      %s27 = sphi 0, %s25
      %s28 = sphi 0, %s26
      %s40 = sphi 0, %s42
      %s43 = sphi 0, %s40
      %s44 = sphi 0, %s43
      %s60 = sphi 0, %s44
      %s64 = sphi 0, %s64
      %s66 = sphi 0, %s64
      %s67 = sphi 0, %s66
      %s81 = sphi 0, %s67
      %s85 = sphi 0, %s85
      %s87 = sphi 0, %s85
      %s88 = sphi 0, %s87
      %s102 = sphi 0, %s88
      %s110 = sphi 0, %s112
      %s113 = sphi 0, %s110
      %s114 = sphi 0, %s113
      %s130 = sphi 0, %s114
    $region4: #{global_pointer_for_rel_forward.7} parent=1 // loop_header_branch
      %19 = sbr.rel (%p17) target = $region8
    $region5: #{global_pointer_for_rel_forward.7} parent=1 // loop_body
      %s21 = ssub.s32 %s16, 1
      %s22 = ssub.s32 %s16, 2
      %s29 = sadd.s32 1, %s24
      %p30 = scmp.ge.s32.totalorder %s29, 1
      %s31 = scalar_select %p30, 0, %s29
      %s32 = sadd.s32 1, %s23
      %s33 = scalar_select %p30, %s32, %s23
      %p34 = scmp.ge.s32.totalorder %s33, 2
      %s35 = scalar_select %p34, 0, %s33
      %s36 = ssub.s32 %s23, %s35
      %s37 = ssub.s32 %s24, %s31
      %s38 = sor.u32 %s36, %s37
      %p39 = scmp.eq.s32.totalorder %s38, 0
      %s41 = sadd.s32 %s40, 1
      %s42 = scalar_select %p39, %s40, %s41
      %p45 = pneg %p39
      %p46 = scmp.eq.s32.totalorder %s16, 1
      %p47 = por %p45, %p46
      %p48 = scmp.ne.s32.totalorder %s40, %s43
      %p49 = scmp.eq.s32.totalorder %s16, 0
      %p50 = por %p48, %p49
      %p51 = scmp.ne.s32.totalorder %s40, %s43
      %p52 = scmp.eq.s32.totalorder %s21, 1
      %p53 = por %p51, %p52
      %p54 = scmp.ne.s32.totalorder %s43, %s44
      %p55 = scmp.eq.s32.totalorder %s21, 0
      %p56 = por %p54, %p55
      %p57 = scmp.ne.s32.totalorder %s43, %s44
      %p58 = scmp.eq.s32.totalorder %s22, 1
      %p59 = por %p57, %p58
      %p61 = scmp.ne.s32.totalorder %s44, %s60
      %p62 = scmp.eq.s32.totalorder %s22, 0
      %p63 = por %p61, %p62
      %s65 = sadd.s32 %s64, 1
      %p68 = scmp.eq.s32.totalorder %s16, 1
      %p69 = scmp.ne.s32.totalorder %s64, %s66
      %p70 = scmp.eq.s32.totalorder %s16, 0
      %p71 = por %p69, %p70
      %p72 = scmp.ne.s32.totalorder %s64, %s66
      %p73 = scmp.eq.s32.totalorder %s21, 1
      %p74 = por %p72, %p73
      %p75 = scmp.ne.s32.totalorder %s66, %s67
      %p76 = scmp.eq.s32.totalorder %s21, 0
      %p77 = por %p75, %p76
      %p78 = scmp.ne.s32.totalorder %s66, %s67
      %p79 = scmp.eq.s32.totalorder %s22, 1
      %p80 = por %p78, %p79
      %p82 = scmp.ne.s32.totalorder %s67, %s81
      %p83 = scmp.eq.s32.totalorder %s22, 0
      %p84 = por %p82, %p83
      %s86 = sadd.s32 %s85, 1
      %p89 = scmp.eq.s32.totalorder %s16, 1
      %p90 = scmp.ne.s32.totalorder %s85, %s87
      %p91 = scmp.eq.s32.totalorder %s16, 0
      %p92 = por %p90, %p91
      %p93 = scmp.ne.s32.totalorder %s85, %s87
      %p94 = scmp.eq.s32.totalorder %s21, 1
      %p95 = por %p93, %p94
      %p96 = scmp.ne.s32.totalorder %s87, %s88
      %p97 = scmp.eq.s32.totalorder %s21, 0
      %p98 = por %p96, %p97
      %p99 = scmp.ne.s32.totalorder %s87, %s88
      %p100 = scmp.eq.s32.totalorder %s22, 1
      %p101 = por %p99, %p100
      %p103 = scmp.ne.s32.totalorder %s88, %s102
      %p104 = scmp.eq.s32.totalorder %s22, 0
      %p105 = por %p103, %p104
      %s106 = ssub.s32 %s23, %s35
      %s107 = ssub.s32 %s24, %s31
      %s108 = sor.u32 %s106, %s107
      %p109 = scmp.eq.s32.totalorder %s108, 0
      %s111 = sadd.s32 %s110, 1
      %s112 = scalar_select %p109, %s110, %s111
      %p115 = pneg %p109
      %p116 = scmp.eq.s32.totalorder %s16, 1
      %p117 = por %p115, %p116
      %p118 = scmp.ne.s32.totalorder %s110, %s113
      %p119 = scmp.eq.s32.totalorder %s16, 0
      %p120 = por %p118, %p119
      %p121 = scmp.ne.s32.totalorder %s110, %s113
      %p122 = scmp.eq.s32.totalorder %s21, 1
      %p123 = por %p121, %p122
      %p124 = scmp.ne.s32.totalorder %s113, %s114
      %p125 = scmp.eq.s32.totalorder %s21, 0
      %p126 = por %p124, %p125
      %p127 = scmp.ne.s32.totalorder %s113, %s114
      %p128 = scmp.eq.s32.totalorder %s22, 1
      %p129 = por %p127, %p128
      %p131 = scmp.ne.s32.totalorder %s114, %s130
      %p132 = scmp.eq.s32.totalorder %s22, 0
      %p133 = por %p131, %p132
      %p134 = scmp.le.s32.totalorder 1, %s16
      %p135 = scmp.lt.s32.totalorder %s16, 3
      %p136 = pnand %p134, %p135
      %p137 = pneg %p136
      // Predicated region
      $region9: #{global_pointer_for_rel_forward.7} parent=5 // pred_check
        _
      $region10: #{global_pointer_for_rel_forward.7} parent=5 // pred_check_branch
        %139 = sbr.rel (%p136) target = $region12
      $region11: #{global_pointer_for_rel_forward.7} parent=5 // pred_region
        %s140 = ssub.s32 %s16, 1
        // Predicated region
        $region13: #{global_pointer_for_rel_forward.7} parent=11 // pred_check
          %p141 = pneg %p77
        $region14: #{global_pointer_for_rel_forward.7} parent=11 // pred_check_branch
          %143 = sbr.rel (%p141) target = $region16
        $region15: #{global_pointer_for_rel_forward.7} parent=11 // pred_region
          %s145 = ssub.s32 16, 16
          %146 = vsyncadd [#allocation6], %s145
          %s148 = sshll.u32 [#allocation5], 4
          %s149 = int_to_ptr.vmem [resolvable:$true] %s148
          %151 = dma.hbm_to_vmem [thread:$0]  %s1, 16, %s149, [#allocation6]
        $region16: #{global_pointer_for_rel_forward.7} parent=11 // pred_fallthru
          _
        // Predicated region
        $region17: #{global_pointer_for_rel_forward.7} parent=11 // pred_check
          %p152 = pneg %p98
        $region18: #{global_pointer_for_rel_forward.7} parent=11 // pred_check_branch
          %154 = sbr.rel (%p152) target = $region20
        $region19: #{global_pointer_for_rel_forward.7} parent=11 // pred_region
          %s156 = ssub.s32 16, 16
          %157 = vsyncadd [#allocation6], %s156
          %s159 = sshll.u32 [#allocation7], 4
          %s160 = int_to_ptr.vmem [resolvable:$true] %s159
          %162 = dma.hbm_to_vmem [thread:$0]  %s2, 16, %s160, [#allocation6]
        $region20: #{global_pointer_for_rel_forward.7} parent=11 // pred_fallthru
          _
      $region12: #{global_pointer_for_rel_forward.7} parent=5 // pred_fallthru
        _
      %p163 = scmp.lt.s32.totalorder %s16, 2
      // Predicated region
      $region21: #{global_pointer_for_rel_forward.7} parent=5 // pred_check
        %p164 = pneg %p163
      $region22: #{global_pointer_for_rel_forward.7} parent=5 // pred_check_branch
        %166 = sbr.rel (%p164) target = $region24
      $region23: #{global_pointer_for_rel_forward.7} parent=5 // pred_region
        // Predicated region
        $region25: #{global_pointer_for_rel_forward.7} parent=23 // pred_check
          %p167 = pneg %p50
        $region26: #{global_pointer_for_rel_forward.7} parent=23 // pred_check_branch
          %169 = sbr.rel (%p167) target = $region28
        $region27: #{global_pointer_for_rel_forward.7} parent=23 // pred_region
          %s170 = sand.u32 %s40, 1
          %s171 = scalar_lea.sflag [#allocation3], %s170
          %s172 = sand.u32 %s40, 1
          %s173 = smul.addr %s172, 16
          %s174 = scalar_lea.vmem [#allocation2], %s173
          %s175 = smul.u32 2, %s24
          %s177 = ssub.s32 256, 256
          %178 = vsyncadd %s171, %s177
          %s179 = smul.addr %s23, 2
          %s180 = sadd.s32 %s175, %s179
          %s181 = smul.addr %s180, 128
          %s182 = scalar_lea.hbm %s0, %s181
          %s183 = sshll.u32 %s174, 4
          %s184 = int_to_ptr.vmem [resolvable:$true] %s183
          %189 = dma.hbm_to_vmem [thread:$0]  %s182, 256, %s184, %s171, 128, 128, 8
        $region28: #{global_pointer_for_rel_forward.7} parent=23 // pred_fallthru
          _
      $region24: #{global_pointer_for_rel_forward.7} parent=5 // pred_fallthru
        _
      %p190 = scmp.le.s32.totalorder 1, %s16
      %p191 = scmp.lt.s32.totalorder %s16, 3
      %p192 = pnand %p190, %p191
      %p193 = pneg %p192
      // Predicated region
      $region29: #{global_pointer_for_rel_forward.7} parent=5 // pred_check
        _
      $region30: #{global_pointer_for_rel_forward.7} parent=5 // pred_check_branch
        %195 = sbr.rel (%p192) target = $region32
      $region31: #{global_pointer_for_rel_forward.7} parent=5 // pred_region
        %s196 = ssub.s32 %s16, 1
        %s197 = sand.u32 %s43, 1
        %s198 = scalar_lea.sflag [#allocation3], %s197
        %s199 = sand.u32 %s43, 1
        %s200 = smul.addr %s199, 16
        %s201 = scalar_lea.vmem [#allocation2], %s200
        // Predicated region
        $region33: #{global_pointer_for_rel_forward.7} parent=31 // pred_check
          %p202 = pneg %p56
        $region34: #{global_pointer_for_rel_forward.7} parent=31 // pred_check_branch
          %204 = sbr.rel (%p202) target = $region36
        $region35: #{global_pointer_for_rel_forward.7} parent=31 // pred_region
          %205 = dma.done %s198, 256
        $region36: #{global_pointer_for_rel_forward.7} parent=31 // pred_fallthru
          _
        // Predicated region
        $region37: #{global_pointer_for_rel_forward.7} parent=31 // pred_check
          %p206 = pneg %p77
        $region38: #{global_pointer_for_rel_forward.7} parent=31 // pred_check_branch
          %208 = sbr.rel (%p206) target = $region40
        $region39: #{global_pointer_for_rel_forward.7} parent=31 // pred_region
          %209 = dma.done [#allocation6], 16
        $region40: #{global_pointer_for_rel_forward.7} parent=31 // pred_fallthru
          _
        // Predicated region
        $region41: #{global_pointer_for_rel_forward.7} parent=31 // pred_check
          %p210 = pneg %p98
        $region42: #{global_pointer_for_rel_forward.7} parent=31 // pred_check_branch
          %212 = sbr.rel (%p210) target = $region44
        $region43: #{global_pointer_for_rel_forward.7} parent=31 // pred_region
          %213 = dma.done [#allocation6], 16
        $region44: #{global_pointer_for_rel_forward.7} parent=31 // pred_fallthru
          _
        %s214 = sand.u32 %s43, 1
        %s215 = scalar_lea.sflag [#allocation3], %s214
        %s216 = sand.u32 %s43, 1
        %s217 = smul.addr %s216, 16
        %s218 = scalar_lea.vmem [#allocation2], %s217
        %p219 = pneg %p56
        %p220 = pneg %p53
        %p221 = pneg %p77
        %p222 = pneg %p74
        %p223 = pneg %p98
        %p224 = pneg %p95
        %p225 = pneg %p126
        %p226 = pneg %p123
        %s227 = sand.u32 %s113, 1
        %s228 = scalar_lea.sflag [#allocation4], %s227
        %s229 = sand.u32 %s113, 1
        %s230 = smul.addr %s229, 8
        %s231 = scalar_lea.vmem [#allocation8], %s230
        %s232 = smul.u32 2, %s26
        %s233 = smul.u32 2, %s26
        %v234 = vld [vmem:[%s201] sm:$0xff]
        %v235 = vld [vmem:[%s201 + $0x8] sm:$0xff]
        %v236 = vld [vmem:[#allocation5] sm:$0x1]
        %v237 = vld [vmem:[#allocation7] sm:$0x1]
        %238 = vadd.xlane.f32.xlu0 %v234
        %v239 = vpop.xlane.xlu0 %238
        %240 = vadd.xlane.f32.xlu0 %v235
        %v241 = vpop.xlane.xlu0 %240
        %v242 = vrcp.pop 128.0
        %v243 = vmul.f32 %v239, %v242
        %v244 = vmul.f32 %v241, %v242
        %v245 = vsub.f32 %v234, %v243
        %v246 = vsub.f32 %v235, %v244
        %v247 = vmul.f32 %v245, %v245
        %v248 = vmul.f32 %v246, %v246
        %249 = vadd.xlane.f32.xlu0 %v247
        %v250 = vpop.xlane.xlu0 %249
        %251 = vadd.xlane.f32.xlu0 %v248
        %v252 = vpop.xlane.xlu0 %251
        %v253 = vmul.f32 %v250, %v242
        %v254 = vmul.f32 %v252, %v242
        %v255 = vadd.f32 %v253, 1e-12
        %v256 = vadd.f32 %v254, 1e-12
        %v257 = vrsqrt.pop %v255
        %v258 = vrsqrt.pop %v256
        %v259 = vmul.f32 %v245, %v257
        %v260 = vmul.f32 %v246, %v258
        %v262 = vlaneseq
        %v263 = vshrl.u32 %v262, 7
        %v264 = vsub.s32 0, %v263
        %v265 = vrot.slane %v236, %v264
        %v267 = vmul.f32 %v259, %v265
        %v268 = vmul.f32 %v260, %v265
        %v270 = vlaneseq
        %v271 = vshrl.u32 %v270, 7
        %v272 = vsub.s32 0, %v271
        %v273 = vrot.slane %v237, %v272
        %v275 = vadd.f32 %v267, %v273
        %v276 = vadd.f32 %v268, %v273
        %v277 = vpack.c.bf16 %v276, %v275
        %v279 = vunpack.c.l.b16 %v277
        %v280 = vunpack.c.h.b16 %v277
        %v281 = vpack.c.b16 %v279, %v279
        %v282 = vpack.c.b16 %v280, %v280
        %285 = vst [vmem:[%s231] sm:$0xf] %v281
        %286 = vst [vmem:[%s231 + $0x4] sm:$0xf] %v282
        %s287 = sand.u32 %s113, 1
        %s288 = scalar_lea.sflag [#allocation4], %s287
        %s289 = sand.u32 %s113, 1
        %s290 = smul.addr %s289, 8
        %s291 = scalar_lea.vmem [#allocation8], %s290
        // Predicated region
        $region45: #{global_pointer_for_rel_forward.7} parent=31 // pred_check
          %p292 = pneg %p123
        $region46: #{global_pointer_for_rel_forward.7} parent=31 // pred_check_branch
          %294 = sbr.rel (%p292) target = $region48
        $region47: #{global_pointer_for_rel_forward.7} parent=31 // pred_region
          %s295 = smul.u32 2, %s26
          %s297 = ssub.s32 128, 128
          %298 = vsyncadd %s288, %s297
          %s299 = smul.addr %s25, 2
          %s300 = sadd.s32 %s295, %s299
          %s301 = smul.addr %s300, 64
          %s302 = scalar_lea.hbm %s3, %s301
          %s303 = sshll.u32 %s291, 4
          %s304 = int_to_ptr.vmem [resolvable:$true] %s303
          %309 = dma.vmem_to_hbm [thread:$0]  %s304, 128, %s302, %s288, 64, 64, 4
        $region48: #{global_pointer_for_rel_forward.7} parent=31 // pred_fallthru
          _
      $region32: #{global_pointer_for_rel_forward.7} parent=5 // pred_fallthru
        _
      %p310 = scmp.le.s32.totalorder 2, %s16
      // Predicated region
      $region49: #{global_pointer_for_rel_forward.7} parent=5 // pred_check
        %p311 = pneg %p310
      $region50: #{global_pointer_for_rel_forward.7} parent=5 // pred_check_branch
        %313 = sbr.rel (%p311) target = $region52
      $region51: #{global_pointer_for_rel_forward.7} parent=5 // pred_region
        %s314 = ssub.s32 %s16, 2
        // Predicated region
        $region53: #{global_pointer_for_rel_forward.7} parent=51 // pred_check
          %p315 = pneg %p129
        $region54: #{global_pointer_for_rel_forward.7} parent=51 // pred_check_branch
          %317 = sbr.rel (%p315) target = $region56
        $region55: #{global_pointer_for_rel_forward.7} parent=51 // pred_region
          %s318 = sand.u32 %s114, 1
          %s319 = scalar_lea.sflag [#allocation4], %s318
          %s320 = sand.u32 %s114, 1
          %s321 = smul.addr %s320, 8
          %s322 = scalar_lea.vmem [#allocation8], %s321
          %323 = dma.done %s319, 128
        $region56: #{global_pointer_for_rel_forward.7} parent=51 // pred_fallthru
          _
      $region52: #{global_pointer_for_rel_forward.7} parent=5 // pred_fallthru
        _
    $region6: #{global_pointer_for_rel_forward.7} parent=1 // loop_footer
      %s20 = sadd.s32 1, %s16
    $region7: #{global_pointer_for_rel_forward.7} parent=1 // loop_footer_branch
      %15 = sbr.rel target = $region3
    $region8: #{global_pointer_for_rel_forward.7} parent=1 // loop_exit
      _
    %324 = vsyncpa [#allocation3], 1
    %s325 = scalar_lea.sflag [#allocation3], 1
    %326 = vsyncpa %s325, 1
    %327 = vsyncpa [#allocation6], 1
    %328 = vsyncpa [#allocation4], 1
    %s329 = scalar_lea.sflag [#allocation4], 1
    %330 = vsyncpa %s329, 1

// kernel: global_pointer_for_rel_forward.13
$region0: #{global_pointer_for_rel_forward.13}
  #allocation0 [shape = 'u32[]', space=smem, size = 0x4, offset = 0x4, fixed_abs, tag = 'smem constant byte address 0x4 - core index']
  #allocation1 [shape = 'u32[144,128]{1,0:T(1,128)}', space=vmem, size = 0x12000, scoped, tag = 'internal scratch']
  %s0 = inlined_call_operand.hbm [shape: bf16[2,16,128], index: 0, kind: input, shape index: {}]
  %s1 = inlined_call_operand.hbm [shape: bf16[128,768], index: 1, kind: input, shape index: {}]
  %s2 = inlined_call_operand.hbm [shape: f32[1,768], index: 2, kind: input, shape index: {}]
  %s3 = inlined_call_operand.hbm [shape: f32[2,16,1], index: 3, kind: input, shape index: {}]
  %s4 = inlined_call_operand.hbm [shape: f32[2,1,16], index: 4, kind: input, shape index: {}]
  %s5 = inlined_call_operand.hbm [shape: f32[2,6,16,16], index: 5, kind: output, shape index: {}]
  %s6 = sld [smem:[#allocation0]]
  $region73: #{global_pointer_for_rel_forward.13} parent=0
    _
  %s8 = ssub.s32 1, %s6
  %s9 = scalar_select 0, %s8, %s6
  $region1: #{global_pointer_for_rel_forward.13} parent=0
    #allocation2 [shape = 'u8[8192]{0}', space=vmem, size = 0x2000, scoped, tag = 'input window, operand 0']
    #allocation3 [shape = 's32[2]{0}', space=sflag, size = 0x8, scoped, tag = 'scoped memory for global_pointer_for_rel_forward.13']
    #allocation4 [shape = 's32[2]{0}', space=sflag, size = 0x8, scoped, tag = 'scoped memory for global_pointer_for_rel_forward.13']
    #allocation5 [shape = 'u8[196608]{0}', space=vmem, size = 0x30000, scoped, tag = 'input window, operand 1']
    #allocation6 [shape = 's32[2]{0}', space=sflag, size = 0x8, scoped, tag = 'scoped memory for global_pointer_for_rel_forward.13']
    #allocation7 [shape = 'u8[3072]{0}', space=vmem, size = 0xc00, scoped, tag = 'input window, operand 2']
    #allocation8 [shape = 'u8[16384]{0}', space=vmem, size = 0x4000, scoped, tag = 'input window, operand 3']
    #allocation9 [shape = 's32[2]{0}', space=sflag, size = 0x8, scoped, tag = 'scoped memory for global_pointer_for_rel_forward.13']
    #allocation10 [shape = 'u8[1024]{0}', space=vmem, size = 0x400, scoped, tag = 'input window, operand 4']
    #allocation11 [shape = 'u8[49152]{0}', space=vmem, size = 0xc000, scoped, tag = 'output window, operand 0']
    %10 = vsyncpa [#allocation3], 0
    %s11 = scalar_lea.sflag [#allocation3], 1
    %12 = vsyncpa %s11, 0
    %13 = vsyncpa [#allocation6], 0
    %s14 = scalar_lea.sflag [#allocation6], 1
    %15 = vsyncpa %s14, 0
    %16 = vsyncpa [#allocation9], 0
    %s17 = scalar_lea.sflag [#allocation9], 1
    %18 = vsyncpa %s17, 0
    %19 = vsyncpa [#allocation4], 0
    %s20 = scalar_lea.sflag [#allocation4], 1
    %21 = vsyncpa %s20, 0
    loop: start=0, step=1, limit=6
    $region2: #{global_pointer_for_rel_forward.13} parent=1 // loop_pre_header
      _
    $region3: #{global_pointer_for_rel_forward.13} parent=1 // loop_header
      %s23 = sphi 0, %s27
      %p24 = scmp.ge.s32.totalorder %s23, 6
      %s30 = sphi 0, %s42
      %s31 = sphi 0, %s38
      %s32 = sphi 0, %s30
      %s33 = sphi 0, %s31
      %s34 = sphi 0, %s32
      %s35 = sphi 0, %s33
      %s45 = sphi 0, %s47
      %s48 = sphi 0, %s45
      %s49 = sphi 0, %s48
      %s65 = sphi 0, %s49
      %s71 = sphi 0, %s73
      %s74 = sphi 0, %s71
      %s75 = sphi 0, %s74
      %s91 = sphi 0, %s75
      %s97 = sphi 0, %s99
      %s100 = sphi 0, %s97
      %s101 = sphi 0, %s100
      %s117 = sphi 0, %s101
      %s123 = sphi 0, %s125
      %s126 = sphi 0, %s123
      %s127 = sphi 0, %s126
      %s143 = sphi 0, %s127
      %s149 = sphi 0, %s151
      %s152 = sphi 0, %s149
      %s153 = sphi 0, %s152
      %s169 = sphi 0, %s153
      %s177 = sphi 0, %s179
      %s180 = sphi 0, %s177
      %s181 = sphi 0, %s180
      %s197 = sphi 0, %s181
    $region4: #{global_pointer_for_rel_forward.13} parent=1 // loop_header_branch
      %26 = sbr.rel (%p24) target = $region8
    $region5: #{global_pointer_for_rel_forward.13} parent=1 // loop_body
      %s28 = ssub.s32 %s23, 1
      %s29 = ssub.s32 %s23, 2
      %s36 = sadd.s32 1, %s31
      %p37 = scmp.ge.s32.totalorder %s36, 2
      %s38 = scalar_select %p37, 0, %s36
      %s39 = sadd.s32 1, %s30
      %s40 = scalar_select %p37, %s39, %s30
      %p41 = scmp.ge.s32.totalorder %s40, 2
      %s42 = scalar_select %p41, 0, %s40
      %s43 = ssub.s32 %s30, %s42
      %p44 = scmp.eq.s32.totalorder %s43, 0
      %s46 = sadd.s32 %s45, 1
      %s47 = scalar_select %p44, %s45, %s46
      %p50 = pneg %p44
      %p51 = scmp.eq.s32.totalorder %s23, 3
      %p52 = por %p50, %p51
      %p53 = scmp.ne.s32.totalorder %s45, %s48
      %p54 = scmp.eq.s32.totalorder %s23, 0
      %p55 = por %p53, %p54
      %p56 = scmp.ne.s32.totalorder %s45, %s48
      %p57 = scmp.eq.s32.totalorder %s28, 3
      %p58 = por %p56, %p57
      %p59 = scmp.ne.s32.totalorder %s48, %s49
      %p60 = scmp.eq.s32.totalorder %s28, 0
      %p61 = por %p59, %p60
      %p62 = scmp.ne.s32.totalorder %s48, %s49
      %p63 = scmp.eq.s32.totalorder %s29, 3
      %p64 = por %p62, %p63
      %p66 = scmp.ne.s32.totalorder %s49, %s65
      %p67 = scmp.eq.s32.totalorder %s29, 0
      %p68 = por %p66, %p67
      %s69 = ssub.s32 %s31, %s38
      %p70 = scmp.eq.s32.totalorder %s69, 0
      %s72 = sadd.s32 %s71, 1
      %s73 = scalar_select %p70, %s71, %s72
      %p76 = pneg %p70
      %p77 = scmp.eq.s32.totalorder %s23, 3
      %p78 = por %p76, %p77
      %p79 = scmp.ne.s32.totalorder %s71, %s74
      %p80 = scmp.eq.s32.totalorder %s23, 0
      %p81 = por %p79, %p80
      %p82 = scmp.ne.s32.totalorder %s71, %s74
      %p83 = scmp.eq.s32.totalorder %s28, 3
      %p84 = por %p82, %p83
      %p85 = scmp.ne.s32.totalorder %s74, %s75
      %p86 = scmp.eq.s32.totalorder %s28, 0
      %p87 = por %p85, %p86
      %p88 = scmp.ne.s32.totalorder %s74, %s75
      %p89 = scmp.eq.s32.totalorder %s29, 3
      %p90 = por %p88, %p89
      %p92 = scmp.ne.s32.totalorder %s75, %s91
      %p93 = scmp.eq.s32.totalorder %s29, 0
      %p94 = por %p92, %p93
      %s95 = ssub.s32 %s31, %s38
      %p96 = scmp.eq.s32.totalorder %s95, 0
      %s98 = sadd.s32 %s97, 1
      %s99 = scalar_select %p96, %s97, %s98
      %p102 = pneg %p96
      %p103 = scmp.eq.s32.totalorder %s23, 3
      %p104 = por %p102, %p103
      %p105 = scmp.ne.s32.totalorder %s97, %s100
      %p106 = scmp.eq.s32.totalorder %s23, 0
      %p107 = por %p105, %p106
      %p108 = scmp.ne.s32.totalorder %s97, %s100
      %p109 = scmp.eq.s32.totalorder %s28, 3
      %p110 = por %p108, %p109
      %p111 = scmp.ne.s32.totalorder %s100, %s101
      %p112 = scmp.eq.s32.totalorder %s28, 0
      %p113 = por %p111, %p112
      %p114 = scmp.ne.s32.totalorder %s100, %s101
      %p115 = scmp.eq.s32.totalorder %s29, 3
      %p116 = por %p114, %p115
      %p118 = scmp.ne.s32.totalorder %s101, %s117
      %p119 = scmp.eq.s32.totalorder %s29, 0
      %p120 = por %p118, %p119
      %s121 = ssub.s32 %s30, %s42
      %p122 = scmp.eq.s32.totalorder %s121, 0
      %s124 = sadd.s32 %s123, 1
      %s125 = scalar_select %p122, %s123, %s124
      %p128 = pneg %p122
      %p129 = scmp.eq.s32.totalorder %s23, 3
      %p130 = por %p128, %p129
      %p131 = scmp.ne.s32.totalorder %s123, %s126
      %p132 = scmp.eq.s32.totalorder %s23, 0
      %p133 = por %p131, %p132
      %p134 = scmp.ne.s32.totalorder %s123, %s126
      %p135 = scmp.eq.s32.totalorder %s28, 3
      %p136 = por %p134, %p135
      %p137 = scmp.ne.s32.totalorder %s126, %s127
      %p138 = scmp.eq.s32.totalorder %s28, 0
      %p139 = por %p137, %p138
      %p140 = scmp.ne.s32.totalorder %s126, %s127
      %p141 = scmp.eq.s32.totalorder %s29, 3
      %p142 = por %p140, %p141
      %p144 = scmp.ne.s32.totalorder %s127, %s143
      %p145 = scmp.eq.s32.totalorder %s29, 0
      %p146 = por %p144, %p145
      %s147 = ssub.s32 %s30, %s42
      %p148 = scmp.eq.s32.totalorder %s147, 0
      %s150 = sadd.s32 %s149, 1
      %s151 = scalar_select %p148, %s149, %s150
      %p154 = pneg %p148
      %p155 = scmp.eq.s32.totalorder %s23, 3
      %p156 = por %p154, %p155
      %p157 = scmp.ne.s32.totalorder %s149, %s152
      %p158 = scmp.eq.s32.totalorder %s23, 0
      %p159 = por %p157, %p158
      %p160 = scmp.ne.s32.totalorder %s149, %s152
      %p161 = scmp.eq.s32.totalorder %s28, 3
      %p162 = por %p160, %p161
      %p163 = scmp.ne.s32.totalorder %s152, %s153
      %p164 = scmp.eq.s32.totalorder %s28, 0
      %p165 = por %p163, %p164
      %p166 = scmp.ne.s32.totalorder %s152, %s153
      %p167 = scmp.eq.s32.totalorder %s29, 3
      %p168 = por %p166, %p167
      %p170 = scmp.ne.s32.totalorder %s153, %s169
      %p171 = scmp.eq.s32.totalorder %s29, 0
      %p172 = por %p170, %p171
      %s173 = ssub.s32 %s30, %s42
      %s174 = ssub.s32 %s31, %s38
      %s175 = sor.u32 %s173, %s174
      %p176 = scmp.eq.s32.totalorder %s175, 0
      %s178 = sadd.s32 %s177, 1
      %s179 = scalar_select %p176, %s177, %s178
      %p182 = pneg %p176
      %p183 = scmp.eq.s32.totalorder %s23, 3
      %p184 = por %p182, %p183
      %p185 = scmp.ne.s32.totalorder %s177, %s180
      %p186 = scmp.eq.s32.totalorder %s23, 0
      %p187 = por %p185, %p186
      %p188 = scmp.ne.s32.totalorder %s177, %s180
      %p189 = scmp.eq.s32.totalorder %s28, 3
      %p190 = por %p188, %p189
      %p191 = scmp.ne.s32.totalorder %s180, %s181
      %p192 = scmp.eq.s32.totalorder %s28, 0
      %p193 = por %p191, %p192
      %p194 = scmp.ne.s32.totalorder %s180, %s181
      %p195 = scmp.eq.s32.totalorder %s29, 3
      %p196 = por %p194, %p195
      %p198 = scmp.ne.s32.totalorder %s181, %s197
      %p199 = scmp.eq.s32.totalorder %s29, 0
      %p200 = por %p198, %p199
      %p201 = scmp.le.s32.totalorder 1, %s23
      %p202 = scmp.lt.s32.totalorder %s23, 5
      %p203 = pnand %p201, %p202
      %p204 = pneg %p203
      // Predicated region
      $region9: #{global_pointer_for_rel_forward.13} parent=5 // pred_check
        _
      $region10: #{global_pointer_for_rel_forward.13} parent=5 // pred_check_branch
        %206 = sbr.rel (%p203) target = $region12
      $region11: #{global_pointer_for_rel_forward.13} parent=5 // pred_region
        %s207 = ssub.s32 %s23, 1
      $region12: #{global_pointer_for_rel_forward.13} parent=5 // pred_fallthru
        _
      %p208 = scmp.lt.s32.totalorder %s23, 4
      // Predicated region
      $region13: #{global_pointer_for_rel_forward.13} parent=5 // pred_check
        %p209 = pneg %p208
      $region14: #{global_pointer_for_rel_forward.13} parent=5 // pred_check_branch
        %211 = sbr.rel (%p209) target = $region16
      $region15: #{global_pointer_for_rel_forward.13} parent=5 // pred_region
        // Predicated region
        $region17: #{global_pointer_for_rel_forward.13} parent=15 // pred_check
          %p212 = pneg %p55
        $region18: #{global_pointer_for_rel_forward.13} parent=15 // pred_check_branch
          %214 = sbr.rel (%p212) target = $region20
        $region19: #{global_pointer_for_rel_forward.13} parent=15 // pred_region
          %s215 = sand.u32 %s45, 1
          %s216 = scalar_lea.sflag [#allocation3], %s215
          %s217 = sand.u32 %s45, 1
          %s218 = smul.addr %s217, 8
          %s219 = scalar_lea.vmem [#allocation2], %s218
          %s221 = ssub.s32 128, 128
          %222 = vsyncadd %s216, %s221
          %s223 = smul.addr %s30, 2
          %s224 = smul.addr %s223, 64
          %s225 = scalar_lea.hbm %s0, %s224
          %s226 = sshll.u32 %s219, 4
          %s227 = int_to_ptr.vmem [resolvable:$true] %s226
          %232 = dma.hbm_to_vmem [thread:$0]  %s225, 128, %s227, %s216, 64, 64, 4
        $region20: #{global_pointer_for_rel_forward.13} parent=15 // pred_fallthru
          _
        // Predicated region
        $region21: #{global_pointer_for_rel_forward.13} parent=15 // pred_check
          %p233 = pneg %p81
        $region22: #{global_pointer_for_rel_forward.13} parent=15 // pred_check_branch
          %235 = sbr.rel (%p233) target = $region24
        $region23: #{global_pointer_for_rel_forward.13} parent=15 // pred_region
          %s236 = sand.u32 %s23, 1
          %s237 = scalar_lea.sflag [#allocation6], %s236
          %s238 = sand.u32 %s71, 1
          %s239 = smul.addr %s238, 192
          %s240 = scalar_lea.vmem [#allocation5], %s239
          %s241 = smul.u32 3, %s31
          %s243 = ssub.s32 3072, 3072
          %244 = vsyncadd %s237, %s243
          %s245 = smul.addr %s241, 64
          %s246 = scalar_lea.hbm %s1, %s245
          %s247 = sshll.u32 %s240, 4
          %s248 = int_to_ptr.vmem [resolvable:$true] %s247
          %253 = dma.hbm_to_vmem [thread:$0]  %s246, 3072, %s248, %s237, 384, 192, 12
        $region24: #{global_pointer_for_rel_forward.13} parent=15 // pred_fallthru
          _
        // Predicated region
        $region25: #{global_pointer_for_rel_forward.13} parent=15 // pred_check
          %p254 = pneg %p107
        $region26: #{global_pointer_for_rel_forward.13} parent=15 // pred_check_branch
          %256 = sbr.rel (%p254) target = $region28
        $region27: #{global_pointer_for_rel_forward.13} parent=15 // pred_region
          %s257 = sand.u32 %s23, 1
          %s258 = scalar_lea.sflag [#allocation6], %s257
          %s259 = sand.u32 %s97, 1
          %s260 = smul.addr %s259, 3
          %s261 = scalar_lea.vmem [#allocation7], %s260
          %s262 = smul.u32 3, %s31
          %s264 = ssub.s32 48, 48
          %265 = vsyncadd %s258, %s264
          %s266 = smul.addr %s262, 16
          %s267 = scalar_lea.hbm %s2, %s266
          %s269 = sshll.u32 %s261, 4
          %s270 = int_to_ptr.vmem [resolvable:$true] %s269
          %272 = dma.hbm_to_vmem [thread:$0]  %s267, 48, %s270, %s258
        $region28: #{global_pointer_for_rel_forward.13} parent=15 // pred_fallthru
          _
        // Predicated region
        $region29: #{global_pointer_for_rel_forward.13} parent=15 // pred_check
          %p273 = pneg %p133
        $region30: #{global_pointer_for_rel_forward.13} parent=15 // pred_check_branch
          %275 = sbr.rel (%p273) target = $region32
        $region31: #{global_pointer_for_rel_forward.13} parent=15 // pred_region
          %s276 = sand.u32 %s23, 1
          %s277 = scalar_lea.sflag [#allocation9], %s276
          %s278 = sand.u32 %s123, 1
          %s279 = smul.addr %s278, 16
          %s280 = scalar_lea.vmem [#allocation8], %s279
          %s282 = ssub.s32 256, 256
          %283 = vsyncadd %s277, %s282
          %s284 = smul.addr %s30, 2
          %s285 = smul.addr %s284, 128
          %s286 = scalar_lea.hbm %s3, %s285
          %s287 = sshll.u32 %s280, 4
          %s288 = int_to_ptr.vmem [resolvable:$true] %s287
          %293 = dma.hbm_to_vmem [thread:$0]  %s286, 256, %s288, %s277, 128, 128, 8
        $region32: #{global_pointer_for_rel_forward.13} parent=15 // pred_fallthru
          _
        // Predicated region
        $region33: #{global_pointer_for_rel_forward.13} parent=15 // pred_check
          %p294 = pneg %p159
        $region34: #{global_pointer_for_rel_forward.13} parent=15 // pred_check_branch
          %296 = sbr.rel (%p294) target = $region36
        $region35: #{global_pointer_for_rel_forward.13} parent=15 // pred_region
          %s297 = sand.u32 %s23, 1
          %s298 = scalar_lea.sflag [#allocation9], %s297
          %s299 = sand.u32 %s149, 1
          %s300 = scalar_lea.vmem [#allocation10], %s299
          %s302 = ssub.s32 16, 16
          %303 = vsyncadd %s298, %s302
          %s304 = smul.addr %s30, 16
          %s305 = scalar_lea.hbm %s4, %s304
          %s307 = sshll.u32 %s300, 4
          %s308 = int_to_ptr.vmem [resolvable:$true] %s307
          %310 = dma.hbm_to_vmem [thread:$0]  %s305, 16, %s308, %s298
        $region36: #{global_pointer_for_rel_forward.13} parent=15 // pred_fallthru
          _
      $region16: #{global_pointer_for_rel_forward.13} parent=5 // pred_fallthru
        _
      %p311 = scmp.le.s32.totalorder 1, %s23
      %p312 = scmp.lt.s32.totalorder %s23, 5
      %p313 = pnand %p311, %p312
      %p314 = pneg %p313
      // Predicated region
      $region37: #{global_pointer_for_rel_forward.13} parent=5 // pred_check
        _
      $region38: #{global_pointer_for_rel_forward.13} parent=5 // pred_check_branch
        %316 = sbr.rel (%p313) target = $region40
      $region39: #{global_pointer_for_rel_forward.13} parent=5 // pred_region
        %s317 = ssub.s32 %s23, 1
        %s318 = sand.u32 %s48, 1
        %s319 = scalar_lea.sflag [#allocation3], %s318
        %s320 = sand.u32 %s48, 1
        %s321 = smul.addr %s320, 8
        %s322 = scalar_lea.vmem [#allocation2], %s321
        // Predicated region
        $region41: #{global_pointer_for_rel_forward.13} parent=39 // pred_check
          %p323 = pneg %p61
        $region42: #{global_pointer_for_rel_forward.13} parent=39 // pred_check_branch
          %325 = sbr.rel (%p323) target = $region44
        $region43: #{global_pointer_for_rel_forward.13} parent=39 // pred_region
          %326 = dma.done %s319, 128
        $region44: #{global_pointer_for_rel_forward.13} parent=39 // pred_fallthru
          _
        %s327 = sand.u32 %s28, 1
        %s328 = scalar_lea.sflag [#allocation6], %s327
        %s329 = sand.u32 %s74, 1
        %s330 = smul.addr %s329, 192
        %s331 = scalar_lea.vmem [#allocation5], %s330
        // Predicated region
        $region45: #{global_pointer_for_rel_forward.13} parent=39 // pred_check
          %p332 = pneg %p87
        $region46: #{global_pointer_for_rel_forward.13} parent=39 // pred_check_branch
          %334 = sbr.rel (%p332) target = $region48
        $region47: #{global_pointer_for_rel_forward.13} parent=39 // pred_region
          %335 = dma.done %s328, 3072
        $region48: #{global_pointer_for_rel_forward.13} parent=39 // pred_fallthru
          _
        %s336 = sand.u32 %s28, 1
        %s337 = scalar_lea.sflag [#allocation6], %s336
        %s338 = sand.u32 %s100, 1
        %s339 = smul.addr %s338, 3
        %s340 = scalar_lea.vmem [#allocation7], %s339
        // Predicated region
        $region49: #{global_pointer_for_rel_forward.13} parent=39 // pred_check
          %p341 = pneg %p113
        $region50: #{global_pointer_for_rel_forward.13} parent=39 // pred_check_branch
          %343 = sbr.rel (%p341) target = $region52
        $region51: #{global_pointer_for_rel_forward.13} parent=39 // pred_region
          %344 = dma.done %s337, 48
        $region52: #{global_pointer_for_rel_forward.13} parent=39 // pred_fallthru
          _
        %s345 = sand.u32 %s28, 1
        %s346 = scalar_lea.sflag [#allocation9], %s345
        %s347 = sand.u32 %s126, 1
        %s348 = smul.addr %s347, 16
        %s349 = scalar_lea.vmem [#allocation8], %s348
        // Predicated region
        $region53: #{global_pointer_for_rel_forward.13} parent=39 // pred_check
          %p350 = pneg %p139
        $region54: #{global_pointer_for_rel_forward.13} parent=39 // pred_check_branch
          %352 = sbr.rel (%p350) target = $region56
        $region55: #{global_pointer_for_rel_forward.13} parent=39 // pred_region
          %353 = dma.done %s346, 256
        $region56: #{global_pointer_for_rel_forward.13} parent=39 // pred_fallthru
          _
        %s354 = sand.u32 %s28, 1
        %s355 = scalar_lea.sflag [#allocation9], %s354
        %s356 = sand.u32 %s152, 1
        %s357 = scalar_lea.vmem [#allocation10], %s356
        // Predicated region
        $region57: #{global_pointer_for_rel_forward.13} parent=39 // pred_check
          %p358 = pneg %p165
        $region58: #{global_pointer_for_rel_forward.13} parent=39 // pred_check_branch
          %360 = sbr.rel (%p358) target = $region60
        $region59: #{global_pointer_for_rel_forward.13} parent=39 // pred_region
          %361 = dma.done %s355, 16
        $region60: #{global_pointer_for_rel_forward.13} parent=39 // pred_fallthru
          _
        %s362 = sand.u32 %s48, 1
        %s363 = scalar_lea.sflag [#allocation3], %s362
        %s364 = sand.u32 %s48, 1
        %s365 = smul.addr %s364, 8
        %s366 = scalar_lea.vmem [#allocation2], %s365
        %p367 = pneg %p61
        %p368 = pneg %p58
        %s369 = sand.u32 %s28, 1
        %s370 = scalar_lea.sflag [#allocation6], %s369
        %s371 = sand.u32 %s74, 1
        %s372 = smul.addr %s371, 192
        %s373 = scalar_lea.vmem [#allocation5], %s372
        %p374 = pneg %p87
        %p375 = pneg %p84
        %s376 = sand.u32 %s28, 1
        %s377 = scalar_lea.sflag [#allocation6], %s376
        %s378 = sand.u32 %s100, 1
        %s379 = smul.addr %s378, 3
        %s380 = scalar_lea.vmem [#allocation7], %s379
        %p381 = pneg %p113
        %p382 = pneg %p110
        %s383 = sand.u32 %s28, 1
        %s384 = scalar_lea.sflag [#allocation9], %s383
        %s385 = sand.u32 %s126, 1
        %s386 = smul.addr %s385, 16
        %s387 = scalar_lea.vmem [#allocation8], %s386
        %p388 = pneg %p139
        %p389 = pneg %p136
        %s390 = sand.u32 %s28, 1
        %s391 = scalar_lea.sflag [#allocation9], %s390
        %s392 = sand.u32 %s152, 1
        %s393 = scalar_lea.vmem [#allocation10], %s392
        %p394 = pneg %p165
        %p395 = pneg %p162
        %p396 = pneg %p193
        %p397 = pneg %p190
        %s398 = sand.u32 %s180, 1
        %s399 = scalar_lea.sflag [#allocation4], %s398
        %s400 = sand.u32 %s180, 1
        %s401 = smul.addr %s400, 48
        %s402 = scalar_lea.vmem [#allocation11], %s401
        %s403 = smul.u32 3, %s33
        %s404 = smul.u32 3, %s33
        %s405 = smul.u32 3, %s33
        %v407 = vld [vmem:[%s322] sm:$0xf]
        %v408 = vld [vmem:[%s322 + $0x4] sm:$0xf]
        %v409 = vld [vmem:[%s331] sm:$0xff]
        %v410 = vld [vmem:[%s331 + $0x8] sm:$0xf]
        %v411 = vld [vmem:[%s331 + $0xc] sm:$0xff]
        %v412 = vld [vmem:[%s331 + $0x14] sm:$0xf]
        %v413 = vld [vmem:[%s331 + $0x18] sm:$0xff]
        %v414 = vld [vmem:[%s331 + $0x20] sm:$0xf]
        %v415 = vld [vmem:[%s331 + $0x24] sm:$0xff]
        %v416 = vld [vmem:[%s331 + $0x2c] sm:$0xf]
        %v417 = vld [vmem:[%s331 + $0x30] sm:$0xff]
        %v418 = vld [vmem:[%s331 + $0x38] sm:$0xf]
        %v419 = vld [vmem:[%s331 + $0x3c] sm:$0xff]
        %v420 = vld [vmem:[%s331 + $0x44] sm:$0xf]
        %v421 = vld [vmem:[%s331 + $0x48] sm:$0xff]
        %v422 = vld [vmem:[%s331 + $0x50] sm:$0xf]
        %v423 = vld [vmem:[%s331 + $0x54] sm:$0xff]
        %v424 = vld [vmem:[%s331 + $0x5c] sm:$0xf]
        %v425 = vld [vmem:[%s331 + $0x60] sm:$0xff]
        %v426 = vld [vmem:[%s331 + $0x68] sm:$0xf]
        %v427 = vld [vmem:[%s331 + $0x6c] sm:$0xff]
        %v428 = vld [vmem:[%s331 + $0x74] sm:$0xf]
        %v429 = vld [vmem:[%s331 + $0x78] sm:$0xff]
        %v430 = vld [vmem:[%s331 + $0x80] sm:$0xf]
        %v431 = vld [vmem:[%s331 + $0x84] sm:$0xff]
        %v432 = vld [vmem:[%s331 + $0x8c] sm:$0xf]
        %v433 = vld [vmem:[%s331 + $0x90] sm:$0xff]
        %v434 = vld [vmem:[%s331 + $0x98] sm:$0xf]
        %v435 = vld [vmem:[%s331 + $0x9c] sm:$0xff]
        %v436 = vld [vmem:[%s331 + $0xa4] sm:$0xf]
        %v437 = vld [vmem:[%s331 + $0xa8] sm:$0xff]
        %v438 = vld [vmem:[%s331 + $0xb0] sm:$0xf]
        %v439 = vld [vmem:[%s331 + $0xb4] sm:$0xff]
        %v440 = vld [vmem:[%s331 + $0xbc] sm:$0xf]
        %v441 = vld [vmem:[%s340] sm:$0x7]
        %v443 = vlaneseq
        %v444 = vshrl.u32 %v443, 7
        %v445 = vsub.s32 0, %v444
        %v446 = vrot.slane %v441, %v445
        %v447 = vlaneseq
        %v448 = vshrl.u32 %v447, 7
        %v449 = vsub.s32 1, %v448
        %v450 = vrot.slane %v441, %v449
        %v451 = vlaneseq
        %v452 = vshrl.u32 %v451, 7
        %v453 = vsub.s32 2, %v452
        %v454 = vrot.slane %v441, %v453
        %v460 = vunpack.c.l.b16 %v407
        %v461 = vunpack.c.l.b16 %v408
        %v462 = vpack.c.b16 %v461, %v460
        %v496 = vunpack.c.l.b16 %v409
        %v497 = vunpack.c.h.b16 %v409
        %v498 = vunpack.c.l.b16 %v410
        %v499 = vunpack.c.l.b16 %v411
        %v500 = vunpack.c.h.b16 %v411
        %v501 = vunpack.c.l.b16 %v412
        %v502 = vunpack.c.l.b16 %v413
        %v503 = vunpack.c.h.b16 %v413
        %v504 = vunpack.c.l.b16 %v414
        %v505 = vunpack.c.l.b16 %v415
        %v506 = vunpack.c.h.b16 %v415
        %v507 = vunpack.c.l.b16 %v416
        %v508 = vunpack.c.l.b16 %v417
        %v509 = vunpack.c.h.b16 %v417
        %v510 = vunpack.c.l.b16 %v418
        %v511 = vunpack.c.l.b16 %v419
        %v512 = vunpack.c.h.b16 %v419
        %v513 = vunpack.c.l.b16 %v420
        %v514 = vunpack.c.l.b16 %v421
        %v515 = vunpack.c.h.b16 %v421
        %v516 = vunpack.c.l.b16 %v422
        %v517 = vunpack.c.l.b16 %v423
        %v518 = vunpack.c.h.b16 %v423
        %v519 = vunpack.c.l.b16 %v424
        %v520 = vunpack.c.l.b16 %v425
        %v521 = vunpack.c.h.b16 %v425
        %v522 = vunpack.c.l.b16 %v426
        %v523 = vunpack.c.l.b16 %v427
        %v524 = vunpack.c.h.b16 %v427
        %v525 = vunpack.c.l.b16 %v428
        %v526 = vunpack.c.l.b16 %v429
        %v527 = vunpack.c.h.b16 %v429
        %v528 = vunpack.c.l.b16 %v430
        %v529 = vunpack.c.l.b16 %v431
        %v530 = vunpack.c.h.b16 %v431
        %v531 = vunpack.c.l.b16 %v432
        %v532 = vunpack.c.l.b16 %v433
        %v533 = vunpack.c.h.b16 %v433
        %v534 = vunpack.c.l.b16 %v434
        %v535 = vunpack.c.l.b16 %v435
        %v536 = vunpack.c.h.b16 %v435
        %v537 = vunpack.c.l.b16 %v436
        %v538 = vunpack.c.l.b16 %v437
        %v539 = vunpack.c.h.b16 %v437
        %v540 = vunpack.c.l.b16 %v438
        %v541 = vunpack.c.l.b16 %v439
        %v542 = vunpack.c.h.b16 %v439
        %v543 = vunpack.c.l.b16 %v440
        %v544 = vpack.c.b16 %v499, %v496
        %v545 = vpack.c.b16 %v500, %v497
        %v546 = vpack.c.b16 %v501, %v498
        %v547 = vpack.c.b16 %v505, %v502
        %v548 = vpack.c.b16 %v506, %v503
        %v549 = vpack.c.b16 %v507, %v504
        %v550 = vpack.c.b16 %v511, %v508
        %v551 = vpack.c.b16 %v512, %v509
        %v552 = vpack.c.b16 %v513, %v510
        %v553 = vpack.c.b16 %v517, %v514
        %v554 = vpack.c.b16 %v518, %v515
        %v555 = vpack.c.b16 %v519, %v516
        %v556 = vpack.c.b16 %v523, %v520
        %v557 = vpack.c.b16 %v524, %v521
        %v558 = vpack.c.b16 %v525, %v522
        %v559 = vpack.c.b16 %v529, %v526
        %v560 = vpack.c.b16 %v530, %v527
        %v561 = vpack.c.b16 %v531, %v528
        %v562 = vpack.c.b16 %v535, %v532
        %v563 = vpack.c.b16 %v536, %v533
        %v564 = vpack.c.b16 %v537, %v534
        %v565 = vpack.c.b16 %v541, %v538
        %v566 = vpack.c.b16 %v542, %v539
        %v567 = vpack.c.b16 %v543, %v540
        %592 = vmatprep.subr.bf16.mxu0 %v545
        %593 = vmatpush1.bf16.msra.mxu0 %v544
        %594 = vmatprep.subr.bf16.mxu0 %v548
        %595 = vmatpush1.bf16.msra.mxu0 %v547
        %596 = vmatprep.subr.bf16.mxu0 %v551
        %597 = vmatpush1.bf16.msra.mxu0 %v550
        %598 = vmatprep.subr.bf16.mxu0 %v554
        %599 = vmatpush1.bf16.msra.mxu0 %v553
        %600 = vmatprep.subr.bf16.mxu0 %v557
        %601 = vmatpush1.bf16.msra.mxu0 %v556
        %602 = vmatprep.subr.bf16.mxu0 %v560
        %603 = vmatpush1.bf16.msra.mxu0 %v559
        %604 = vmatprep.subr.bf16.mxu0 %v563
        %605 = vmatpush1.bf16.msra.mxu0 %v562
        %606 = vmatprep.subr.bf16.mxu0 %v566
        %607 = vmatpush1.bf16.msra.mxu0 %v565
        %608 = vmatprep.subr.bf16.mxu0 0
        %609 = vmatpush1.bf16.msra.mxu0 0
        %610 = vmatprep.subr.bf16.mxu0 0
        %611 = vmatpush1.bf16.msra.mxu0 0
        %612 = vmatprep.subr.bf16.mxu0 0
        %613 = vmatpush1.bf16.msra.mxu0 0
        %614 = vmatprep.subr.bf16.mxu0 0
        %615 = vmatpush1.bf16.msra.mxu0 0
        %616 = vmatprep.subr.bf16.mxu0 0
        %617 = vmatpush1.bf16.msra.mxu0 0
        %618 = vmatprep.subr.bf16.mxu0 0
        %619 = vmatpush1.bf16.msra.mxu0 0
        %620 = vmatprep.subr.bf16.mxu0 0
        %621 = vmatpush1.bf16.msra.mxu0 0
        %622 = vmatprep.subr.bf16.mxu0 0
        %623 = vmatpush1.bf16.msra.mxu0 0
        %624 = vmatprep.mubr.bf16.mxu0 0
        %625 = vmatmul.mubr.bf16.gmra.mrb[0].mxu0 %v462
        %v626 = vpop.f32.mrb[0].mxu0
        %v627 = vadd.f32 %v446, %v626
        %v628 = vpop.f32.mrb[0].mxu0
        %v629 = vadd.f32 %v450, %v628
        %v630 = vpop.f32.mrb[0].mxu0
        %v631 = vadd.f32 %v446, %v630
        %v632 = vpop.f32.mrb[0].mxu0
        %v633 = vadd.f32 %v450, %v632
        %634 = vdwg.mxu0
        %635 = vmatprep.subr.bf16.mxu0 0
        %636 = vmatpush1.bf16.msra.mxu0 %v546
        %637 = vmatprep.subr.bf16.mxu0 0
        %638 = vmatpush1.bf16.msra.mxu0 %v549
        %639 = vmatprep.subr.bf16.mxu0 0
        %640 = vmatpush1.bf16.msra.mxu0 %v552
        %641 = vmatprep.subr.bf16.mxu0 0
        %642 = vmatpush1.bf16.msra.mxu0 %v555
        %643 = vmatprep.subr.bf16.mxu0 0
        %644 = vmatpush1.bf16.msra.mxu0 %v558
        %645 = vmatprep.subr.bf16.mxu0 0
        %646 = vmatpush1.bf16.msra.mxu0 %v561
        %647 = vmatprep.subr.bf16.mxu0 0
        %648 = vmatpush1.bf16.msra.mxu0 %v564
        %649 = vmatprep.subr.bf16.mxu0 0
        %650 = vmatpush1.bf16.msra.mxu0 %v567
        %651 = vmatprep.subr.bf16.mxu0 0
        %652 = vmatpush1.bf16.msra.mxu0 0
        %653 = vmatprep.subr.bf16.mxu0 0
        %654 = vmatpush1.bf16.msra.mxu0 0
        %655 = vmatprep.subr.bf16.mxu0 0
        %656 = vmatpush1.bf16.msra.mxu0 0
        %657 = vmatprep.subr.bf16.mxu0 0
        %658 = vmatpush1.bf16.msra.mxu0 0
        %659 = vmatprep.subr.bf16.mxu0 0
        %660 = vmatpush1.bf16.msra.mxu0 0
        %661 = vmatprep.subr.bf16.mxu0 0
        %662 = vmatpush1.bf16.msra.mxu0 0
        %663 = vmatprep.subr.bf16.mxu0 0
        %664 = vmatpush1.bf16.msra.mxu0 0
        %665 = vmatprep.subr.bf16.mxu0 0
        %666 = vmatpush1.bf16.msra.mxu0 0
        %667 = vmatprep.mubr.bf16.mxu0 0
        %668 = vmatmul.mubr.bf16.gmra.mrb[0].mxu0 %v462
        %v669 = vpop.f32.mrb[0].mxu0
        %v670 = vadd.f32 %v454, %v669
        %v671 = vpop.f32.mrb[0].mxu0
        %v672 = vpop.f32.mrb[0].mxu0
        %v673 = vadd.f32 %v454, %v672
        %v674 = vpop.f32.mrb[0].mxu0
        %675 = vdwg.mxu0
        %v676 = vld [vmem:[%s349] sm:$0xff]
        %v677 = vld [vmem:[%s349 + $0x8] sm:$0xff]
        %v678 = vld [vmem:[%s357] sm:$0x1]
        %680 = vset.pattern.permute.xlu0 0
        %681 = vperm.xlu0 %680, %v676
        %v682 = vpop.permute.xlu0 %681
        %685 = vset.pattern.permute.xlu0 0
        %686 = vperm.xlu0 %685, %v677
        %v687 = vpop.permute.xlu0 %686
        %v690 = vlaneseq
        %v691 = vshrl.u32 %v690, 7
        %v692 = vsub.s32 0, %v691
        %v693 = vrot.slane %v678, %v692
        %v695 = vmul.f32 %v682, %v693
        %v696 = vmul.f32 %v687, %v693
        %v697 = vsub.f32 %v695, 1.0
        %v698 = vsub.f32 %v696, 1.0
        %v699 = vmul.f32 %v697, 1.25e+11
        %v700 = vmul.f32 %v698, 1.25e+11
        %v701 = vpack.c.bf16 %v631, %v627
        %703 = vrot.lane.b32.xlu0 %v701, 64
        %v704 = vpop.permute.xlu0 %703
        %vm705 = vcmask 523264
        %v707 = vsel %vm705, %v701, 0
        %v710 = vsel %vm705, %v704, 0
        %712 = vmatprep.subr.bf16.mxu0 0
        %713 = vmatpush1.bf16.xpose.msra.mxu0 %v710
        %714 = vmatprep.subr.bf16.mxu0 0
        %715 = vmatpush1.bf16.xpose.msra.mxu0 0
        %716 = vmatprep.subr.bf16.mxu0 0
        %717 = vmatpush1.bf16.xpose.msra.mxu0 0
        %718 = vmatprep.subr.bf16.mxu0 0
        %719 = vmatpush1.bf16.xpose.msra.mxu0 0
        %720 = vmatprep.subr.bf16.mxu0 0
        %721 = vmatpush1.bf16.xpose.msra.mxu0 0
        %722 = vmatprep.subr.bf16.mxu0 0
        %723 = vmatpush1.bf16.xpose.msra.mxu0 0
        %724 = vmatprep.subr.bf16.mxu0 0
        %725 = vmatpush1.bf16.xpose.msra.mxu0 0
        %726 = vmatprep.subr.bf16.mxu0 0
        %727 = vmatpush1.bf16.xpose.msra.mxu0 0
        %728 = vmatprep.subr.bf16.mxu0 0
        %729 = vmatpush1.bf16.xpose.msra.mxu0 0
        %730 = vmatprep.subr.bf16.mxu0 0
        %731 = vmatpush1.bf16.xpose.msra.mxu0 0
        %732 = vmatprep.subr.bf16.mxu0 0
        %733 = vmatpush1.bf16.xpose.msra.mxu0 0
        %734 = vmatprep.subr.bf16.mxu0 0
        %735 = vmatpush1.bf16.xpose.msra.mxu0 0
        %736 = vmatprep.subr.bf16.mxu0 0
        %737 = vmatpush1.bf16.xpose.msra.mxu0 0
        %738 = vmatprep.subr.bf16.mxu0 0
        %739 = vmatpush1.bf16.xpose.msra.mxu0 0
        %740 = vmatprep.subr.bf16.mxu0 0
        %741 = vmatpush1.bf16.xpose.msra.mxu0 0
        %742 = vmatprep.subr.bf16.mxu0 0
        %743 = vmatpush1.bf16.xpose.msra.mxu0 0
        %744 = vmatprep.mubr.bf16.mxu0 0
        %745 = vmatmul.mubr.bf16.gmra.mrb[0].mxu0 %v707
        %v746 = vpop.f32.mrb[0].mxu0
        %v747 = vadd.f32 0.0, %v746
        %v748 = vpop.f32.mrb[0].mxu0
        %v749 = vpop.f32.mrb[0].mxu0
        %v750 = vadd.f32 0.0, %v749
        %v751 = vpop.f32.mrb[0].mxu0
        %752 = vdwg.mxu0
        %v753 = vmul.f32 %v747, %v695
        %v754 = vmul.f32 %v750, %v696
        %v755 = vadd.f32 %v753, %v699
        %v756 = vadd.f32 %v754, %v700
        %vm757 = vcmask 130048
        %758 = vst.msk [vmem:[%s402] sm:$0xff] %vm757, %v755
        %759 = vst.msk [vmem:[%s402 + $0x8] sm:$0xff] %vm757, %v756
        %v760 = vpack.c.bf16 %v633, %v629
        %762 = vrot.lane.b32.xlu0 %v760, 64
        %v763 = vpop.permute.xlu0 %762
        %v765 = vsel %vm705, %v760, 0
        %v768 = vsel %vm705, %v763, 0
        %770 = vmatprep.subr.bf16.mxu0 0
        %771 = vmatpush1.bf16.xpose.msra.mxu0 %v768
        %772 = vmatprep.subr.bf16.mxu0 0
        %773 = vmatpush1.bf16.xpose.msra.mxu0 0
        %774 = vmatprep.subr.bf16.mxu0 0
        %775 = vmatpush1.bf16.xpose.msra.mxu0 0
        %776 = vmatprep.subr.bf16.mxu0 0
        %777 = vmatpush1.bf16.xpose.msra.mxu0 0
        %778 = vmatprep.subr.bf16.mxu0 0
        %779 = vmatpush1.bf16.xpose.msra.mxu0 0
        %780 = vmatprep.subr.bf16.mxu0 0
        %781 = vmatpush1.bf16.xpose.msra.mxu0 0
        %782 = vmatprep.subr.bf16.mxu0 0
        %783 = vmatpush1.bf16.xpose.msra.mxu0 0
        %784 = vmatprep.subr.bf16.mxu0 0
        %785 = vmatpush1.bf16.xpose.msra.mxu0 0
        %786 = vmatprep.subr.bf16.mxu0 0
        %787 = vmatpush1.bf16.xpose.msra.mxu0 0
        %788 = vmatprep.subr.bf16.mxu0 0
        %789 = vmatpush1.bf16.xpose.msra.mxu0 0
        %790 = vmatprep.subr.bf16.mxu0 0
        %791 = vmatpush1.bf16.xpose.msra.mxu0 0
        %792 = vmatprep.subr.bf16.mxu0 0
        %793 = vmatpush1.bf16.xpose.msra.mxu0 0
        %794 = vmatprep.subr.bf16.mxu0 0
        %795 = vmatpush1.bf16.xpose.msra.mxu0 0
        %796 = vmatprep.subr.bf16.mxu0 0
        %797 = vmatpush1.bf16.xpose.msra.mxu0 0
        %798 = vmatprep.subr.bf16.mxu0 0
        %799 = vmatpush1.bf16.xpose.msra.mxu0 0
        %800 = vmatprep.subr.bf16.mxu0 0
        %801 = vmatpush1.bf16.xpose.msra.mxu0 0
        %802 = vmatprep.mubr.bf16.mxu0 0
        %803 = vmatmul.mubr.bf16.gmra.mrb[0].mxu0 %v765
        %v804 = vpop.f32.mrb[0].mxu0
        %v805 = vadd.f32 0.0, %v804
        %v806 = vpop.f32.mrb[0].mxu0
        %v807 = vpop.f32.mrb[0].mxu0
        %v808 = vadd.f32 0.0, %v807
        %v809 = vpop.f32.mrb[0].mxu0
        %810 = vdwg.mxu0
        %v811 = vmul.f32 %v805, %v695
        %v812 = vmul.f32 %v808, %v696
        %v813 = vadd.f32 %v811, %v699
        %v814 = vadd.f32 %v812, %v700
        %s815 = scalar_lea.vmem %s402, 16 [#allocation11]
        %816 = vst.msk [vmem:[%s815] sm:$0xff] %vm757, %v813
        %817 = vst.msk [vmem:[%s815 + $0x8] sm:$0xff] %vm757, %v814
        %v818 = vpack.c.bf16 %v673, %v670
        %820 = vrot.lane.b32.xlu0 %v818, 64
        %v821 = vpop.permute.xlu0 %820
        %v823 = vsel %vm705, %v818, 0
        %v826 = vsel %vm705, %v821, 0
        %828 = vmatprep.subr.bf16.mxu0 0
        %829 = vmatpush1.bf16.xpose.msra.mxu0 %v826
        %830 = vmatprep.subr.bf16.mxu0 0
        %831 = vmatpush1.bf16.xpose.msra.mxu0 0
        %832 = vmatprep.subr.bf16.mxu0 0
        %833 = vmatpush1.bf16.xpose.msra.mxu0 0
        %834 = vmatprep.subr.bf16.mxu0 0
        %835 = vmatpush1.bf16.xpose.msra.mxu0 0
        %836 = vmatprep.subr.bf16.mxu0 0
        %837 = vmatpush1.bf16.xpose.msra.mxu0 0
        %838 = vmatprep.subr.bf16.mxu0 0
        %839 = vmatpush1.bf16.xpose.msra.mxu0 0
        %840 = vmatprep.subr.bf16.mxu0 0
        %841 = vmatpush1.bf16.xpose.msra.mxu0 0
        %842 = vmatprep.subr.bf16.mxu0 0
        %843 = vmatpush1.bf16.xpose.msra.mxu0 0
        %844 = vmatprep.subr.bf16.mxu0 0
        %845 = vmatpush1.bf16.xpose.msra.mxu0 0
        %846 = vmatprep.subr.bf16.mxu0 0
        %847 = vmatpush1.bf16.xpose.msra.mxu0 0
        %848 = vmatprep.subr.bf16.mxu0 0
        %849 = vmatpush1.bf16.xpose.msra.mxu0 0
        %850 = vmatprep.subr.bf16.mxu0 0
        %851 = vmatpush1.bf16.xpose.msra.mxu0 0
        %852 = vmatprep.subr.bf16.mxu0 0
        %853 = vmatpush1.bf16.xpose.msra.mxu0 0
        %854 = vmatprep.subr.bf16.mxu0 0
        %855 = vmatpush1.bf16.xpose.msra.mxu0 0
        %856 = vmatprep.subr.bf16.mxu0 0
        %857 = vmatpush1.bf16.xpose.msra.mxu0 0
        %858 = vmatprep.subr.bf16.mxu0 0
        %859 = vmatpush1.bf16.xpose.msra.mxu0 0
        %860 = vmatprep.mubr.bf16.mxu0 0
        %861 = vmatmul.mubr.bf16.gmra.mrb[0].mxu0 %v823
        %v862 = vpop.f32.mrb[0].mxu0
        %v863 = vadd.f32 0.0, %v862
        %v864 = vpop.f32.mrb[0].mxu0
        %v865 = vpop.f32.mrb[0].mxu0
        %v866 = vadd.f32 0.0, %v865
        %v867 = vpop.f32.mrb[0].mxu0
        %868 = vdwg.mxu0
        %v869 = vmul.f32 %v863, %v695
        %v870 = vmul.f32 %v866, %v696
        %v871 = vadd.f32 %v869, %v699
        %v872 = vadd.f32 %v870, %v700
        %s873 = scalar_lea.vmem %s402, 32 [#allocation11]
        %874 = vst.msk [vmem:[%s873] sm:$0xff] %vm757, %v871
        %875 = vst.msk [vmem:[%s873 + $0x8] sm:$0xff] %vm757, %v872
        %s876 = sand.u32 %s180, 1
        %s877 = scalar_lea.sflag [#allocation4], %s876
        %s878 = sand.u32 %s180, 1
        %s879 = smul.addr %s878, 48
        %s880 = scalar_lea.vmem [#allocation11], %s879
        // Predicated region
        $region61: #{global_pointer_for_rel_forward.13} parent=39 // pred_check
          %p881 = pneg %p190
        $region62: #{global_pointer_for_rel_forward.13} parent=39 // pred_check_branch
          %883 = sbr.rel (%p881) target = $region64
        $region63: #{global_pointer_for_rel_forward.13} parent=39 // pred_region
          %s884 = smul.u32 3, %s33
          %s886 = ssub.s32 768, 768
          %887 = vsyncadd %s877, %s886
          %s888 = smul.addr %s884, 2
          %s889 = smul.addr %s32, 12
          %s890 = sadd.s32 %s888, %s889
          %s891 = smul.addr %s890, 128
          %s892 = scalar_lea.hbm %s5, %s891
          %s893 = sshll.u32 %s880, 4
          %s894 = int_to_ptr.vmem [resolvable:$true] %s893
          %899 = dma.vmem_to_hbm [thread:$0]  %s894, 768, %s892, %s877, 128, 128, 8
        $region64: #{global_pointer_for_rel_forward.13} parent=39 // pred_fallthru
          _
      $region40: #{global_pointer_for_rel_forward.13} parent=5 // pred_fallthru
        _
      %p900 = scmp.le.s32.totalorder 2, %s23
      // Predicated region
      $region65: #{global_pointer_for_rel_forward.13} parent=5 // pred_check
        %p901 = pneg %p900
      $region66: #{global_pointer_for_rel_forward.13} parent=5 // pred_check_branch
        %903 = sbr.rel (%p901) target = $region68
      $region67: #{global_pointer_for_rel_forward.13} parent=5 // pred_region
        %s904 = ssub.s32 %s23, 2
        // Predicated region
        $region69: #{global_pointer_for_rel_forward.13} parent=67 // pred_check
          %p905 = pneg %p196
        $region70: #{global_pointer_for_rel_forward.13} parent=67 // pred_check_branch
          %907 = sbr.rel (%p905) target = $region72
        $region71: #{global_pointer_for_rel_forward.13} parent=67 // pred_region
          %s908 = sand.u32 %s181, 1
          %s909 = scalar_lea.sflag [#allocation4], %s908
          %s910 = sand.u32 %s181, 1
          %s911 = smul.addr %s910, 48
          %s912 = scalar_lea.vmem [#allocation11], %s911
          %913 = dma.done %s909, 768
        $region72: #{global_pointer_for_rel_forward.13} parent=67 // pred_fallthru
          _
      $region68: #{global_pointer_for_rel_forward.13} parent=5 // pred_fallthru
        _
    $region6: #{global_pointer_for_rel_forward.13} parent=1 // loop_footer
      %s27 = sadd.s32 1, %s23
    $region7: #{global_pointer_for_rel_forward.13} parent=1 // loop_footer_branch
      %22 = sbr.rel target = $region3
    $region8: #{global_pointer_for_rel_forward.13} parent=1 // loop_exit
      _
    %914 = vsyncpa [#allocation3], 1
    %s915 = scalar_lea.sflag [#allocation3], 1
    %916 = vsyncpa %s915, 1
    %917 = vsyncpa [#allocation6], 1
    %s918 = scalar_lea.sflag [#allocation6], 1
    %919 = vsyncpa %s918, 1
    %920 = vsyncpa [#allocation9], 1
    %s921 = scalar_lea.sflag [#allocation9], 1
    %922 = vsyncpa %s921, 1
    %923 = vsyncpa [#allocation4], 1
    %s924 = scalar_lea.sflag [#allocation4], 1
    %925 = vsyncpa %s924, 1

// kernel: global_pointer_for_rel_forward.8
$region0: #{global_pointer_for_rel_forward.8}
  #allocation0 [shape = 'u32[]', space=smem, size = 0x4, offset = 0x4, fixed_abs, tag = 'smem constant byte address 0x4 - core index']
  #allocation1 [shape = 'u32[144,128]{1,0:T(1,128)}', space=vmem, size = 0x12000, scoped, tag = 'internal scratch']
  #allocation2 [shape = 'f32[16,128]{1,0:T(8,128)}', space=vmem, size = 0x2000, scoped, tag = 'scratch operand']
  %s0 = inlined_call_operand.hbm [shape: bf16[2,16,128], index: 0, kind: input, shape index: {}]
  %s1 = inlined_call_operand.hbm [shape: bf16[128,384], index: 1, kind: input, shape index: {}]
  %s2 = inlined_call_operand.hbm [shape: f32[1,384], index: 2, kind: input, shape index: {}]
  %s3 = inlined_call_operand.hbm [shape: bf16[128,128], index: 3, kind: input, shape index: {}]
  %s4 = inlined_call_operand.hbm [shape: f32[1,128], index: 4, kind: input, shape index: {}]
  %s5 = inlined_call_operand.hbm [shape: f32[1,128], index: 5, kind: input, shape index: {}]
  %s6 = inlined_call_operand.hbm [shape: f32[1,128], index: 6, kind: input, shape index: {}]
  %s7 = inlined_call_operand.hbm [shape: f32[2,1,16], index: 7, kind: input, shape index: {}]
  %s8 = inlined_call_operand.hbm [shape: bf16[2,16,128], index: 8, kind: output, shape index: {}]
  %s9 = sld [smem:[#allocation0]]
  $region97: #{global_pointer_for_rel_forward.8} parent=0
    _
  %s11 = ssub.s32 1, %s9
  %s12 = scalar_select 0, %s11, %s9
  $region1: #{global_pointer_for_rel_forward.8} parent=0
    #allocation3 [shape = 'u8[8192]{0}', space=vmem, size = 0x2000, scoped, tag = 'input window, operand 0']
    #allocation4 [shape = 's32[2]{0}', space=sflag, size = 0x8, scoped, tag = 'scoped memory for global_pointer_for_rel_forward.8']
    #allocation5 [shape = 's32[2]{0}', space=sflag, size = 0x8, scoped, tag = 'scoped memory for global_pointer_for_rel_forward.8']
    #allocation6 [shape = 'u8[98304]{0}', space=vmem, size = 0x18000, scoped, tag = 'input window, operand 1, single buffered']
    #allocation7 [shape = 's32[1]{0}', space=sflag, size = 0x4, scoped, tag = 'scoped memory for global_pointer_for_rel_forward.8']
    #allocation8 [shape = 'u8[1536]{0}', space=vmem, size = 0x800, scoped, tag = 'input window, operand 2, single buffered']
    #allocation9 [shape = 'u8[32768]{0}', space=vmem, size = 0x8000, scoped, tag = 'input window, operand 3, single buffered']
    #allocation10 [shape = 's32[1]{0}', space=sflag, size = 0x4, scoped, tag = 'scoped memory for global_pointer_for_rel_forward.8']
    #allocation11 [shape = 'u8[512]{0}', space=vmem, size = 0x400, scoped, tag = 'input window, operand 4, single buffered']
    #allocation12 [shape = 'u8[512]{0}', space=vmem, size = 0x400, scoped, tag = 'input window, operand 5, single buffered']
    #allocation13 [shape = 's32[1]{0}', space=sflag, size = 0x4, scoped, tag = 'scoped memory for global_pointer_for_rel_forward.8']
    #allocation14 [shape = 'u8[512]{0}', space=vmem, size = 0x400, scoped, tag = 'input window, operand 6, single buffered']
    #allocation15 [shape = 'u8[1024]{0}', space=vmem, size = 0x400, scoped, tag = 'input window, operand 7']
    #allocation16 [shape = 's32[2]{0}', space=sflag, size = 0x8, scoped, tag = 'scoped memory for global_pointer_for_rel_forward.8']
    #allocation17 [shape = 'u8[8192]{0}', space=vmem, size = 0x2000, scoped, tag = 'output window, operand 0']
    %13 = vsyncpa [#allocation4], 0
    %s14 = scalar_lea.sflag [#allocation4], 1
    %15 = vsyncpa %s14, 0
    %16 = vsyncpa [#allocation7], 0
    %17 = vsyncpa [#allocation10], 0
    %18 = vsyncpa [#allocation13], 0
    %19 = vsyncpa [#allocation16], 0
    %s20 = scalar_lea.sflag [#allocation16], 1
    %21 = vsyncpa %s20, 0
    %22 = vsyncpa [#allocation5], 0
    %s23 = scalar_lea.sflag [#allocation5], 1
    %24 = vsyncpa %s23, 0
    loop: start=0, step=1, limit=4
    $region2: #{global_pointer_for_rel_forward.8} parent=1 // loop_pre_header
      _
    $region3: #{global_pointer_for_rel_forward.8} parent=1 // loop_header
      %s26 = sphi 0, %s30
      %p27 = scmp.ge.s32.totalorder %s26, 4
      %s36 = sphi 0, %s38
      %s39 = sphi 0, %s36
      %s40 = sphi 0, %s39
      %s56 = sphi 0, %s40
      %s60 = sphi 0, %s60
      %s62 = sphi 0, %s60
      %s63 = sphi 0, %s62
      %s77 = sphi 0, %s63
      %s81 = sphi 0, %s81
      %s83 = sphi 0, %s81
      %s84 = sphi 0, %s83
      %s98 = sphi 0, %s84
      %s102 = sphi 0, %s102
      %s104 = sphi 0, %s102
      %s105 = sphi 0, %s104
      %s119 = sphi 0, %s105
      %s123 = sphi 0, %s123
      %s125 = sphi 0, %s123
      %s126 = sphi 0, %s125
      %s140 = sphi 0, %s126
      %s144 = sphi 0, %s144
      %s146 = sphi 0, %s144
      %s147 = sphi 0, %s146
      %s161 = sphi 0, %s147
      %s165 = sphi 0, %s165
      %s167 = sphi 0, %s165
      %s168 = sphi 0, %s167
      %s182 = sphi 0, %s168
      %s188 = sphi 0, %s190
      %s191 = sphi 0, %s188
      %s192 = sphi 0, %s191
      %s208 = sphi 0, %s192
      %s214 = sphi 0, %s216
      %s217 = sphi 0, %s214
      %s218 = sphi 0, %s217
      %s234 = sphi 0, %s218
    $region4: #{global_pointer_for_rel_forward.8} parent=1 // loop_header_branch
      %29 = sbr.rel (%p27) target = $region8
    $region5: #{global_pointer_for_rel_forward.8} parent=1 // loop_body
      %s31 = ssub.s32 %s26, 1
      %s32 = ssub.s32 %s26, 2
      %s33 = sadd.s32 %s26, 1
      %s34 = ssub.s32 %s26, %s33
      %p35 = scmp.eq.s32.totalorder %s34, 0
      %s37 = sadd.s32 %s36, 1
      %s38 = scalar_select %p35, %s36, %s37
      %p41 = pneg %p35
      %p42 = scmp.eq.s32.totalorder %s26, 1
      %p43 = por %p41, %p42
      %p44 = scmp.ne.s32.totalorder %s36, %s39
      %p45 = scmp.eq.s32.totalorder %s26, 0
      %p46 = por %p44, %p45
      %p47 = scmp.ne.s32.totalorder %s36, %s39
      %p48 = scmp.eq.s32.totalorder %s31, 1
      %p49 = por %p47, %p48
      %p50 = scmp.ne.s32.totalorder %s39, %s40
      %p51 = scmp.eq.s32.totalorder %s31, 0
      %p52 = por %p50, %p51
      %p53 = scmp.ne.s32.totalorder %s39, %s40
      %p54 = scmp.eq.s32.totalorder %s32, 1
      %p55 = por %p53, %p54
      %p57 = scmp.ne.s32.totalorder %s40, %s56
      %p58 = scmp.eq.s32.totalorder %s32, 0
      %p59 = por %p57, %p58
      %s61 = sadd.s32 %s60, 1
      %p64 = scmp.eq.s32.totalorder %s26, 1
      %p65 = scmp.ne.s32.totalorder %s60, %s62
      %p66 = scmp.eq.s32.totalorder %s26, 0
      %p67 = por %p65, %p66
      %p68 = scmp.ne.s32.totalorder %s60, %s62
      %p69 = scmp.eq.s32.totalorder %s31, 1
      %p70 = por %p68, %p69
      %p71 = scmp.ne.s32.totalorder %s62, %s63
      %p72 = scmp.eq.s32.totalorder %s31, 0
      %p73 = por %p71, %p72
      %p74 = scmp.ne.s32.totalorder %s62, %s63
      %p75 = scmp.eq.s32.totalorder %s32, 1
      %p76 = por %p74, %p75
      %p78 = scmp.ne.s32.totalorder %s63, %s77
      %p79 = scmp.eq.s32.totalorder %s32, 0
      %p80 = por %p78, %p79
      %s82 = sadd.s32 %s81, 1
      %p85 = scmp.eq.s32.totalorder %s26, 1
      %p86 = scmp.ne.s32.totalorder %s81, %s83
      %p87 = scmp.eq.s32.totalorder %s26, 0
      %p88 = por %p86, %p87
      %p89 = scmp.ne.s32.totalorder %s81, %s83
      %p90 = scmp.eq.s32.totalorder %s31, 1
      %p91 = por %p89, %p90
      %p92 = scmp.ne.s32.totalorder %s83, %s84
      %p93 = scmp.eq.s32.totalorder %s31, 0
      %p94 = por %p92, %p93
      %p95 = scmp.ne.s32.totalorder %s83, %s84
      %p96 = scmp.eq.s32.totalorder %s32, 1
      %p97 = por %p95, %p96
      %p99 = scmp.ne.s32.totalorder %s84, %s98
      %p100 = scmp.eq.s32.totalorder %s32, 0
      %p101 = por %p99, %p100
      %s103 = sadd.s32 %s102, 1
      %p106 = scmp.eq.s32.totalorder %s26, 1
      %p107 = scmp.ne.s32.totalorder %s102, %s104
      %p108 = scmp.eq.s32.totalorder %s26, 0
      %p109 = por %p107, %p108
      %p110 = scmp.ne.s32.totalorder %s102, %s104
      %p111 = scmp.eq.s32.totalorder %s31, 1
      %p112 = por %p110, %p111
      %p113 = scmp.ne.s32.totalorder %s104, %s105
      %p114 = scmp.eq.s32.totalorder %s31, 0
      %p115 = por %p113, %p114
      %p116 = scmp.ne.s32.totalorder %s104, %s105
      %p117 = scmp.eq.s32.totalorder %s32, 1
      %p118 = por %p116, %p117
      %p120 = scmp.ne.s32.totalorder %s105, %s119
      %p121 = scmp.eq.s32.totalorder %s32, 0
      %p122 = por %p120, %p121
      %s124 = sadd.s32 %s123, 1
      %p127 = scmp.eq.s32.totalorder %s26, 1
      %p128 = scmp.ne.s32.totalorder %s123, %s125
      %p129 = scmp.eq.s32.totalorder %s26, 0
      %p130 = por %p128, %p129
      %p131 = scmp.ne.s32.totalorder %s123, %s125
      %p132 = scmp.eq.s32.totalorder %s31, 1
      %p133 = por %p131, %p132
      %p134 = scmp.ne.s32.totalorder %s125, %s126
      %p135 = scmp.eq.s32.totalorder %s31, 0
      %p136 = por %p134, %p135
      %p137 = scmp.ne.s32.totalorder %s125, %s126
      %p138 = scmp.eq.s32.totalorder %s32, 1
      %p139 = por %p137, %p138
      %p141 = scmp.ne.s32.totalorder %s126, %s140
      %p142 = scmp.eq.s32.totalorder %s32, 0
      %p143 = por %p141, %p142
      %s145 = sadd.s32 %s144, 1
      %p148 = scmp.eq.s32.totalorder %s26, 1
      %p149 = scmp.ne.s32.totalorder %s144, %s146
      %p150 = scmp.eq.s32.totalorder %s26, 0
      %p151 = por %p149, %p150
      %p152 = scmp.ne.s32.totalorder %s144, %s146
      %p153 = scmp.eq.s32.totalorder %s31, 1
      %p154 = por %p152, %p153
      %p155 = scmp.ne.s32.totalorder %s146, %s147
      %p156 = scmp.eq.s32.totalorder %s31, 0
      %p157 = por %p155, %p156
      %p158 = scmp.ne.s32.totalorder %s146, %s147
      %p159 = scmp.eq.s32.totalorder %s32, 1
      %p160 = por %p158, %p159
      %p162 = scmp.ne.s32.totalorder %s147, %s161
      %p163 = scmp.eq.s32.totalorder %s32, 0
      %p164 = por %p162, %p163
      %s166 = sadd.s32 %s165, 1
      %p169 = scmp.eq.s32.totalorder %s26, 1
      %p170 = scmp.ne.s32.totalorder %s165, %s167
      %p171 = scmp.eq.s32.totalorder %s26, 0
      %p172 = por %p170, %p171
      %p173 = scmp.ne.s32.totalorder %s165, %s167
      %p174 = scmp.eq.s32.totalorder %s31, 1
      %p175 = por %p173, %p174
      %p176 = scmp.ne.s32.totalorder %s167, %s168
      %p177 = scmp.eq.s32.totalorder %s31, 0
      %p178 = por %p176, %p177
      %p179 = scmp.ne.s32.totalorder %s167, %s168
      %p180 = scmp.eq.s32.totalorder %s32, 1
      %p181 = por %p179, %p180
      %p183 = scmp.ne.s32.totalorder %s168, %s182
      %p184 = scmp.eq.s32.totalorder %s32, 0
      %p185 = por %p183, %p184
      %s186 = ssub.s32 %s26, %s33
      %p187 = scmp.eq.s32.totalorder %s186, 0
      %s189 = sadd.s32 %s188, 1
      %s190 = scalar_select %p187, %s188, %s189
      %p193 = pneg %p187
      %p194 = scmp.eq.s32.totalorder %s26, 1
      %p195 = por %p193, %p194
      %p196 = scmp.ne.s32.totalorder %s188, %s191
      %p197 = scmp.eq.s32.totalorder %s26, 0
      %p198 = por %p196, %p197
      %p199 = scmp.ne.s32.totalorder %s188, %s191
      %p200 = scmp.eq.s32.totalorder %s31, 1
      %p201 = por %p199, %p200
      %p202 = scmp.ne.s32.totalorder %s191, %s192
      %p203 = scmp.eq.s32.totalorder %s31, 0
      %p204 = por %p202, %p203
      %p205 = scmp.ne.s32.totalorder %s191, %s192
      %p206 = scmp.eq.s32.totalorder %s32, 1
      %p207 = por %p205, %p206
      %p209 = scmp.ne.s32.totalorder %s192, %s208
      %p210 = scmp.eq.s32.totalorder %s32, 0
      %p211 = por %p209, %p210
      %s212 = ssub.s32 %s26, %s33
      %p213 = scmp.eq.s32.totalorder %s212, 0
      %s215 = sadd.s32 %s214, 1
      %s216 = scalar_select %p213, %s214, %s215
      %p219 = pneg %p213
      %p220 = scmp.eq.s32.totalorder %s26, 1
      %p221 = por %p219, %p220
      %p222 = scmp.ne.s32.totalorder %s214, %s217
      %p223 = scmp.eq.s32.totalorder %s26, 0
      %p224 = por %p222, %p223
      %p225 = scmp.ne.s32.totalorder %s214, %s217
      %p226 = scmp.eq.s32.totalorder %s31, 1
      %p227 = por %p225, %p226
      %p228 = scmp.ne.s32.totalorder %s217, %s218
      %p229 = scmp.eq.s32.totalorder %s31, 0
      %p230 = por %p228, %p229
      %p231 = scmp.ne.s32.totalorder %s217, %s218
      %p232 = scmp.eq.s32.totalorder %s32, 1
      %p233 = por %p231, %p232
      %p235 = scmp.ne.s32.totalorder %s218, %s234
      %p236 = scmp.eq.s32.totalorder %s32, 0
      %p237 = por %p235, %p236
      %p238 = scmp.le.s32.totalorder 1, %s26
      %p239 = scmp.lt.s32.totalorder %s26, 3
      %p240 = pnand %p238, %p239
      %p241 = pneg %p240
      // Predicated region
      $region9: #{global_pointer_for_rel_forward.8} parent=5 // pred_check
        _
      $region10: #{global_pointer_for_rel_forward.8} parent=5 // pred_check_branch
        %243 = sbr.rel (%p240) target = $region12
      $region11: #{global_pointer_for_rel_forward.8} parent=5 // pred_region
        %s244 = ssub.s32 %s26, 1
        // Predicated region
        $region13: #{global_pointer_for_rel_forward.8} parent=11 // pred_check
          %p245 = pneg %p73
        $region14: #{global_pointer_for_rel_forward.8} parent=11 // pred_check_branch
          %247 = sbr.rel (%p245) target = $region16
        $region15: #{global_pointer_for_rel_forward.8} parent=11 // pred_region
          %s249 = ssub.s32 3072, 3072
          %250 = vsyncadd [#allocation7], %s249
          %s251 = sshll.u32 [#allocation6], 4
          %s252 = int_to_ptr.vmem [resolvable:$true] %s251
          %257 = dma.hbm_to_vmem [thread:$0]  %s1, 3072, %s252, [#allocation7], 192, 192, 12
        $region16: #{global_pointer_for_rel_forward.8} parent=11 // pred_fallthru
          _
        // Predicated region
        $region17: #{global_pointer_for_rel_forward.8} parent=11 // pred_check
          %p258 = pneg %p94
        $region18: #{global_pointer_for_rel_forward.8} parent=11 // pred_check_branch
          %260 = sbr.rel (%p258) target = $region20
        $region19: #{global_pointer_for_rel_forward.8} parent=11 // pred_region
          %s262 = ssub.s32 48, 48
          %263 = vsyncadd [#allocation7], %s262
          %s265 = sshll.u32 [#allocation8], 4
          %s266 = int_to_ptr.vmem [resolvable:$true] %s265
          %268 = dma.hbm_to_vmem [thread:$0]  %s2, 48, %s266, [#allocation7]
        $region20: #{global_pointer_for_rel_forward.8} parent=11 // pred_fallthru
          _
        // Predicated region
        $region21: #{global_pointer_for_rel_forward.8} parent=11 // pred_check
          %p269 = pneg %p115
        $region22: #{global_pointer_for_rel_forward.8} parent=11 // pred_check_branch
          %271 = sbr.rel (%p269) target = $region24
        $region23: #{global_pointer_for_rel_forward.8} parent=11 // pred_region
          %s273 = ssub.s32 1024, 1024
          %274 = vsyncadd [#allocation10], %s273
          %s275 = sshll.u32 [#allocation9], 4
          %s276 = int_to_ptr.vmem [resolvable:$true] %s275
          %281 = dma.hbm_to_vmem [thread:$0]  %s3, 1024, %s276, [#allocation10], 64, 64, 4
        $region24: #{global_pointer_for_rel_forward.8} parent=11 // pred_fallthru
          _
        // Predicated region
        $region25: #{global_pointer_for_rel_forward.8} parent=11 // pred_check
          %p282 = pneg %p136
        $region26: #{global_pointer_for_rel_forward.8} parent=11 // pred_check_branch
          %284 = sbr.rel (%p282) target = $region28
        $region27: #{global_pointer_for_rel_forward.8} parent=11 // pred_region
          %s286 = ssub.s32 16, 16
          %287 = vsyncadd [#allocation10], %s286
          %s289 = sshll.u32 [#allocation11], 4
          %s290 = int_to_ptr.vmem [resolvable:$true] %s289
          %292 = dma.hbm_to_vmem [thread:$0]  %s4, 16, %s290, [#allocation10]
        $region28: #{global_pointer_for_rel_forward.8} parent=11 // pred_fallthru
          _
        // Predicated region
        $region29: #{global_pointer_for_rel_forward.8} parent=11 // pred_check
          %p293 = pneg %p157
        $region30: #{global_pointer_for_rel_forward.8} parent=11 // pred_check_branch
          %295 = sbr.rel (%p293) target = $region32
        $region31: #{global_pointer_for_rel_forward.8} parent=11 // pred_region
          %s297 = ssub.s32 16, 16
          %298 = vsyncadd [#allocation13], %s297
          %s300 = sshll.u32 [#allocation12], 4
          %s301 = int_to_ptr.vmem [resolvable:$true] %s300
          %303 = dma.hbm_to_vmem [thread:$0]  %s5, 16, %s301, [#allocation13]
        $region32: #{global_pointer_for_rel_forward.8} parent=11 // pred_fallthru
          _
        // Predicated region
        $region33: #{global_pointer_for_rel_forward.8} parent=11 // pred_check
          %p304 = pneg %p178
        $region34: #{global_pointer_for_rel_forward.8} parent=11 // pred_check_branch
          %306 = sbr.rel (%p304) target = $region36
        $region35: #{global_pointer_for_rel_forward.8} parent=11 // pred_region
          %s308 = ssub.s32 16, 16
          %309 = vsyncadd [#allocation13], %s308
          %s311 = sshll.u32 [#allocation14], 4
          %s312 = int_to_ptr.vmem [resolvable:$true] %s311
          %314 = dma.hbm_to_vmem [thread:$0]  %s6, 16, %s312, [#allocation13]
        $region36: #{global_pointer_for_rel_forward.8} parent=11 // pred_fallthru
          _
      $region12: #{global_pointer_for_rel_forward.8} parent=5 // pred_fallthru
        _
      %p315 = scmp.lt.s32.totalorder %s26, 2
      // Predicated region
      $region37: #{global_pointer_for_rel_forward.8} parent=5 // pred_check
        %p316 = pneg %p315
      $region38: #{global_pointer_for_rel_forward.8} parent=5 // pred_check_branch
        %318 = sbr.rel (%p316) target = $region40
      $region39: #{global_pointer_for_rel_forward.8} parent=5 // pred_region
        // Predicated region
        $region41: #{global_pointer_for_rel_forward.8} parent=39 // pred_check
          %p319 = pneg %p46
        $region42: #{global_pointer_for_rel_forward.8} parent=39 // pred_check_branch
          %321 = sbr.rel (%p319) target = $region44
        $region43: #{global_pointer_for_rel_forward.8} parent=39 // pred_region
          %s322 = sand.u32 %s36, 1
          %s323 = scalar_lea.sflag [#allocation4], %s322
          %s324 = sand.u32 %s36, 1
          %s325 = smul.addr %s324, 8
          %s326 = scalar_lea.vmem [#allocation3], %s325
          %s328 = ssub.s32 128, 128
          %329 = vsyncadd %s323, %s328
          %s330 = smul.addr %s26, 2
          %s331 = smul.addr %s330, 64
          %s332 = scalar_lea.hbm %s0, %s331
          %s333 = sshll.u32 %s326, 4
          %s334 = int_to_ptr.vmem [resolvable:$true] %s333
          %339 = dma.hbm_to_vmem [thread:$0]  %s332, 128, %s334, %s323, 64, 64, 4
        $region44: #{global_pointer_for_rel_forward.8} parent=39 // pred_fallthru
          _
        // Predicated region
        $region45: #{global_pointer_for_rel_forward.8} parent=39 // pred_check
          %p340 = pneg %p198
        $region46: #{global_pointer_for_rel_forward.8} parent=39 // pred_check_branch
          %342 = sbr.rel (%p340) target = $region48
        $region47: #{global_pointer_for_rel_forward.8} parent=39 // pred_region
          %s343 = sand.u32 %s188, 1
          %s344 = scalar_lea.sflag [#allocation16], %s343
          %s345 = sand.u32 %s188, 1
          %s346 = scalar_lea.vmem [#allocation15], %s345
          %s348 = ssub.s32 16, 16
          %349 = vsyncadd %s344, %s348
          %s350 = smul.addr %s26, 16
          %s351 = scalar_lea.hbm %s7, %s350
          %s353 = sshll.u32 %s346, 4
          %s354 = int_to_ptr.vmem [resolvable:$true] %s353
          %356 = dma.hbm_to_vmem [thread:$0]  %s351, 16, %s354, %s344
        $region48: #{global_pointer_for_rel_forward.8} parent=39 // pred_fallthru
          _
      $region40: #{global_pointer_for_rel_forward.8} parent=5 // pred_fallthru
        _
      %p357 = scmp.le.s32.totalorder 1, %s26
      %p358 = scmp.lt.s32.totalorder %s26, 3
      %p359 = pnand %p357, %p358
      %p360 = pneg %p359
      // Predicated region
      $region49: #{global_pointer_for_rel_forward.8} parent=5 // pred_check
        _
      $region50: #{global_pointer_for_rel_forward.8} parent=5 // pred_check_branch
        %362 = sbr.rel (%p359) target = $region52
      $region51: #{global_pointer_for_rel_forward.8} parent=5 // pred_region
        %s363 = ssub.s32 %s26, 1
        %s364 = sand.u32 %s39, 1
        %s365 = scalar_lea.sflag [#allocation4], %s364
        %s366 = sand.u32 %s39, 1
        %s367 = smul.addr %s366, 8
        %s368 = scalar_lea.vmem [#allocation3], %s367
        // Predicated region
        $region53: #{global_pointer_for_rel_forward.8} parent=51 // pred_check
          %p369 = pneg %p52
        $region54: #{global_pointer_for_rel_forward.8} parent=51 // pred_check_branch
          %371 = sbr.rel (%p369) target = $region56
        $region55: #{global_pointer_for_rel_forward.8} parent=51 // pred_region
          %372 = dma.done %s365, 128
        $region56: #{global_pointer_for_rel_forward.8} parent=51 // pred_fallthru
          _
        // Predicated region
        $region57: #{global_pointer_for_rel_forward.8} parent=51 // pred_check
          %p373 = pneg %p73
        $region58: #{global_pointer_for_rel_forward.8} parent=51 // pred_check_branch
          %375 = sbr.rel (%p373) target = $region60
        $region59: #{global_pointer_for_rel_forward.8} parent=51 // pred_region
          %376 = dma.done [#allocation7], 3072
        $region60: #{global_pointer_for_rel_forward.8} parent=51 // pred_fallthru
          _
        // Predicated region
        $region61: #{global_pointer_for_rel_forward.8} parent=51 // pred_check
          %p377 = pneg %p94
        $region62: #{global_pointer_for_rel_forward.8} parent=51 // pred_check_branch
          %379 = sbr.rel (%p377) target = $region64
        $region63: #{global_pointer_for_rel_forward.8} parent=51 // pred_region
          %380 = dma.done [#allocation7], 48
        $region64: #{global_pointer_for_rel_forward.8} parent=51 // pred_fallthru
          _
        // Predicated region
        $region65: #{global_pointer_for_rel_forward.8} parent=51 // pred_check
          %p381 = pneg %p115
        $region66: #{global_pointer_for_rel_forward.8} parent=51 // pred_check_branch
          %383 = sbr.rel (%p381) target = $region68
        $region67: #{global_pointer_for_rel_forward.8} parent=51 // pred_region
          %384 = dma.done [#allocation10], 1024
        $region68: #{global_pointer_for_rel_forward.8} parent=51 // pred_fallthru
          _
        // Predicated region
        $region69: #{global_pointer_for_rel_forward.8} parent=51 // pred_check
          %p385 = pneg %p136
        $region70: #{global_pointer_for_rel_forward.8} parent=51 // pred_check_branch
          %387 = sbr.rel (%p385) target = $region72
        $region71: #{global_pointer_for_rel_forward.8} parent=51 // pred_region
          %388 = dma.done [#allocation10], 16
        $region72: #{global_pointer_for_rel_forward.8} parent=51 // pred_fallthru
          _
        // Predicated region
        $region73: #{global_pointer_for_rel_forward.8} parent=51 // pred_check
          %p389 = pneg %p157
        $region74: #{global_pointer_for_rel_forward.8} parent=51 // pred_check_branch
          %391 = sbr.rel (%p389) target = $region76
        $region75: #{global_pointer_for_rel_forward.8} parent=51 // pred_region
          %392 = dma.done [#allocation13], 16
        $region76: #{global_pointer_for_rel_forward.8} parent=51 // pred_fallthru
          _
        // Predicated region
        $region77: #{global_pointer_for_rel_forward.8} parent=51 // pred_check
          %p393 = pneg %p178
        $region78: #{global_pointer_for_rel_forward.8} parent=51 // pred_check_branch
          %395 = sbr.rel (%p393) target = $region80
        $region79: #{global_pointer_for_rel_forward.8} parent=51 // pred_region
          %396 = dma.done [#allocation13], 16
        $region80: #{global_pointer_for_rel_forward.8} parent=51 // pred_fallthru
          _
        %s397 = sand.u32 %s191, 1
        %s398 = scalar_lea.sflag [#allocation16], %s397
        %s399 = sand.u32 %s191, 1
        %s400 = scalar_lea.vmem [#allocation15], %s399
        // Predicated region
        $region81: #{global_pointer_for_rel_forward.8} parent=51 // pred_check
          %p401 = pneg %p204
        $region82: #{global_pointer_for_rel_forward.8} parent=51 // pred_check_branch
          %403 = sbr.rel (%p401) target = $region84
        $region83: #{global_pointer_for_rel_forward.8} parent=51 // pred_region
          %404 = dma.done %s398, 16
        $region84: #{global_pointer_for_rel_forward.8} parent=51 // pred_fallthru
          _
        %s405 = sand.u32 %s39, 1
        %s406 = scalar_lea.sflag [#allocation4], %s405
        %s407 = sand.u32 %s39, 1
        %s408 = smul.addr %s407, 8
        %s409 = scalar_lea.vmem [#allocation3], %s408
        %p410 = pneg %p52
        %p411 = pneg %p49
        %p412 = pneg %p73
        %p413 = pneg %p70
        %p414 = pneg %p94
        %p415 = pneg %p91
        %p416 = pneg %p115
        %p417 = pneg %p112
        %p418 = pneg %p136
        %p419 = pneg %p133
        %p420 = pneg %p157
        %p421 = pneg %p154
        %p422 = pneg %p178
        %p423 = pneg %p175
        %s424 = sand.u32 %s191, 1
        %s425 = scalar_lea.sflag [#allocation16], %s424
        %s426 = sand.u32 %s191, 1
        %s427 = scalar_lea.vmem [#allocation15], %s426
        %p428 = pneg %p204
        %p429 = pneg %p201
        %p430 = pneg %p230
        %p431 = pneg %p227
        %s432 = sand.u32 %s217, 1
        %s433 = scalar_lea.sflag [#allocation5], %s432
        %s434 = sand.u32 %s217, 1
        %s435 = smul.addr %s434, 8
        %s436 = scalar_lea.vmem [#allocation17], %s435
        %v438 = vld [vmem:[%s368] sm:$0xf]
        %v439 = vld [vmem:[%s368 + $0x4] sm:$0xf]
        %v440 = vld [vmem:[#allocation6] sm:$0xff]
        %v441 = vld [vmem:[#allocation6 + $0x8] sm:$0xf]
        %v442 = vld [vmem:[#allocation6 + $0xc] sm:$0xff]
        %v443 = vld [vmem:[#allocation6 + $0x14] sm:$0xf]
        %v444 = vld [vmem:[#allocation6 + $0x18] sm:$0xff]
        %v445 = vld [vmem:[#allocation6 + $0x20] sm:$0xf]
        %v446 = vld [vmem:[#allocation6 + $0x24] sm:$0xff]
        %v447 = vld [vmem:[#allocation6 + $0x2c] sm:$0xf]
        %v448 = vld [vmem:[#allocation6 + $0x30] sm:$0xff]
        %v449 = vld [vmem:[#allocation6 + $0x38] sm:$0xf]
        %v450 = vld [vmem:[#allocation6 + $0x3c] sm:$0xff]
        %v451 = vld [vmem:[#allocation6 + $0x44] sm:$0xf]
        %v452 = vld [vmem:[#allocation6 + $0x48] sm:$0xff]
        %v453 = vld [vmem:[#allocation6 + $0x50] sm:$0xf]
        %v454 = vld [vmem:[#allocation6 + $0x54] sm:$0xff]
        %v455 = vld [vmem:[#allocation6 + $0x5c] sm:$0xf]
        %v456 = vld [vmem:[#allocation6 + $0x60] sm:$0xff]
        %v457 = vld [vmem:[#allocation6 + $0x68] sm:$0xf]
        %v458 = vld [vmem:[#allocation6 + $0x6c] sm:$0xff]
        %v459 = vld [vmem:[#allocation6 + $0x74] sm:$0xf]
        %v460 = vld [vmem:[#allocation6 + $0x78] sm:$0xff]
        %v461 = vld [vmem:[#allocation6 + $0x80] sm:$0xf]
        %v462 = vld [vmem:[#allocation6 + $0x84] sm:$0xff]
        %v463 = vld [vmem:[#allocation6 + $0x8c] sm:$0xf]
        %v464 = vld [vmem:[#allocation6 + $0x90] sm:$0xff]
        %v465 = vld [vmem:[#allocation6 + $0x98] sm:$0xf]
        %v466 = vld [vmem:[#allocation6 + $0x9c] sm:$0xff]
        %v467 = vld [vmem:[#allocation6 + $0xa4] sm:$0xf]
        %v468 = vld [vmem:[#allocation6 + $0xa8] sm:$0xff]
        %v469 = vld [vmem:[#allocation6 + $0xb0] sm:$0xf]
        %v470 = vld [vmem:[#allocation6 + $0xb4] sm:$0xff]
        %v471 = vld [vmem:[#allocation6 + $0xbc] sm:$0xf]
        %v472 = vld [vmem:[#allocation8] sm:$0x7]
        %v474 = vlaneseq
        %v475 = vshrl.u32 %v474, 7
        %v476 = vsub.s32 0, %v475
        %v477 = vrot.slane %v472, %v476
        %v478 = vlaneseq
        %v479 = vshrl.u32 %v478, 7
        %v480 = vsub.s32 1, %v479
        %v481 = vrot.slane %v472, %v480
        %v482 = vlaneseq
        %v483 = vshrl.u32 %v482, 7
        %v484 = vsub.s32 2, %v483
        %v485 = vrot.slane %v472, %v484
        %v491 = vunpack.c.l.b16 %v438
        %v492 = vunpack.c.l.b16 %v439
        %v493 = vpack.c.b16 %v492, %v491
        %v527 = vunpack.c.l.b16 %v440
        %v528 = vunpack.c.h.b16 %v440
        %v529 = vunpack.c.l.b16 %v441
        %v530 = vunpack.c.l.b16 %v442
        %v531 = vunpack.c.h.b16 %v442
        %v532 = vunpack.c.l.b16 %v443
        %v533 = vunpack.c.l.b16 %v444
        %v534 = vunpack.c.h.b16 %v444
        %v535 = vunpack.c.l.b16 %v445
        %v536 = vunpack.c.l.b16 %v446
        %v537 = vunpack.c.h.b16 %v446
        %v538 = vunpack.c.l.b16 %v447
        %v539 = vunpack.c.l.b16 %v448
        %v540 = vunpack.c.h.b16 %v448
        %v541 = vunpack.c.l.b16 %v449
        %v542 = vunpack.c.l.b16 %v450
        %v543 = vunpack.c.h.b16 %v450
        %v544 = vunpack.c.l.b16 %v451
        %v545 = vunpack.c.l.b16 %v452
        %v546 = vunpack.c.h.b16 %v452
        %v547 = vunpack.c.l.b16 %v453
        %v548 = vunpack.c.l.b16 %v454
        %v549 = vunpack.c.h.b16 %v454
        %v550 = vunpack.c.l.b16 %v455
        %v551 = vunpack.c.l.b16 %v456
        %v552 = vunpack.c.h.b16 %v456
        %v553 = vunpack.c.l.b16 %v457
        %v554 = vunpack.c.l.b16 %v458
        %v555 = vunpack.c.h.b16 %v458
        %v556 = vunpack.c.l.b16 %v459
        %v557 = vunpack.c.l.b16 %v460
        %v558 = vunpack.c.h.b16 %v460
        %v559 = vunpack.c.l.b16 %v461
        %v560 = vunpack.c.l.b16 %v462
        %v561 = vunpack.c.h.b16 %v462
        %v562 = vunpack.c.l.b16 %v463
        %v563 = vunpack.c.l.b16 %v464
        %v564 = vunpack.c.h.b16 %v464
        %v565 = vunpack.c.l.b16 %v465
        %v566 = vunpack.c.l.b16 %v466
        %v567 = vunpack.c.h.b16 %v466
        %v568 = vunpack.c.l.b16 %v467
        %v569 = vunpack.c.l.b16 %v468
        %v570 = vunpack.c.h.b16 %v468
        %v571 = vunpack.c.l.b16 %v469
        %v572 = vunpack.c.l.b16 %v470
        %v573 = vunpack.c.h.b16 %v470
        %v574 = vunpack.c.l.b16 %v471
        %v575 = vpack.c.b16 %v530, %v527
        %v576 = vpack.c.b16 %v531, %v528
        %v577 = vpack.c.b16 %v532, %v529
        %v578 = vpack.c.b16 %v536, %v533
        %v579 = vpack.c.b16 %v537, %v534
        %v580 = vpack.c.b16 %v538, %v535
        %v581 = vpack.c.b16 %v542, %v539
        %v582 = vpack.c.b16 %v543, %v540
        %v583 = vpack.c.b16 %v544, %v541
        %v584 = vpack.c.b16 %v548, %v545
        %v585 = vpack.c.b16 %v549, %v546
        %v586 = vpack.c.b16 %v550, %v547
        %v587 = vpack.c.b16 %v554, %v551
        %v588 = vpack.c.b16 %v555, %v552
        %v589 = vpack.c.b16 %v556, %v553
        %v590 = vpack.c.b16 %v560, %v557
        %v591 = vpack.c.b16 %v561, %v558
        %v592 = vpack.c.b16 %v562, %v559
        %v593 = vpack.c.b16 %v566, %v563
        %v594 = vpack.c.b16 %v567, %v564
        %v595 = vpack.c.b16 %v568, %v565
        %v596 = vpack.c.b16 %v572, %v569
        %v597 = vpack.c.b16 %v573, %v570
        %v598 = vpack.c.b16 %v574, %v571
        %623 = vmatprep.subr.bf16.mxu0 %v576
        %624 = vmatpush1.bf16.msra.mxu0 %v575
        %625 = vmatprep.subr.bf16.mxu0 %v579
        %626 = vmatpush1.bf16.msra.mxu0 %v578
        %627 = vmatprep.subr.bf16.mxu0 %v582
        %628 = vmatpush1.bf16.msra.mxu0 %v581
        %629 = vmatprep.subr.bf16.mxu0 %v585
        %630 = vmatpush1.bf16.msra.mxu0 %v584
        %631 = vmatprep.subr.bf16.mxu0 %v588
        %632 = vmatpush1.bf16.msra.mxu0 %v587
        %633 = vmatprep.subr.bf16.mxu0 %v591
        %634 = vmatpush1.bf16.msra.mxu0 %v590
        %635 = vmatprep.subr.bf16.mxu0 %v594
        %636 = vmatpush1.bf16.msra.mxu0 %v593
        %637 = vmatprep.subr.bf16.mxu0 %v597
        %638 = vmatpush1.bf16.msra.mxu0 %v596
        %639 = vmatprep.subr.bf16.mxu0 0
        %640 = vmatpush1.bf16.msra.mxu0 0
        %641 = vmatprep.subr.bf16.mxu0 0
        %642 = vmatpush1.bf16.msra.mxu0 0
        %643 = vmatprep.subr.bf16.mxu0 0
        %644 = vmatpush1.bf16.msra.mxu0 0
        %645 = vmatprep.subr.bf16.mxu0 0
        %646 = vmatpush1.bf16.msra.mxu0 0
        %647 = vmatprep.subr.bf16.mxu0 0
        %648 = vmatpush1.bf16.msra.mxu0 0
        %649 = vmatprep.subr.bf16.mxu0 0
        %650 = vmatpush1.bf16.msra.mxu0 0
        %651 = vmatprep.subr.bf16.mxu0 0
        %652 = vmatpush1.bf16.msra.mxu0 0
        %653 = vmatprep.subr.bf16.mxu0 0
        %654 = vmatpush1.bf16.msra.mxu0 0
        %655 = vmatprep.mubr.bf16.mxu0 0
        %656 = vmatmul.mubr.bf16.gmra.mrb[0].mxu0 %v493
        %v657 = vpop.f32.mrb[0].mxu0
        %v658 = vadd.f32 %v477, %v657
        %v659 = vpop.f32.mrb[0].mxu0
        %v660 = vadd.f32 %v481, %v659
        %v661 = vpop.f32.mrb[0].mxu0
        %v662 = vadd.f32 %v477, %v661
        %v663 = vpop.f32.mrb[0].mxu0
        %v664 = vadd.f32 %v481, %v663
        %665 = vdwg.mxu0
        %666 = vmatprep.subr.bf16.mxu0 0
        %667 = vmatpush1.bf16.msra.mxu0 %v577
        %668 = vmatprep.subr.bf16.mxu0 0
        %669 = vmatpush1.bf16.msra.mxu0 %v580
        %670 = vmatprep.subr.bf16.mxu0 0
        %671 = vmatpush1.bf16.msra.mxu0 %v583
        %672 = vmatprep.subr.bf16.mxu0 0
        %673 = vmatpush1.bf16.msra.mxu0 %v586
        %674 = vmatprep.subr.bf16.mxu0 0
        %675 = vmatpush1.bf16.msra.mxu0 %v589
        %676 = vmatprep.subr.bf16.mxu0 0
        %677 = vmatpush1.bf16.msra.mxu0 %v592
        %678 = vmatprep.subr.bf16.mxu0 0
        %679 = vmatpush1.bf16.msra.mxu0 %v595
        %680 = vmatprep.subr.bf16.mxu0 0
        %681 = vmatpush1.bf16.msra.mxu0 %v598
        %682 = vmatprep.subr.bf16.mxu0 0
        %683 = vmatpush1.bf16.msra.mxu0 0
        %684 = vmatprep.subr.bf16.mxu0 0
        %685 = vmatpush1.bf16.msra.mxu0 0
        %686 = vmatprep.subr.bf16.mxu0 0
        %687 = vmatpush1.bf16.msra.mxu0 0
        %688 = vmatprep.subr.bf16.mxu0 0
        %689 = vmatpush1.bf16.msra.mxu0 0
        %690 = vmatprep.subr.bf16.mxu0 0
        %691 = vmatpush1.bf16.msra.mxu0 0
        %692 = vmatprep.subr.bf16.mxu0 0
        %693 = vmatpush1.bf16.msra.mxu0 0
        %694 = vmatprep.subr.bf16.mxu0 0
        %695 = vmatpush1.bf16.msra.mxu0 0
        %696 = vmatprep.subr.bf16.mxu0 0
        %697 = vmatpush1.bf16.msra.mxu0 0
        %698 = vmatprep.mubr.bf16.mxu0 0
        %699 = vmatmul.mubr.bf16.gmra.mrb[0].mxu0 %v493
        %v700 = vpop.f32.mrb[0].mxu0
        %v701 = vadd.f32 %v485, %v700
        %v702 = vpop.f32.mrb[0].mxu0
        %v703 = vpop.f32.mrb[0].mxu0
        %v704 = vadd.f32 %v485, %v703
        %v705 = vpop.f32.mrb[0].mxu0
        %706 = vdwg.mxu0
        %v707 = vld [vmem:[%s400] sm:$0x1]
        %v708 = vpack.c.bf16 %v662, %v658
        %v709 = vpack.c.bf16 %v664, %v660
        %v710 = vpack.c.bf16 %v704, %v701
        %v712 = vlaneseq
        %v713 = vshrl.u32 %v712, 7
        %v714 = vsub.s32 0, %v713
        %v715 = vrot.slane %v707, %v714
        %vm717 = vcmask 523264
        %v719 = vsel %vm717, %v708, 0
        %v722 = vsel %vm717, %v709, 0
        %724 = vmatprep.subr.bf16.mxu0 0
        %725 = vmatpush1.bf16.xpose.msra.mxu0 %v722
        %726 = vmatprep.subr.bf16.mxu0 0
        %727 = vmatpush1.bf16.xpose.msra.mxu0 0
        %728 = vmatprep.subr.bf16.mxu0 0
        %729 = vmatpush1.bf16.xpose.msra.mxu0 0
        %730 = vmatprep.subr.bf16.mxu0 0
        %731 = vmatpush1.bf16.xpose.msra.mxu0 0
        %732 = vmatprep.subr.bf16.mxu0 0
        %733 = vmatpush1.bf16.xpose.msra.mxu0 0
        %734 = vmatprep.subr.bf16.mxu0 0
        %735 = vmatpush1.bf16.xpose.msra.mxu0 0
        %736 = vmatprep.subr.bf16.mxu0 0
        %737 = vmatpush1.bf16.xpose.msra.mxu0 0
        %738 = vmatprep.subr.bf16.mxu0 0
        %739 = vmatpush1.bf16.xpose.msra.mxu0 0
        %740 = vmatprep.subr.bf16.mxu0 0
        %741 = vmatpush1.bf16.xpose.msra.mxu0 0
        %742 = vmatprep.subr.bf16.mxu0 0
        %743 = vmatpush1.bf16.xpose.msra.mxu0 0
        %744 = vmatprep.subr.bf16.mxu0 0
        %745 = vmatpush1.bf16.xpose.msra.mxu0 0
        %746 = vmatprep.subr.bf16.mxu0 0
        %747 = vmatpush1.bf16.xpose.msra.mxu0 0
        %748 = vmatprep.subr.bf16.mxu0 0
        %749 = vmatpush1.bf16.xpose.msra.mxu0 0
        %750 = vmatprep.subr.bf16.mxu0 0
        %751 = vmatpush1.bf16.xpose.msra.mxu0 0
        %752 = vmatprep.subr.bf16.mxu0 0
        %753 = vmatpush1.bf16.xpose.msra.mxu0 0
        %754 = vmatprep.subr.bf16.mxu0 0
        %755 = vmatpush1.bf16.xpose.msra.mxu0 0
        %756 = vmatprep.mubr.bf16.mxu0 0
        %757 = vmatmul.mubr.bf16.gmra.mrb[0].mxu0 %v719
        %v758 = vpop.f32.mrb[0].mxu0
        %v759 = vadd.f32 %v715, %v758
        %v760 = vpop.f32.mrb[0].mxu0
        %v761 = vpop.f32.mrb[0].mxu0
        %v762 = vadd.f32 %v715, %v761
        %v763 = vpop.f32.mrb[0].mxu0
        %764 = vdwg.mxu0
        %vm765 = vcmask 130048
        %v766 = vsel %vm765, %v759, -inf
        %767 = vmax.xlane.f32.xlu0 %v766
        %v768 = vpop.xlane.xlu0 %767
        %v769 = vsel %vm765, %v762, -inf
        %770 = vmax.xlane.f32.xlu0 %v769
        %v771 = vpop.xlane.xlu0 %770
        %v772 = vsub.f32 %v759, %v768
        %v773 = vsub.f32 %v762, %v771
        %v774 = vmul.f32 %v772, 1.442695
        %v775 = vpow.pop %v774
        %v776 = vmul.f32 %v773, 1.442695
        %v777 = vpow.pop %v776
        %v778 = vsel %vm765, %v775, 0.0
        %779 = vadd.xlane.f32.xlu0 %v778
        %v780 = vpop.xlane.xlu0 %779
        %v781 = vsel %vm765, %v777, 0.0
        %782 = vadd.xlane.f32.xlu0 %v781
        %v783 = vpop.xlane.xlu0 %782
        %v784 = vrcp.pop %v780
        %v785 = vrcp.pop %v783
        %v786 = vmul.f32 %v775, %v784
        %v787 = vmul.f32 %v777, %v785
        %v788 = vpack.c.bf16 %v787, %v786
        %v790 = vsel %vm765, %v788, 0
        %792 = vmatprep.subr.bf16.mxu0 0
        %793 = vmatpush1.bf16.msra.mxu0 %v710
        %794 = vmatprep.subr.bf16.mxu0 0
        %795 = vmatpush1.bf16.msra.mxu0 0
        %796 = vmatprep.subr.bf16.mxu0 0
        %797 = vmatpush1.bf16.msra.mxu0 0
        %798 = vmatprep.subr.bf16.mxu0 0
        %799 = vmatpush1.bf16.msra.mxu0 0
        %800 = vmatprep.subr.bf16.mxu0 0
        %801 = vmatpush1.bf16.msra.mxu0 0
        %802 = vmatprep.subr.bf16.mxu0 0
        %803 = vmatpush1.bf16.msra.mxu0 0
        %804 = vmatprep.subr.bf16.mxu0 0
        %805 = vmatpush1.bf16.msra.mxu0 0
        %806 = vmatprep.subr.bf16.mxu0 0
        %807 = vmatpush1.bf16.msra.mxu0 0
        %808 = vmatprep.subr.bf16.mxu0 0
        %809 = vmatpush1.bf16.msra.mxu0 0
        %810 = vmatprep.subr.bf16.mxu0 0
        %811 = vmatpush1.bf16.msra.mxu0 0
        %812 = vmatprep.subr.bf16.mxu0 0
        %813 = vmatpush1.bf16.msra.mxu0 0
        %814 = vmatprep.subr.bf16.mxu0 0
        %815 = vmatpush1.bf16.msra.mxu0 0
        %816 = vmatprep.subr.bf16.mxu0 0
        %817 = vmatpush1.bf16.msra.mxu0 0
        %818 = vmatprep.subr.bf16.mxu0 0
        %819 = vmatpush1.bf16.msra.mxu0 0
        %820 = vmatprep.subr.bf16.mxu0 0
        %821 = vmatpush1.bf16.msra.mxu0 0
        %822 = vmatprep.subr.bf16.mxu0 0
        %823 = vmatpush1.bf16.msra.mxu0 0
        %824 = vmatprep.mubr.bf16.mxu0 0
        %825 = vmatmul.mubr.bf16.gmra.mrb[0].mxu0 %v790
        %v826 = vpop.f32.mrb[0].mxu0
        %v827 = vadd.f32 0.0, %v826
        %v828 = vpop.f32.mrb[0].mxu0
        %v829 = vpop.f32.mrb[0].mxu0
        %v830 = vadd.f32 0.0, %v829
        %v831 = vpop.f32.mrb[0].mxu0
        %832 = vdwg.mxu0
        %833 = vst.msk [vmem:[#allocation2] sm:$0xff] %vm717, %v827
        %834 = vst.msk [vmem:[#allocation2 + $0x8] sm:$0xff] %vm717, %v830
        %836 = vrot.lane.b32.xlu0 %v708, 64
        %v837 = vpop.permute.xlu0 %836
        %839 = vrot.lane.b32.xlu0 %v709, 64
        %v840 = vpop.permute.xlu0 %839
        %v842 = vsel %vm717, %v837, 0
        %v845 = vsel %vm717, %v840, 0
        %847 = vmatprep.subr.bf16.mxu0 0
        %848 = vmatpush1.bf16.xpose.msra.mxu0 %v845
        %849 = vmatprep.subr.bf16.mxu0 0
        %850 = vmatpush1.bf16.xpose.msra.mxu0 0
        %851 = vmatprep.subr.bf16.mxu0 0
        %852 = vmatpush1.bf16.xpose.msra.mxu0 0
        %853 = vmatprep.subr.bf16.mxu0 0
        %854 = vmatpush1.bf16.xpose.msra.mxu0 0
        %855 = vmatprep.subr.bf16.mxu0 0
        %856 = vmatpush1.bf16.xpose.msra.mxu0 0
        %857 = vmatprep.subr.bf16.mxu0 0
        %858 = vmatpush1.bf16.xpose.msra.mxu0 0
        %859 = vmatprep.subr.bf16.mxu0 0
        %860 = vmatpush1.bf16.xpose.msra.mxu0 0
        %861 = vmatprep.subr.bf16.mxu0 0
        %862 = vmatpush1.bf16.xpose.msra.mxu0 0
        %863 = vmatprep.subr.bf16.mxu0 0
        %864 = vmatpush1.bf16.xpose.msra.mxu0 0
        %865 = vmatprep.subr.bf16.mxu0 0
        %866 = vmatpush1.bf16.xpose.msra.mxu0 0
        %867 = vmatprep.subr.bf16.mxu0 0
        %868 = vmatpush1.bf16.xpose.msra.mxu0 0
        %869 = vmatprep.subr.bf16.mxu0 0
        %870 = vmatpush1.bf16.xpose.msra.mxu0 0
        %871 = vmatprep.subr.bf16.mxu0 0
        %872 = vmatpush1.bf16.xpose.msra.mxu0 0
        %873 = vmatprep.subr.bf16.mxu0 0
        %874 = vmatpush1.bf16.xpose.msra.mxu0 0
        %875 = vmatprep.subr.bf16.mxu0 0
        %876 = vmatpush1.bf16.xpose.msra.mxu0 0
        %877 = vmatprep.subr.bf16.mxu0 0
        %878 = vmatpush1.bf16.xpose.msra.mxu0 0
        %879 = vmatprep.mubr.bf16.mxu0 0
        %880 = vmatmul.mubr.bf16.gmra.mrb[0].mxu0 %v842
        %v881 = vpop.f32.mrb[0].mxu0
        %v882 = vadd.f32 %v715, %v881
        %v883 = vpop.f32.mrb[0].mxu0
        %v884 = vpop.f32.mrb[0].mxu0
        %v885 = vadd.f32 %v715, %v884
        %v886 = vpop.f32.mrb[0].mxu0
        %887 = vdwg.mxu0
        %v888 = vsel %vm765, %v882, -inf
        %889 = vmax.xlane.f32.xlu0 %v888
        %v890 = vpop.xlane.xlu0 %889
        %v891 = vsel %vm765, %v885, -inf
        %892 = vmax.xlane.f32.xlu0 %v891
        %v893 = vpop.xlane.xlu0 %892
        %v894 = vsub.f32 %v882, %v890
        %v895 = vsub.f32 %v885, %v893
        %v896 = vmul.f32 %v894, 1.442695
        %v897 = vpow.pop %v896
        %v898 = vmul.f32 %v895, 1.442695
        %v899 = vpow.pop %v898
        %v900 = vsel %vm765, %v897, 0.0
        %901 = vadd.xlane.f32.xlu0 %v900
        %v902 = vpop.xlane.xlu0 %901
        %v903 = vsel %vm765, %v899, 0.0
        %904 = vadd.xlane.f32.xlu0 %v903
        %v905 = vpop.xlane.xlu0 %904
        %v906 = vrcp.pop %v902
        %v907 = vrcp.pop %v905
        %v908 = vmul.f32 %v897, %v906
        %v909 = vmul.f32 %v899, %v907
        %v910 = vpack.c.bf16 %v909, %v908
        %912 = vrot.lane.b32.xlu0 %v710, 64
        %v913 = vpop.permute.xlu0 %912
        %v916 = vsel %vm765, %v910, 0
        %918 = vmatprep.subr.bf16.mxu0 0
        %919 = vmatpush1.bf16.msra.mxu0 %v913
        %920 = vmatprep.subr.bf16.mxu0 0
        %921 = vmatpush1.bf16.msra.mxu0 0
        %922 = vmatprep.subr.bf16.mxu0 0
        %923 = vmatpush1.bf16.msra.mxu0 0
        %924 = vmatprep.subr.bf16.mxu0 0
        %925 = vmatpush1.bf16.msra.mxu0 0
        %926 = vmatprep.subr.bf16.mxu0 0
        %927 = vmatpush1.bf16.msra.mxu0 0
        %928 = vmatprep.subr.bf16.mxu0 0
        %929 = vmatpush1.bf16.msra.mxu0 0
        %930 = vmatprep.subr.bf16.mxu0 0
        %931 = vmatpush1.bf16.msra.mxu0 0
        %932 = vmatprep.subr.bf16.mxu0 0
        %933 = vmatpush1.bf16.msra.mxu0 0
        %934 = vmatprep.subr.bf16.mxu0 0
        %935 = vmatpush1.bf16.msra.mxu0 0
        %936 = vmatprep.subr.bf16.mxu0 0
        %937 = vmatpush1.bf16.msra.mxu0 0
        %938 = vmatprep.subr.bf16.mxu0 0
        %939 = vmatpush1.bf16.msra.mxu0 0
        %940 = vmatprep.subr.bf16.mxu0 0
        %941 = vmatpush1.bf16.msra.mxu0 0
        %942 = vmatprep.subr.bf16.mxu0 0
        %943 = vmatpush1.bf16.msra.mxu0 0
        %944 = vmatprep.subr.bf16.mxu0 0
        %945 = vmatpush1.bf16.msra.mxu0 0
        %946 = vmatprep.subr.bf16.mxu0 0
        %947 = vmatpush1.bf16.msra.mxu0 0
        %948 = vmatprep.subr.bf16.mxu0 0
        %949 = vmatpush1.bf16.msra.mxu0 0
        %950 = vmatprep.mubr.bf16.mxu0 0
        %951 = vmatmul.mubr.bf16.gmra.mrb[0].mxu0 %v916
        %v952 = vpop.f32.mrb[0].mxu0
        %v953 = vadd.f32 0.0, %v952
        %v954 = vpop.f32.mrb[0].mxu0
        %v955 = vpop.f32.mrb[0].mxu0
        %v956 = vadd.f32 0.0, %v955
        %v957 = vpop.f32.mrb[0].mxu0
        %958 = vdwg.mxu0
        %961 = vrot.lane.b32.xlu0 %v953, 64
        %v962 = vpop.permute.xlu0 %961
        %963 = vrot.lane.b32.xlu0 %v956, 64
        %v964 = vpop.permute.xlu0 %963
        %vm967 = vcmask 1048064
        %968 = vst.msk [vmem:[#allocation2] sm:$0xff] %vm967, %v962
        %969 = vst.msk [vmem:[#allocation2 + $0x8] sm:$0xff] %vm967, %v964
        %v970 = vld [vmem:[#allocation2] sm:$0xff]
        %v971 = vld [vmem:[#allocation2 + $0x8] sm:$0xff]
        %v972 = vpack.c.bf16 %v971, %v970
        %v973 = vld [vmem:[#allocation9] sm:$0xf]
        %v974 = vld [vmem:[#allocation9 + $0x4] sm:$0xf]
        %v975 = vld [vmem:[#allocation9 + $0x8] sm:$0xf]
        %v976 = vld [vmem:[#allocation9 + $0xc] sm:$0xf]
        %v977 = vld [vmem:[#allocation9 + $0x10] sm:$0xf]
        %v978 = vld [vmem:[#allocation9 + $0x14] sm:$0xf]
        %v979 = vld [vmem:[#allocation9 + $0x18] sm:$0xf]
        %v980 = vld [vmem:[#allocation9 + $0x1c] sm:$0xf]
        %v981 = vld [vmem:[#allocation9 + $0x20] sm:$0xf]
        %v982 = vld [vmem:[#allocation9 + $0x24] sm:$0xf]
        %v983 = vld [vmem:[#allocation9 + $0x28] sm:$0xf]
        %v984 = vld [vmem:[#allocation9 + $0x2c] sm:$0xf]
        %v985 = vld [vmem:[#allocation9 + $0x30] sm:$0xf]
        %v986 = vld [vmem:[#allocation9 + $0x34] sm:$0xf]
        %v987 = vld [vmem:[#allocation9 + $0x38] sm:$0xf]
        %v988 = vld [vmem:[#allocation9 + $0x3c] sm:$0xf]
        %v989 = vld [vmem:[#allocation11] sm:$0x1]
        %v991 = vlaneseq
        %v992 = vshrl.u32 %v991, 7
        %v993 = vsub.s32 0, %v992
        %v994 = vrot.slane %v989, %v993
        %v1012 = vunpack.c.l.b16 %v973
        %v1013 = vunpack.c.l.b16 %v974
        %v1014 = vunpack.c.l.b16 %v975
        %v1015 = vunpack.c.l.b16 %v976
        %v1016 = vunpack.c.l.b16 %v977
        %v1017 = vunpack.c.l.b16 %v978
        %v1018 = vunpack.c.l.b16 %v979
        %v1019 = vunpack.c.l.b16 %v980
        %v1020 = vunpack.c.l.b16 %v981
        %v1021 = vunpack.c.l.b16 %v982
        %v1022 = vunpack.c.l.b16 %v983
        %v1023 = vunpack.c.l.b16 %v984
        %v1024 = vunpack.c.l.b16 %v985
        %v1025 = vunpack.c.l.b16 %v986
        %v1026 = vunpack.c.l.b16 %v987
        %v1027 = vunpack.c.l.b16 %v988
        %v1028 = vpack.c.b16 %v1013, %v1012
        %v1029 = vpack.c.b16 %v1015, %v1014
        %v1030 = vpack.c.b16 %v1017, %v1016
        %v1031 = vpack.c.b16 %v1019, %v1018
        %v1032 = vpack.c.b16 %v1021, %v1020
        %v1033 = vpack.c.b16 %v1023, %v1022
        %v1034 = vpack.c.b16 %v1025, %v1024
        %v1035 = vpack.c.b16 %v1027, %v1026
        %1044 = vmatprep.subr.bf16.mxu0 0
        %1045 = vmatpush1.bf16.msra.mxu0 %v1028
        %1046 = vmatprep.subr.bf16.mxu0 0
        %1047 = vmatpush1.bf16.msra.mxu0 %v1029
        %1048 = vmatprep.subr.bf16.mxu0 0
        %1049 = vmatpush1.bf16.msra.mxu0 %v1030
        %1050 = vmatprep.subr.bf16.mxu0 0
        %1051 = vmatpush1.bf16.msra.mxu0 %v1031
        %1052 = vmatprep.subr.bf16.mxu0 0
        %1053 = vmatpush1.bf16.msra.mxu0 %v1032
        %1054 = vmatprep.subr.bf16.mxu0 0
        %1055 = vmatpush1.bf16.msra.mxu0 %v1033
        %1056 = vmatprep.subr.bf16.mxu0 0
        %1057 = vmatpush1.bf16.msra.mxu0 %v1034
        %1058 = vmatprep.subr.bf16.mxu0 0
        %1059 = vmatpush1.bf16.msra.mxu0 %v1035
        %1060 = vmatprep.subr.bf16.mxu0 0
        %1061 = vmatpush1.bf16.msra.mxu0 0
        %1062 = vmatprep.subr.bf16.mxu0 0
        %1063 = vmatpush1.bf16.msra.mxu0 0
        %1064 = vmatprep.subr.bf16.mxu0 0
        %1065 = vmatpush1.bf16.msra.mxu0 0
        %1066 = vmatprep.subr.bf16.mxu0 0
        %1067 = vmatpush1.bf16.msra.mxu0 0
        %1068 = vmatprep.subr.bf16.mxu0 0
        %1069 = vmatpush1.bf16.msra.mxu0 0
        %1070 = vmatprep.subr.bf16.mxu0 0
        %1071 = vmatpush1.bf16.msra.mxu0 0
        %1072 = vmatprep.subr.bf16.mxu0 0
        %1073 = vmatpush1.bf16.msra.mxu0 0
        %1074 = vmatprep.subr.bf16.mxu0 0
        %1075 = vmatpush1.bf16.msra.mxu0 0
        %1076 = vmatprep.mubr.bf16.mxu0 0
        %1077 = vmatmul.mubr.bf16.gmra.mrb[0].mxu0 %v972
        %v1078 = vpop.f32.mrb[0].mxu0
        %v1079 = vadd.f32 %v994, %v1078
        %v1080 = vpop.f32.mrb[0].mxu0
        %v1081 = vpop.f32.mrb[0].mxu0
        %v1082 = vadd.f32 %v994, %v1081
        %v1083 = vpop.f32.mrb[0].mxu0
        %1084 = vdwg.mxu0
        %v1085 = vunpack.c.l.bf16 %v438
        %v1086 = vunpack.c.l.bf16 %v439
        %v1087 = vadd.f32 %v1085, %v1079
        %v1088 = vadd.f32 %v1086, %v1082
        %v1089 = vld [vmem:[#allocation12] sm:$0x1]
        %v1090 = vld [vmem:[#allocation14] sm:$0x1]
        %1091 = vadd.xlane.f32.xlu0 %v1087
        %v1092 = vpop.xlane.xlu0 %1091
        %1093 = vadd.xlane.f32.xlu0 %v1088
        %v1094 = vpop.xlane.xlu0 %1093
        %v1095 = vrcp.pop 128.0
        %v1096 = vmul.f32 %v1092, %v1095
        %v1097 = vmul.f32 %v1094, %v1095
        %v1098 = vsub.f32 %v1087, %v1096
        %v1099 = vsub.f32 %v1088, %v1097
        %v1100 = vmul.f32 %v1098, %v1098
        %v1101 = vmul.f32 %v1099, %v1099
        %1102 = vadd.xlane.f32.xlu0 %v1100
        %v1103 = vpop.xlane.xlu0 %1102
        %1104 = vadd.xlane.f32.xlu0 %v1101
        %v1105 = vpop.xlane.xlu0 %1104
        %v1106 = vmul.f32 %v1103, %v1095
        %v1107 = vmul.f32 %v1105, %v1095
        %v1108 = vadd.f32 %v1106, 1e-12
        %v1109 = vadd.f32 %v1107, 1e-12
        %v1110 = vrsqrt.pop %v1108
        %v1111 = vrsqrt.pop %v1109
        %v1112 = vmul.f32 %v1098, %v1110
        %v1113 = vmul.f32 %v1099, %v1111
        %v1115 = vlaneseq
        %v1116 = vshrl.u32 %v1115, 7
        %v1117 = vsub.s32 0, %v1116
        %v1118 = vrot.slane %v1089, %v1117
        %v1120 = vmul.f32 %v1112, %v1118
        %v1121 = vmul.f32 %v1113, %v1118
        %v1123 = vlaneseq
        %v1124 = vshrl.u32 %v1123, 7
        %v1125 = vsub.s32 0, %v1124
        %v1126 = vrot.slane %v1090, %v1125
        %v1128 = vadd.f32 %v1120, %v1126
        %v1129 = vadd.f32 %v1121, %v1126
        %v1130 = vpack.c.bf16 %v1129, %v1128
        %v1132 = vunpack.c.l.b16 %v1130
        %v1133 = vunpack.c.h.b16 %v1130
        %v1134 = vpack.c.b16 %v1132, %v1132
        %v1135 = vpack.c.b16 %v1133, %v1133
        %1138 = vst [vmem:[%s436] sm:$0xf] %v1134
        %1139 = vst [vmem:[%s436 + $0x4] sm:$0xf] %v1135
        %s1140 = sand.u32 %s217, 1
        %s1141 = scalar_lea.sflag [#allocation5], %s1140
        %s1142 = sand.u32 %s217, 1
        %s1143 = smul.addr %s1142, 8
        %s1144 = scalar_lea.vmem [#allocation17], %s1143
        // Predicated region
        $region85: #{global_pointer_for_rel_forward.8} parent=51 // pred_check
          %p1145 = pneg %p227
        $region86: #{global_pointer_for_rel_forward.8} parent=51 // pred_check_branch
          %1147 = sbr.rel (%p1145) target = $region88
        $region87: #{global_pointer_for_rel_forward.8} parent=51 // pred_region
          %s1149 = ssub.s32 128, 128
          %1150 = vsyncadd %s1141, %s1149
          %s1151 = smul.addr %s31, 2
          %s1152 = smul.addr %s1151, 64
          %s1153 = scalar_lea.hbm %s8, %s1152
          %s1154 = sshll.u32 %s1144, 4
          %s1155 = int_to_ptr.vmem [resolvable:$true] %s1154
          %1160 = dma.vmem_to_hbm [thread:$0]  %s1155, 128, %s1153, %s1141, 64, 64, 4
        $region88: #{global_pointer_for_rel_forward.8} parent=51 // pred_fallthru
          _
      $region52: #{global_pointer_for_rel_forward.8} parent=5 // pred_fallthru
        _
      %p1161 = scmp.le.s32.totalorder 2, %s26
      // Predicated region
      $region89: #{global_pointer_for_rel_forward.8} parent=5 // pred_check
        %p1162 = pneg %p1161
      $region90: #{global_pointer_for_rel_forward.8} parent=5 // pred_check_branch
        %1164 = sbr.rel (%p1162) target = $region92
      $region91: #{global_pointer_for_rel_forward.8} parent=5 // pred_region
        %s1165 = ssub.s32 %s26, 2
        // Predicated region
        $region93: #{global_pointer_for_rel_forward.8} parent=91 // pred_check
          %p1166 = pneg %p233
        $region94: #{global_pointer_for_rel_forward.8} parent=91 // pred_check_branch
          %1168 = sbr.rel (%p1166) target = $region96
        $region95: #{global_pointer_for_rel_forward.8} parent=91 // pred_region
          %s1169 = sand.u32 %s218, 1
          %s1170 = scalar_lea.sflag [#allocation5], %s1169
          %s1171 = sand.u32 %s218, 1
          %s1172 = smul.addr %s1171, 8
          %s1173 = scalar_lea.vmem [#allocation17], %s1172
          %1174 = dma.done %s1170, 128
        $region96: #{global_pointer_for_rel_forward.8} parent=91 // pred_fallthru
          _
      $region92: #{global_pointer_for_rel_forward.8} parent=5 // pred_fallthru
        _
    $region6: #{global_pointer_for_rel_forward.8} parent=1 // loop_footer
      %s30 = sadd.s32 1, %s26
    $region7: #{global_pointer_for_rel_forward.8} parent=1 // loop_footer_branch
      %25 = sbr.rel target = $region3
    $region8: #{global_pointer_for_rel_forward.8} parent=1 // loop_exit
      _
    %1175 = vsyncpa [#allocation4], 1
    %s1176 = scalar_lea.sflag [#allocation4], 1
    %1177 = vsyncpa %s1176, 1
    %1178 = vsyncpa [#allocation7], 1
    %1179 = vsyncpa [#allocation10], 1
    %1180 = vsyncpa [#allocation13], 1
    %1181 = vsyncpa [#allocation16], 1
    %s1182 = scalar_lea.sflag [#allocation16], 1
    %1183 = vsyncpa %s1182, 1
    %1184 = vsyncpa [#allocation5], 1
    %s1185 = scalar_lea.sflag [#allocation5], 1
    %1186 = vsyncpa %s1185, 1

// kernel: global_pointer_for_rel_forward.9
$region0: #{global_pointer_for_rel_forward.9}
  #allocation0 [shape = 'u32[]', space=smem, size = 0x4, offset = 0x4, fixed_abs, tag = 'smem constant byte address 0x4 - core index']
  #allocation1 [shape = 'u32[144,128]{1,0:T(1,128)}', space=vmem, size = 0x12000, scoped, tag = 'internal scratch']
  %s0 = inlined_call_operand.hbm [shape: bf16[2,16,128], index: 0, kind: input, shape index: {}]
  %s1 = inlined_call_operand.hbm [shape: bf16[128,512], index: 1, kind: input, shape index: {}]
  %s2 = inlined_call_operand.hbm [shape: f32[1,512], index: 2, kind: input, shape index: {}]
  %s3 = inlined_call_operand.hbm [shape: bf16[512,128], index: 3, kind: input, shape index: {}]
  %s4 = inlined_call_operand.hbm [shape: f32[1,128], index: 4, kind: input, shape index: {}]
  %s5 = inlined_call_operand.hbm [shape: f32[1,128], index: 5, kind: input, shape index: {}]
  %s6 = inlined_call_operand.hbm [shape: f32[1,128], index: 6, kind: input, shape index: {}]
  %s7 = inlined_call_operand.hbm [shape: bf16[2,16,128], index: 7, kind: output, shape index: {}]
  %s8 = sld [smem:[#allocation0]]
  $region89: #{global_pointer_for_rel_forward.9} parent=0
    _
  %s10 = ssub.s32 1, %s8
  %s11 = scalar_select 0, %s10, %s8
  $region1: #{global_pointer_for_rel_forward.9} parent=0
    #allocation2 [shape = 'u8[8192]{0}', space=vmem, size = 0x2000, scoped, tag = 'input window, operand 0']
    #allocation3 [shape = 's32[2]{0}', space=sflag, size = 0x8, scoped, tag = 'scoped memory for global_pointer_for_rel_forward.9']
    #allocation4 [shape = 's32[2]{0}', space=sflag, size = 0x8, scoped, tag = 'scoped memory for global_pointer_for_rel_forward.9']
    #allocation5 [shape = 'u8[131072]{0}', space=vmem, size = 0x20000, scoped, tag = 'input window, operand 1, single buffered']
    #allocation6 [shape = 's32[1]{0}', space=sflag, size = 0x4, scoped, tag = 'scoped memory for global_pointer_for_rel_forward.9']
    #allocation7 [shape = 'u8[2048]{0}', space=vmem, size = 0x800, scoped, tag = 'input window, operand 2, single buffered']
    #allocation8 [shape = 'u8[131072]{0}', space=vmem, size = 0x20000, scoped, tag = 'input window, operand 3, single buffered']
    #allocation9 [shape = 's32[1]{0}', space=sflag, size = 0x4, scoped, tag = 'scoped memory for global_pointer_for_rel_forward.9']
    #allocation10 [shape = 'u8[512]{0}', space=vmem, size = 0x400, scoped, tag = 'input window, operand 4, single buffered']
    #allocation11 [shape = 'u8[512]{0}', space=vmem, size = 0x400, scoped, tag = 'input window, operand 5, single buffered']
    #allocation12 [shape = 's32[1]{0}', space=sflag, size = 0x4, scoped, tag = 'scoped memory for global_pointer_for_rel_forward.9']
    #allocation13 [shape = 'u8[512]{0}', space=vmem, size = 0x400, scoped, tag = 'input window, operand 6, single buffered']
    #allocation14 [shape = 'u8[8192]{0}', space=vmem, size = 0x2000, scoped, tag = 'output window, operand 0']
    %12 = vsyncpa [#allocation3], 0
    %s13 = scalar_lea.sflag [#allocation3], 1
    %14 = vsyncpa %s13, 0
    %15 = vsyncpa [#allocation6], 0
    %16 = vsyncpa [#allocation9], 0
    %17 = vsyncpa [#allocation12], 0
    %18 = vsyncpa [#allocation4], 0
    %s19 = scalar_lea.sflag [#allocation4], 1
    %20 = vsyncpa %s19, 0
    loop: start=0, step=1, limit=4
    $region2: #{global_pointer_for_rel_forward.9} parent=1 // loop_pre_header
      _
    $region3: #{global_pointer_for_rel_forward.9} parent=1 // loop_header
      %s22 = sphi 0, %s26
      %p23 = scmp.ge.s32.totalorder %s22, 4
      %s29 = sphi 0, %s41
      %s30 = sphi 0, %s37
      %s31 = sphi 0, %s29
      %s32 = sphi 0, %s30
      %s33 = sphi 0, %s31
      %s34 = sphi 0, %s32
      %s46 = sphi 0, %s48
      %s49 = sphi 0, %s46
      %s50 = sphi 0, %s49
      %s66 = sphi 0, %s50
      %s70 = sphi 0, %s70
      %s72 = sphi 0, %s70
      %s73 = sphi 0, %s72
      %s87 = sphi 0, %s73
      %s91 = sphi 0, %s91
      %s93 = sphi 0, %s91
      %s94 = sphi 0, %s93
      %s108 = sphi 0, %s94
      %s112 = sphi 0, %s112
      %s114 = sphi 0, %s112
      %s115 = sphi 0, %s114
      %s129 = sphi 0, %s115
      %s133 = sphi 0, %s133
      %s135 = sphi 0, %s133
      %s136 = sphi 0, %s135
      %s150 = sphi 0, %s136
      %s154 = sphi 0, %s154
      %s156 = sphi 0, %s154
      %s157 = sphi 0, %s156
      %s171 = sphi 0, %s157
      %s175 = sphi 0, %s175
      %s177 = sphi 0, %s175
      %s178 = sphi 0, %s177
      %s192 = sphi 0, %s178
      %s200 = sphi 0, %s202
      %s203 = sphi 0, %s200
      %s204 = sphi 0, %s203
      %s220 = sphi 0, %s204
    $region4: #{global_pointer_for_rel_forward.9} parent=1 // loop_header_branch
      %25 = sbr.rel (%p23) target = $region8
    $region5: #{global_pointer_for_rel_forward.9} parent=1 // loop_body
      %s27 = ssub.s32 %s22, 1
      %s28 = ssub.s32 %s22, 2
      %s35 = sadd.s32 1, %s30
      %p36 = scmp.ge.s32.totalorder %s35, 1
      %s37 = scalar_select %p36, 0, %s35
      %s38 = sadd.s32 1, %s29
      %s39 = scalar_select %p36, %s38, %s29
      %p40 = scmp.ge.s32.totalorder %s39, 2
      %s41 = scalar_select %p40, 0, %s39
      %s42 = ssub.s32 %s29, %s41
      %s43 = ssub.s32 %s30, %s37
      %s44 = sor.u32 %s42, %s43
      %p45 = scmp.eq.s32.totalorder %s44, 0
      %s47 = sadd.s32 %s46, 1
      %s48 = scalar_select %p45, %s46, %s47
      %p51 = pneg %p45
      %p52 = scmp.eq.s32.totalorder %s22, 1
      %p53 = por %p51, %p52
      %p54 = scmp.ne.s32.totalorder %s46, %s49
      %p55 = scmp.eq.s32.totalorder %s22, 0
      %p56 = por %p54, %p55
      %p57 = scmp.ne.s32.totalorder %s46, %s49
      %p58 = scmp.eq.s32.totalorder %s27, 1
      %p59 = por %p57, %p58
      %p60 = scmp.ne.s32.totalorder %s49, %s50
      %p61 = scmp.eq.s32.totalorder %s27, 0
      %p62 = por %p60, %p61
      %p63 = scmp.ne.s32.totalorder %s49, %s50
      %p64 = scmp.eq.s32.totalorder %s28, 1
      %p65 = por %p63, %p64
      %p67 = scmp.ne.s32.totalorder %s50, %s66
      %p68 = scmp.eq.s32.totalorder %s28, 0
      %p69 = por %p67, %p68
      %s71 = sadd.s32 %s70, 1
      %p74 = scmp.eq.s32.totalorder %s22, 1
      %p75 = scmp.ne.s32.totalorder %s70, %s72
      %p76 = scmp.eq.s32.totalorder %s22, 0
      %p77 = por %p75, %p76
      %p78 = scmp.ne.s32.totalorder %s70, %s72
      %p79 = scmp.eq.s32.totalorder %s27, 1
      %p80 = por %p78, %p79
      %p81 = scmp.ne.s32.totalorder %s72, %s73
      %p82 = scmp.eq.s32.totalorder %s27, 0
      %p83 = por %p81, %p82
      %p84 = scmp.ne.s32.totalorder %s72, %s73
      %p85 = scmp.eq.s32.totalorder %s28, 1
      %p86 = por %p84, %p85
      %p88 = scmp.ne.s32.totalorder %s73, %s87
      %p89 = scmp.eq.s32.totalorder %s28, 0
      %p90 = por %p88, %p89
      %s92 = sadd.s32 %s91, 1
      %p95 = scmp.eq.s32.totalorder %s22, 1
      %p96 = scmp.ne.s32.totalorder %s91, %s93
      %p97 = scmp.eq.s32.totalorder %s22, 0
      %p98 = por %p96, %p97
      %p99 = scmp.ne.s32.totalorder %s91, %s93
      %p100 = scmp.eq.s32.totalorder %s27, 1
      %p101 = por %p99, %p100
      %p102 = scmp.ne.s32.totalorder %s93, %s94
      %p103 = scmp.eq.s32.totalorder %s27, 0
      %p104 = por %p102, %p103
      %p105 = scmp.ne.s32.totalorder %s93, %s94
      %p106 = scmp.eq.s32.totalorder %s28, 1
      %p107 = por %p105, %p106
      %p109 = scmp.ne.s32.totalorder %s94, %s108
      %p110 = scmp.eq.s32.totalorder %s28, 0
      %p111 = por %p109, %p110
      %s113 = sadd.s32 %s112, 1
      %p116 = scmp.eq.s32.totalorder %s22, 1
      %p117 = scmp.ne.s32.totalorder %s112, %s114
      %p118 = scmp.eq.s32.totalorder %s22, 0
      %p119 = por %p117, %p118
      %p120 = scmp.ne.s32.totalorder %s112, %s114
      %p121 = scmp.eq.s32.totalorder %s27, 1
      %p122 = por %p120, %p121
      %p123 = scmp.ne.s32.totalorder %s114, %s115
      %p124 = scmp.eq.s32.totalorder %s27, 0
      %p125 = por %p123, %p124
      %p126 = scmp.ne.s32.totalorder %s114, %s115
      %p127 = scmp.eq.s32.totalorder %s28, 1
      %p128 = por %p126, %p127
      %p130 = scmp.ne.s32.totalorder %s115, %s129
      %p131 = scmp.eq.s32.totalorder %s28, 0
      %p132 = por %p130, %p131
      %s134 = sadd.s32 %s133, 1
      %p137 = scmp.eq.s32.totalorder %s22, 1
      %p138 = scmp.ne.s32.totalorder %s133, %s135
      %p139 = scmp.eq.s32.totalorder %s22, 0
      %p140 = por %p138, %p139
      %p141 = scmp.ne.s32.totalorder %s133, %s135
      %p142 = scmp.eq.s32.totalorder %s27, 1
      %p143 = por %p141, %p142
      %p144 = scmp.ne.s32.totalorder %s135, %s136
      %p145 = scmp.eq.s32.totalorder %s27, 0
      %p146 = por %p144, %p145
      %p147 = scmp.ne.s32.totalorder %s135, %s136
      %p148 = scmp.eq.s32.totalorder %s28, 1
      %p149 = por %p147, %p148
      %p151 = scmp.ne.s32.totalorder %s136, %s150
      %p152 = scmp.eq.s32.totalorder %s28, 0
      %p153 = por %p151, %p152
      %s155 = sadd.s32 %s154, 1
      %p158 = scmp.eq.s32.totalorder %s22, 1
      %p159 = scmp.ne.s32.totalorder %s154, %s156
      %p160 = scmp.eq.s32.totalorder %s22, 0
      %p161 = por %p159, %p160
      %p162 = scmp.ne.s32.totalorder %s154, %s156
      %p163 = scmp.eq.s32.totalorder %s27, 1
      %p164 = por %p162, %p163
      %p165 = scmp.ne.s32.totalorder %s156, %s157
      %p166 = scmp.eq.s32.totalorder %s27, 0
      %p167 = por %p165, %p166
      %p168 = scmp.ne.s32.totalorder %s156, %s157
      %p169 = scmp.eq.s32.totalorder %s28, 1
      %p170 = por %p168, %p169
      %p172 = scmp.ne.s32.totalorder %s157, %s171
      %p173 = scmp.eq.s32.totalorder %s28, 0
      %p174 = por %p172, %p173
      %s176 = sadd.s32 %s175, 1
      %p179 = scmp.eq.s32.totalorder %s22, 1
      %p180 = scmp.ne.s32.totalorder %s175, %s177
      %p181 = scmp.eq.s32.totalorder %s22, 0
      %p182 = por %p180, %p181
      %p183 = scmp.ne.s32.totalorder %s175, %s177
      %p184 = scmp.eq.s32.totalorder %s27, 1
      %p185 = por %p183, %p184
      %p186 = scmp.ne.s32.totalorder %s177, %s178
      %p187 = scmp.eq.s32.totalorder %s27, 0
      %p188 = por %p186, %p187
      %p189 = scmp.ne.s32.totalorder %s177, %s178
      %p190 = scmp.eq.s32.totalorder %s28, 1
      %p191 = por %p189, %p190
      %p193 = scmp.ne.s32.totalorder %s178, %s192
      %p194 = scmp.eq.s32.totalorder %s28, 0
      %p195 = por %p193, %p194
      %s196 = ssub.s32 %s29, %s41
      %s197 = ssub.s32 %s30, %s37
      %s198 = sor.u32 %s196, %s197
      %p199 = scmp.eq.s32.totalorder %s198, 0
      %s201 = sadd.s32 %s200, 1
      %s202 = scalar_select %p199, %s200, %s201
      %p205 = pneg %p199
      %p206 = scmp.eq.s32.totalorder %s22, 1
      %p207 = por %p205, %p206
      %p208 = scmp.ne.s32.totalorder %s200, %s203
      %p209 = scmp.eq.s32.totalorder %s22, 0
      %p210 = por %p208, %p209
      %p211 = scmp.ne.s32.totalorder %s200, %s203
      %p212 = scmp.eq.s32.totalorder %s27, 1
      %p213 = por %p211, %p212
      %p214 = scmp.ne.s32.totalorder %s203, %s204
      %p215 = scmp.eq.s32.totalorder %s27, 0
      %p216 = por %p214, %p215
      %p217 = scmp.ne.s32.totalorder %s203, %s204
      %p218 = scmp.eq.s32.totalorder %s28, 1
      %p219 = por %p217, %p218
      %p221 = scmp.ne.s32.totalorder %s204, %s220
      %p222 = scmp.eq.s32.totalorder %s28, 0
      %p223 = por %p221, %p222
      %p224 = scmp.le.s32.totalorder 1, %s22
      %p225 = scmp.lt.s32.totalorder %s22, 3
      %p226 = pnand %p224, %p225
      %p227 = pneg %p226
      // Predicated region
      $region9: #{global_pointer_for_rel_forward.9} parent=5 // pred_check
        _
      $region10: #{global_pointer_for_rel_forward.9} parent=5 // pred_check_branch
        %229 = sbr.rel (%p226) target = $region12
      $region11: #{global_pointer_for_rel_forward.9} parent=5 // pred_region
        %s230 = ssub.s32 %s22, 1
        // Predicated region
        $region13: #{global_pointer_for_rel_forward.9} parent=11 // pred_check
          %p231 = pneg %p83
        $region14: #{global_pointer_for_rel_forward.9} parent=11 // pred_check_branch
          %233 = sbr.rel (%p231) target = $region16
        $region15: #{global_pointer_for_rel_forward.9} parent=11 // pred_region
          %s235 = ssub.s32 4096, 4096
          %236 = vsyncadd [#allocation6], %s235
          %s237 = sshll.u32 [#allocation5], 4
          %s238 = int_to_ptr.vmem [resolvable:$true] %s237
          %243 = dma.hbm_to_vmem [thread:$0]  %s1, 4096, %s238, [#allocation6], 256, 256, 16
        $region16: #{global_pointer_for_rel_forward.9} parent=11 // pred_fallthru
          _
        // Predicated region
        $region17: #{global_pointer_for_rel_forward.9} parent=11 // pred_check
          %p244 = pneg %p104
        $region18: #{global_pointer_for_rel_forward.9} parent=11 // pred_check_branch
          %246 = sbr.rel (%p244) target = $region20
        $region19: #{global_pointer_for_rel_forward.9} parent=11 // pred_region
          %s248 = ssub.s32 64, 64
          %249 = vsyncadd [#allocation6], %s248
          %s251 = sshll.u32 [#allocation7], 4
          %s252 = int_to_ptr.vmem [resolvable:$true] %s251
          %254 = dma.hbm_to_vmem [thread:$0]  %s2, 64, %s252, [#allocation6]
        $region20: #{global_pointer_for_rel_forward.9} parent=11 // pred_fallthru
          _
        // Predicated region
        $region21: #{global_pointer_for_rel_forward.9} parent=11 // pred_check
          %p255 = pneg %p125
        $region22: #{global_pointer_for_rel_forward.9} parent=11 // pred_check_branch
          %257 = sbr.rel (%p255) target = $region24
        $region23: #{global_pointer_for_rel_forward.9} parent=11 // pred_region
          %s259 = ssub.s32 4096, 4096
          %260 = vsyncadd [#allocation9], %s259
          %s261 = sshll.u32 [#allocation8], 4
          %s262 = int_to_ptr.vmem [resolvable:$true] %s261
          %267 = dma.hbm_to_vmem [thread:$0]  %s3, 4096, %s262, [#allocation9], 64, 64, 4
        $region24: #{global_pointer_for_rel_forward.9} parent=11 // pred_fallthru
          _
        // Predicated region
        $region25: #{global_pointer_for_rel_forward.9} parent=11 // pred_check
          %p268 = pneg %p146
        $region26: #{global_pointer_for_rel_forward.9} parent=11 // pred_check_branch
          %270 = sbr.rel (%p268) target = $region28
        $region27: #{global_pointer_for_rel_forward.9} parent=11 // pred_region
          %s272 = ssub.s32 16, 16
          %273 = vsyncadd [#allocation9], %s272
          %s275 = sshll.u32 [#allocation10], 4
          %s276 = int_to_ptr.vmem [resolvable:$true] %s275
          %278 = dma.hbm_to_vmem [thread:$0]  %s4, 16, %s276, [#allocation9]
        $region28: #{global_pointer_for_rel_forward.9} parent=11 // pred_fallthru
          _
        // Predicated region
        $region29: #{global_pointer_for_rel_forward.9} parent=11 // pred_check
          %p279 = pneg %p167
        $region30: #{global_pointer_for_rel_forward.9} parent=11 // pred_check_branch
          %281 = sbr.rel (%p279) target = $region32
        $region31: #{global_pointer_for_rel_forward.9} parent=11 // pred_region
          %s283 = ssub.s32 16, 16
          %284 = vsyncadd [#allocation12], %s283
          %s286 = sshll.u32 [#allocation11], 4
          %s287 = int_to_ptr.vmem [resolvable:$true] %s286
          %289 = dma.hbm_to_vmem [thread:$0]  %s5, 16, %s287, [#allocation12]
        $region32: #{global_pointer_for_rel_forward.9} parent=11 // pred_fallthru
          _
        // Predicated region
        $region33: #{global_pointer_for_rel_forward.9} parent=11 // pred_check
          %p290 = pneg %p188
        $region34: #{global_pointer_for_rel_forward.9} parent=11 // pred_check_branch
          %292 = sbr.rel (%p290) target = $region36
        $region35: #{global_pointer_for_rel_forward.9} parent=11 // pred_region
          %s294 = ssub.s32 16, 16
          %295 = vsyncadd [#allocation12], %s294
          %s297 = sshll.u32 [#allocation13], 4
          %s298 = int_to_ptr.vmem [resolvable:$true] %s297
          %300 = dma.hbm_to_vmem [thread:$0]  %s6, 16, %s298, [#allocation12]
        $region36: #{global_pointer_for_rel_forward.9} parent=11 // pred_fallthru
          _
      $region12: #{global_pointer_for_rel_forward.9} parent=5 // pred_fallthru
        _
      %p301 = scmp.lt.s32.totalorder %s22, 2
      // Predicated region
      $region37: #{global_pointer_for_rel_forward.9} parent=5 // pred_check
        %p302 = pneg %p301
      $region38: #{global_pointer_for_rel_forward.9} parent=5 // pred_check_branch
        %304 = sbr.rel (%p302) target = $region40
      $region39: #{global_pointer_for_rel_forward.9} parent=5 // pred_region
        // Predicated region
        $region41: #{global_pointer_for_rel_forward.9} parent=39 // pred_check
          %p305 = pneg %p56
        $region42: #{global_pointer_for_rel_forward.9} parent=39 // pred_check_branch
          %307 = sbr.rel (%p305) target = $region44
        $region43: #{global_pointer_for_rel_forward.9} parent=39 // pred_region
          %s308 = sand.u32 %s46, 1
          %s309 = scalar_lea.sflag [#allocation3], %s308
          %s310 = sand.u32 %s46, 1
          %s311 = smul.addr %s310, 8
          %s312 = scalar_lea.vmem [#allocation2], %s311
          %s313 = smul.u32 2, %s30
          %s315 = ssub.s32 128, 128
          %316 = vsyncadd %s309, %s315
          %s317 = smul.addr %s29, 2
          %s318 = sadd.s32 %s313, %s317
          %s319 = smul.addr %s318, 64
          %s320 = scalar_lea.hbm %s0, %s319
          %s321 = sshll.u32 %s312, 4
          %s322 = int_to_ptr.vmem [resolvable:$true] %s321
          %327 = dma.hbm_to_vmem [thread:$0]  %s320, 128, %s322, %s309, 64, 64, 4
        $region44: #{global_pointer_for_rel_forward.9} parent=39 // pred_fallthru
          _
      $region40: #{global_pointer_for_rel_forward.9} parent=5 // pred_fallthru
        _
      %p328 = scmp.le.s32.totalorder 1, %s22
      %p329 = scmp.lt.s32.totalorder %s22, 3
      %p330 = pnand %p328, %p329
      %p331 = pneg %p330
      // Predicated region
      $region45: #{global_pointer_for_rel_forward.9} parent=5 // pred_check
        _
      $region46: #{global_pointer_for_rel_forward.9} parent=5 // pred_check_branch
        %333 = sbr.rel (%p330) target = $region48
      $region47: #{global_pointer_for_rel_forward.9} parent=5 // pred_region
        %s334 = ssub.s32 %s22, 1
        %s335 = sand.u32 %s49, 1
        %s336 = scalar_lea.sflag [#allocation3], %s335
        %s337 = sand.u32 %s49, 1
        %s338 = smul.addr %s337, 8
        %s339 = scalar_lea.vmem [#allocation2], %s338
        // Predicated region
        $region49: #{global_pointer_for_rel_forward.9} parent=47 // pred_check
          %p340 = pneg %p62
        $region50: #{global_pointer_for_rel_forward.9} parent=47 // pred_check_branch
          %342 = sbr.rel (%p340) target = $region52
        $region51: #{global_pointer_for_rel_forward.9} parent=47 // pred_region
          %343 = dma.done %s336, 128
        $region52: #{global_pointer_for_rel_forward.9} parent=47 // pred_fallthru
          _
        // Predicated region
        $region53: #{global_pointer_for_rel_forward.9} parent=47 // pred_check
          %p344 = pneg %p83
        $region54: #{global_pointer_for_rel_forward.9} parent=47 // pred_check_branch
          %346 = sbr.rel (%p344) target = $region56
        $region55: #{global_pointer_for_rel_forward.9} parent=47 // pred_region
          %347 = dma.done [#allocation6], 4096
        $region56: #{global_pointer_for_rel_forward.9} parent=47 // pred_fallthru
          _
        // Predicated region
        $region57: #{global_pointer_for_rel_forward.9} parent=47 // pred_check
          %p348 = pneg %p104
        $region58: #{global_pointer_for_rel_forward.9} parent=47 // pred_check_branch
          %350 = sbr.rel (%p348) target = $region60
        $region59: #{global_pointer_for_rel_forward.9} parent=47 // pred_region
          %351 = dma.done [#allocation6], 64
        $region60: #{global_pointer_for_rel_forward.9} parent=47 // pred_fallthru
          _
        // Predicated region
        $region61: #{global_pointer_for_rel_forward.9} parent=47 // pred_check
          %p352 = pneg %p125
        $region62: #{global_pointer_for_rel_forward.9} parent=47 // pred_check_branch
          %354 = sbr.rel (%p352) target = $region64
        $region63: #{global_pointer_for_rel_forward.9} parent=47 // pred_region
          %355 = dma.done [#allocation9], 4096
        $region64: #{global_pointer_for_rel_forward.9} parent=47 // pred_fallthru
          _
        // Predicated region
        $region65: #{global_pointer_for_rel_forward.9} parent=47 // pred_check
          %p356 = pneg %p146
        $region66: #{global_pointer_for_rel_forward.9} parent=47 // pred_check_branch
          %358 = sbr.rel (%p356) target = $region68
        $region67: #{global_pointer_for_rel_forward.9} parent=47 // pred_region
          %359 = dma.done [#allocation9], 16
        $region68: #{global_pointer_for_rel_forward.9} parent=47 // pred_fallthru
          _
        // Predicated region
        $region69: #{global_pointer_for_rel_forward.9} parent=47 // pred_check
          %p360 = pneg %p167
        $region70: #{global_pointer_for_rel_forward.9} parent=47 // pred_check_branch
          %362 = sbr.rel (%p360) target = $region72
        $region71: #{global_pointer_for_rel_forward.9} parent=47 // pred_region
          %363 = dma.done [#allocation12], 16
        $region72: #{global_pointer_for_rel_forward.9} parent=47 // pred_fallthru
          _
        // Predicated region
        $region73: #{global_pointer_for_rel_forward.9} parent=47 // pred_check
          %p364 = pneg %p188
        $region74: #{global_pointer_for_rel_forward.9} parent=47 // pred_check_branch
          %366 = sbr.rel (%p364) target = $region76
        $region75: #{global_pointer_for_rel_forward.9} parent=47 // pred_region
          %367 = dma.done [#allocation12], 16
        $region76: #{global_pointer_for_rel_forward.9} parent=47 // pred_fallthru
          _
        %s368 = sand.u32 %s49, 1
        %s369 = scalar_lea.sflag [#allocation3], %s368
        %s370 = sand.u32 %s49, 1
        %s371 = smul.addr %s370, 8
        %s372 = scalar_lea.vmem [#allocation2], %s371
        %p373 = pneg %p62
        %p374 = pneg %p59
        %p375 = pneg %p83
        %p376 = pneg %p80
        %p377 = pneg %p104
        %p378 = pneg %p101
        %p379 = pneg %p125
        %p380 = pneg %p122
        %p381 = pneg %p146
        %p382 = pneg %p143
        %p383 = pneg %p167
        %p384 = pneg %p164
        %p385 = pneg %p188
        %p386 = pneg %p185
        %p387 = pneg %p216
        %p388 = pneg %p213
        %s389 = sand.u32 %s203, 1
        %s390 = scalar_lea.sflag [#allocation4], %s389
        %s391 = sand.u32 %s203, 1
        %s392 = smul.addr %s391, 8
        %s393 = scalar_lea.vmem [#allocation14], %s392
        %s394 = smul.u32 2, %s32
        %s395 = smul.u32 2, %s32
        %v397 = vld [vmem:[%s339] sm:$0xf]
        %v398 = vld [vmem:[%s339 + $0x4] sm:$0xf]
        %v399 = vld [vmem:[#allocation5] sm:$0xff]
        %v400 = vld [vmem:[#allocation5 + $0x8] sm:$0xff]
        %v401 = vld [vmem:[#allocation5 + $0x10] sm:$0xff]
        %v402 = vld [vmem:[#allocation5 + $0x18] sm:$0xff]
        %v403 = vld [vmem:[#allocation5 + $0x20] sm:$0xff]
        %v404 = vld [vmem:[#allocation5 + $0x28] sm:$0xff]
        %v405 = vld [vmem:[#allocation5 + $0x30] sm:$0xff]
        %v406 = vld [vmem:[#allocation5 + $0x38] sm:$0xff]
        %v407 = vld [vmem:[#allocation5 + $0x40] sm:$0xff]
        %v408 = vld [vmem:[#allocation5 + $0x48] sm:$0xff]
        %v409 = vld [vmem:[#allocation5 + $0x50] sm:$0xff]
        %v410 = vld [vmem:[#allocation5 + $0x58] sm:$0xff]
        %v411 = vld [vmem:[#allocation5 + $0x60] sm:$0xff]
        %v412 = vld [vmem:[#allocation5 + $0x68] sm:$0xff]
        %v413 = vld [vmem:[#allocation5 + $0x70] sm:$0xff]
        %v414 = vld [vmem:[#allocation5 + $0x78] sm:$0xff]
        %v415 = vld [vmem:[#allocation5 + $0x80] sm:$0xff]
        %v416 = vld [vmem:[#allocation5 + $0x88] sm:$0xff]
        %v417 = vld [vmem:[#allocation5 + $0x90] sm:$0xff]
        %v418 = vld [vmem:[#allocation5 + $0x98] sm:$0xff]
        %v419 = vld [vmem:[#allocation5 + $0xa0] sm:$0xff]
        %v420 = vld [vmem:[#allocation5 + $0xa8] sm:$0xff]
        %v421 = vld [vmem:[#allocation5 + $0xb0] sm:$0xff]
        %v422 = vld [vmem:[#allocation5 + $0xb8] sm:$0xff]
        %v423 = vld [vmem:[#allocation5 + $0xc0] sm:$0xff]
        %v424 = vld [vmem:[#allocation5 + $0xc8] sm:$0xff]
        %v425 = vld [vmem:[#allocation5 + $0xd0] sm:$0xff]
        %v426 = vld [vmem:[#allocation5 + $0xd8] sm:$0xff]
        %v427 = vld [vmem:[#allocation5 + $0xe0] sm:$0xff]
        %v428 = vld [vmem:[#allocation5 + $0xe8] sm:$0xff]
        %v429 = vld [vmem:[#allocation5 + $0xf0] sm:$0xff]
        %v430 = vld [vmem:[#allocation5 + $0xf8] sm:$0xff]
        %v431 = vld [vmem:[#allocation7] sm:$0xf]
        %v433 = vlaneseq
        %v434 = vshrl.u32 %v433, 7
        %v435 = vsub.s32 0, %v434
        %v436 = vrot.slane %v431, %v435
        %v437 = vlaneseq
        %v438 = vshrl.u32 %v437, 7
        %v439 = vsub.s32 1, %v438
        %v440 = vrot.slane %v431, %v439
        %v441 = vlaneseq
        %v442 = vshrl.u32 %v441, 7
        %v443 = vsub.s32 2, %v442
        %v444 = vrot.slane %v431, %v443
        %v445 = vlaneseq
        %v446 = vshrl.u32 %v445, 7
        %v447 = vsub.s32 3, %v446
        %v448 = vrot.slane %v431, %v447
        %v455 = vunpack.c.l.b16 %v397
        %v456 = vunpack.c.l.b16 %v398
        %v457 = vpack.c.b16 %v456, %v455
        %v491 = vunpack.c.l.b16 %v399
        %v492 = vunpack.c.h.b16 %v399
        %v493 = vunpack.c.l.b16 %v400
        %v494 = vunpack.c.h.b16 %v400
        %v495 = vunpack.c.l.b16 %v401
        %v496 = vunpack.c.h.b16 %v401
        %v497 = vunpack.c.l.b16 %v402
        %v498 = vunpack.c.h.b16 %v402
        %v499 = vunpack.c.l.b16 %v403
        %v500 = vunpack.c.h.b16 %v403
        %v501 = vunpack.c.l.b16 %v404
        %v502 = vunpack.c.h.b16 %v404
        %v503 = vunpack.c.l.b16 %v405
        %v504 = vunpack.c.h.b16 %v405
        %v505 = vunpack.c.l.b16 %v406
        %v506 = vunpack.c.h.b16 %v406
        %v507 = vunpack.c.l.b16 %v407
        %v508 = vunpack.c.h.b16 %v407
        %v509 = vunpack.c.l.b16 %v408
        %v510 = vunpack.c.h.b16 %v408
        %v511 = vunpack.c.l.b16 %v409
        %v512 = vunpack.c.h.b16 %v409
        %v513 = vunpack.c.l.b16 %v410
        %v514 = vunpack.c.h.b16 %v410
        %v515 = vunpack.c.l.b16 %v411
        %v516 = vunpack.c.h.b16 %v411
        %v517 = vunpack.c.l.b16 %v412
        %v518 = vunpack.c.h.b16 %v412
        %v519 = vunpack.c.l.b16 %v413
        %v520 = vunpack.c.h.b16 %v413
        %v521 = vunpack.c.l.b16 %v414
        %v522 = vunpack.c.h.b16 %v414
        %v523 = vunpack.c.l.b16 %v415
        %v524 = vunpack.c.h.b16 %v415
        %v525 = vunpack.c.l.b16 %v416
        %v526 = vunpack.c.h.b16 %v416
        %v527 = vunpack.c.l.b16 %v417
        %v528 = vunpack.c.h.b16 %v417
        %v529 = vunpack.c.l.b16 %v418
        %v530 = vunpack.c.h.b16 %v418
        %v531 = vunpack.c.l.b16 %v419
        %v532 = vunpack.c.h.b16 %v419
        %v533 = vunpack.c.l.b16 %v420
        %v534 = vunpack.c.h.b16 %v420
        %v535 = vunpack.c.l.b16 %v421
        %v536 = vunpack.c.h.b16 %v421
        %v537 = vunpack.c.l.b16 %v422
        %v538 = vunpack.c.h.b16 %v422
        %v539 = vunpack.c.l.b16 %v423
        %v540 = vunpack.c.h.b16 %v423
        %v541 = vunpack.c.l.b16 %v424
        %v542 = vunpack.c.h.b16 %v424
        %v543 = vunpack.c.l.b16 %v425
        %v544 = vunpack.c.h.b16 %v425
        %v545 = vunpack.c.l.b16 %v426
        %v546 = vunpack.c.h.b16 %v426
        %v547 = vunpack.c.l.b16 %v427
        %v548 = vunpack.c.h.b16 %v427
        %v549 = vunpack.c.l.b16 %v428
        %v550 = vunpack.c.h.b16 %v428
        %v551 = vunpack.c.l.b16 %v429
        %v552 = vunpack.c.h.b16 %v429
        %v553 = vunpack.c.l.b16 %v430
        %v554 = vunpack.c.h.b16 %v430
        %v555 = vpack.c.b16 %v495, %v491
        %v556 = vpack.c.b16 %v496, %v492
        %v557 = vpack.c.b16 %v497, %v493
        %v558 = vpack.c.b16 %v498, %v494
        %v559 = vpack.c.b16 %v503, %v499
        %v560 = vpack.c.b16 %v504, %v500
        %v561 = vpack.c.b16 %v505, %v501
        %v562 = vpack.c.b16 %v506, %v502
        %v563 = vpack.c.b16 %v511, %v507
        %v564 = vpack.c.b16 %v512, %v508
        %v565 = vpack.c.b16 %v513, %v509
        %v566 = vpack.c.b16 %v514, %v510
        %v567 = vpack.c.b16 %v519, %v515
        %v568 = vpack.c.b16 %v520, %v516
        %v569 = vpack.c.b16 %v521, %v517
        %v570 = vpack.c.b16 %v522, %v518
        %v571 = vpack.c.b16 %v527, %v523
        %v572 = vpack.c.b16 %v528, %v524
        %v573 = vpack.c.b16 %v529, %v525
        %v574 = vpack.c.b16 %v530, %v526
        %v575 = vpack.c.b16 %v535, %v531
        %v576 = vpack.c.b16 %v536, %v532
        %v577 = vpack.c.b16 %v537, %v533
        %v578 = vpack.c.b16 %v538, %v534
        %v579 = vpack.c.b16 %v543, %v539
        %v580 = vpack.c.b16 %v544, %v540
        %v581 = vpack.c.b16 %v545, %v541
        %v582 = vpack.c.b16 %v546, %v542
        %v583 = vpack.c.b16 %v551, %v547
        %v584 = vpack.c.b16 %v552, %v548
        %v585 = vpack.c.b16 %v553, %v549
        %v586 = vpack.c.b16 %v554, %v550
        %619 = vmatprep.subr.bf16.mxu0 %v556
        %620 = vmatpush1.bf16.msra.mxu0 %v555
        %621 = vmatprep.subr.bf16.mxu0 %v560
        %622 = vmatpush1.bf16.msra.mxu0 %v559
        %623 = vmatprep.subr.bf16.mxu0 %v564
        %624 = vmatpush1.bf16.msra.mxu0 %v563
        %625 = vmatprep.subr.bf16.mxu0 %v568
        %626 = vmatpush1.bf16.msra.mxu0 %v567
        %627 = vmatprep.subr.bf16.mxu0 %v572
        %628 = vmatpush1.bf16.msra.mxu0 %v571
        %629 = vmatprep.subr.bf16.mxu0 %v576
        %630 = vmatpush1.bf16.msra.mxu0 %v575
        %631 = vmatprep.subr.bf16.mxu0 %v580
        %632 = vmatpush1.bf16.msra.mxu0 %v579
        %633 = vmatprep.subr.bf16.mxu0 %v584
        %634 = vmatpush1.bf16.msra.mxu0 %v583
        %635 = vmatprep.subr.bf16.mxu0 0
        %636 = vmatpush1.bf16.msra.mxu0 0
        %637 = vmatprep.subr.bf16.mxu0 0
        %638 = vmatpush1.bf16.msra.mxu0 0
        %639 = vmatprep.subr.bf16.mxu0 0
        %640 = vmatpush1.bf16.msra.mxu0 0
        %641 = vmatprep.subr.bf16.mxu0 0
        %642 = vmatpush1.bf16.msra.mxu0 0
        %643 = vmatprep.subr.bf16.mxu0 0
        %644 = vmatpush1.bf16.msra.mxu0 0
        %645 = vmatprep.subr.bf16.mxu0 0
        %646 = vmatpush1.bf16.msra.mxu0 0
        %647 = vmatprep.subr.bf16.mxu0 0
        %648 = vmatpush1.bf16.msra.mxu0 0
        %649 = vmatprep.subr.bf16.mxu0 0
        %650 = vmatpush1.bf16.msra.mxu0 0
        %651 = vmatprep.mubr.bf16.mxu0 0
        %652 = vmatmul.mubr.bf16.gmra.mrb[0].mxu0 %v457
        %v653 = vpop.f32.mrb[0].mxu0
        %v654 = vadd.f32 %v436, %v653
        %v655 = vpop.f32.mrb[0].mxu0
        %v656 = vadd.f32 %v440, %v655
        %v657 = vpop.f32.mrb[0].mxu0
        %v658 = vadd.f32 %v436, %v657
        %v659 = vpop.f32.mrb[0].mxu0
        %v660 = vadd.f32 %v440, %v659
        %661 = vdwg.mxu0
        %662 = vmatprep.subr.bf16.mxu0 %v558
        %663 = vmatpush1.bf16.msra.mxu0 %v557
        %664 = vmatprep.subr.bf16.mxu0 %v562
        %665 = vmatpush1.bf16.msra.mxu0 %v561
        %666 = vmatprep.subr.bf16.mxu0 %v566
        %667 = vmatpush1.bf16.msra.mxu0 %v565
        %668 = vmatprep.subr.bf16.mxu0 %v570
        %669 = vmatpush1.bf16.msra.mxu0 %v569
        %670 = vmatprep.subr.bf16.mxu0 %v574
        %671 = vmatpush1.bf16.msra.mxu0 %v573
        %672 = vmatprep.subr.bf16.mxu0 %v578
        %673 = vmatpush1.bf16.msra.mxu0 %v577
        %674 = vmatprep.subr.bf16.mxu0 %v582
        %675 = vmatpush1.bf16.msra.mxu0 %v581
        %676 = vmatprep.subr.bf16.mxu0 %v586
        %677 = vmatpush1.bf16.msra.mxu0 %v585
        %678 = vmatprep.subr.bf16.mxu0 0
        %679 = vmatpush1.bf16.msra.mxu0 0
        %680 = vmatprep.subr.bf16.mxu0 0
        %681 = vmatpush1.bf16.msra.mxu0 0
        %682 = vmatprep.subr.bf16.mxu0 0
        %683 = vmatpush1.bf16.msra.mxu0 0
        %684 = vmatprep.subr.bf16.mxu0 0
        %685 = vmatpush1.bf16.msra.mxu0 0
        %686 = vmatprep.subr.bf16.mxu0 0
        %687 = vmatpush1.bf16.msra.mxu0 0
        %688 = vmatprep.subr.bf16.mxu0 0
        %689 = vmatpush1.bf16.msra.mxu0 0
        %690 = vmatprep.subr.bf16.mxu0 0
        %691 = vmatpush1.bf16.msra.mxu0 0
        %692 = vmatprep.subr.bf16.mxu0 0
        %693 = vmatpush1.bf16.msra.mxu0 0
        %694 = vmatprep.mubr.bf16.mxu0 0
        %695 = vmatmul.mubr.bf16.gmra.mrb[0].mxu0 %v457
        %v696 = vpop.f32.mrb[0].mxu0
        %v697 = vadd.f32 %v444, %v696
        %v698 = vpop.f32.mrb[0].mxu0
        %v699 = vadd.f32 %v448, %v698
        %v700 = vpop.f32.mrb[0].mxu0
        %v701 = vadd.f32 %v444, %v700
        %v702 = vpop.f32.mrb[0].mxu0
        %v703 = vadd.f32 %v448, %v702
        %704 = vdwg.mxu0
        %v705 = vmul.f32 %v654, %v654
        %v706 = vmul.f32 %v656, %v656
        %v707 = vmul.f32 %v697, %v697
        %v708 = vmul.f32 %v699, %v699
        %v709 = vmul.f32 %v658, %v658
        %v710 = vmul.f32 %v660, %v660
        %v711 = vmul.f32 %v701, %v701
        %v712 = vmul.f32 %v703, %v703
        %v713 = vmul.f32 %v654, %v705
        %v714 = vmul.f32 %v656, %v706
        %v715 = vmul.f32 %v697, %v707
        %v716 = vmul.f32 %v699, %v708
        %v717 = vmul.f32 %v658, %v709
        %v718 = vmul.f32 %v660, %v710
        %v719 = vmul.f32 %v701, %v711
        %v720 = vmul.f32 %v703, %v712
        %v721 = vmul.f32 %v713, 0.044715
        %v722 = vmul.f32 %v714, 0.044715
        %v723 = vmul.f32 %v715, 0.044715
        %v724 = vmul.f32 %v716, 0.044715
        %v725 = vmul.f32 %v717, 0.044715
        %v726 = vmul.f32 %v718, 0.044715
        %v727 = vmul.f32 %v719, 0.044715
        %v728 = vmul.f32 %v720, 0.044715
        %v729 = vadd.f32 %v654, %v721
        %v730 = vadd.f32 %v656, %v722
        %v731 = vadd.f32 %v697, %v723
        %v732 = vadd.f32 %v699, %v724
        %v733 = vadd.f32 %v658, %v725
        %v734 = vadd.f32 %v660, %v726
        %v735 = vadd.f32 %v701, %v727
        %v736 = vadd.f32 %v703, %v728
        %v737 = vmul.f32 %v729, 0.7978846
        %v738 = vmul.f32 %v730, 0.7978846
        %v739 = vmul.f32 %v731, 0.7978846
        %v740 = vmul.f32 %v732, 0.7978846
        %v741 = vmul.f32 %v733, 0.7978846
        %v742 = vmul.f32 %v734, 0.7978846
        %v743 = vmul.f32 %v735, 0.7978846
        %v744 = vmul.f32 %v736, 0.7978846
        %v745 = vtanh.pop %v737
        %v746 = vtanh.pop %v738
        %v747 = vtanh.pop %v739
        %v748 = vtanh.pop %v740
        %v749 = vtanh.pop %v741
        %v750 = vtanh.pop %v742
        %v751 = vtanh.pop %v743
        %v752 = vtanh.pop %v744
        %v753 = vadd.f32 %v745, 1.0
        %v754 = vadd.f32 %v746, 1.0
        %v755 = vadd.f32 %v747, 1.0
        %v756 = vadd.f32 %v748, 1.0
        %v757 = vadd.f32 %v749, 1.0
        %v758 = vadd.f32 %v750, 1.0
        %v759 = vadd.f32 %v751, 1.0
        %v760 = vadd.f32 %v752, 1.0
        %v761 = vmul.f32 %v753, 0.5
        %v762 = vmul.f32 %v754, 0.5
        %v763 = vmul.f32 %v755, 0.5
        %v764 = vmul.f32 %v756, 0.5
        %v765 = vmul.f32 %v757, 0.5
        %v766 = vmul.f32 %v758, 0.5
        %v767 = vmul.f32 %v759, 0.5
        %v768 = vmul.f32 %v760, 0.5
        %v769 = vmul.f32 %v654, %v761
        %v770 = vmul.f32 %v656, %v762
        %v771 = vmul.f32 %v697, %v763
        %v772 = vmul.f32 %v699, %v764
        %v773 = vmul.f32 %v658, %v765
        %v774 = vmul.f32 %v660, %v766
        %v775 = vmul.f32 %v701, %v767
        %v776 = vmul.f32 %v703, %v768
        %v777 = vpack.c.bf16 %v773, %v769
        %v778 = vpack.c.bf16 %v774, %v770
        %v779 = vpack.c.bf16 %v775, %v771
        %v780 = vpack.c.bf16 %v776, %v772
        %v781 = vld [vmem:[#allocation8] sm:$0xf]
        %v782 = vld [vmem:[#allocation8 + $0x4] sm:$0xf]
        %v783 = vld [vmem:[#allocation8 + $0x8] sm:$0xf]
        %v784 = vld [vmem:[#allocation8 + $0xc] sm:$0xf]
        %v785 = vld [vmem:[#allocation8 + $0x10] sm:$0xf]
        %v786 = vld [vmem:[#allocation8 + $0x14] sm:$0xf]
        %v787 = vld [vmem:[#allocation8 + $0x18] sm:$0xf]
        %v788 = vld [vmem:[#allocation8 + $0x1c] sm:$0xf]
        %v789 = vld [vmem:[#allocation8 + $0x20] sm:$0xf]
        %v790 = vld [vmem:[#allocation8 + $0x24] sm:$0xf]
        %v791 = vld [vmem:[#allocation8 + $0x28] sm:$0xf]
        %v792 = vld [vmem:[#allocation8 + $0x2c] sm:$0xf]
        %v793 = vld [vmem:[#allocation8 + $0x30] sm:$0xf]
        %v794 = vld [vmem:[#allocation8 + $0x34] sm:$0xf]
        %v795 = vld [vmem:[#allocation8 + $0x38] sm:$0xf]
        %v796 = vld [vmem:[#allocation8 + $0x3c] sm:$0xf]
        %v797 = vld [vmem:[#allocation8 + $0x40] sm:$0xf]
        %v798 = vld [vmem:[#allocation8 + $0x44] sm:$0xf]
        %v799 = vld [vmem:[#allocation8 + $0x48] sm:$0xf]
        %v800 = vld [vmem:[#allocation8 + $0x4c] sm:$0xf]
        %v801 = vld [vmem:[#allocation8 + $0x50] sm:$0xf]
        %v802 = vld [vmem:[#allocation8 + $0x54] sm:$0xf]
        %v803 = vld [vmem:[#allocation8 + $0x58] sm:$0xf]
        %v804 = vld [vmem:[#allocation8 + $0x5c] sm:$0xf]
        %v805 = vld [vmem:[#allocation8 + $0x60] sm:$0xf]
        %v806 = vld [vmem:[#allocation8 + $0x64] sm:$0xf]
        %v807 = vld [vmem:[#allocation8 + $0x68] sm:$0xf]
        %v808 = vld [vmem:[#allocation8 + $0x6c] sm:$0xf]
        %v809 = vld [vmem:[#allocation8 + $0x70] sm:$0xf]
        %v810 = vld [vmem:[#allocation8 + $0x74] sm:$0xf]
        %v811 = vld [vmem:[#allocation8 + $0x78] sm:$0xf]
        %v812 = vld [vmem:[#allocation8 + $0x7c] sm:$0xf]
        %v813 = vld [vmem:[#allocation8 + $0x80] sm:$0xf]
        %v814 = vld [vmem:[#allocation8 + $0x84] sm:$0xf]
        %v815 = vld [vmem:[#allocation8 + $0x88] sm:$0xf]
        %v816 = vld [vmem:[#allocation8 + $0x8c] sm:$0xf]
        %v817 = vld [vmem:[#allocation8 + $0x90] sm:$0xf]
        %v818 = vld [vmem:[#allocation8 + $0x94] sm:$0xf]
        %v819 = vld [vmem:[#allocation8 + $0x98] sm:$0xf]
        %v820 = vld [vmem:[#allocation8 + $0x9c] sm:$0xf]
        %v821 = vld [vmem:[#allocation8 + $0xa0] sm:$0xf]
        %v822 = vld [vmem:[#allocation8 + $0xa4] sm:$0xf]
        %v823 = vld [vmem:[#allocation8 + $0xa8] sm:$0xf]
        %v824 = vld [vmem:[#allocation8 + $0xac] sm:$0xf]
        %v825 = vld [vmem:[#allocation8 + $0xb0] sm:$0xf]
        %v826 = vld [vmem:[#allocation8 + $0xb4] sm:$0xf]
        %v827 = vld [vmem:[#allocation8 + $0xb8] sm:$0xf]
        %v828 = vld [vmem:[#allocation8 + $0xbc] sm:$0xf]
        %v829 = vld [vmem:[#allocation8 + $0xc0] sm:$0xf]
        %v830 = vld [vmem:[#allocation8 + $0xc4] sm:$0xf]
        %v831 = vld [vmem:[#allocation8 + $0xc8] sm:$0xf]
        %v832 = vld [vmem:[#allocation8 + $0xcc] sm:$0xf]
        %v833 = vld [vmem:[#allocation8 + $0xd0] sm:$0xf]
        %v834 = vld [vmem:[#allocation8 + $0xd4] sm:$0xf]
        %v835 = vld [vmem:[#allocation8 + $0xd8] sm:$0xf]
        %v836 = vld [vmem:[#allocation8 + $0xdc] sm:$0xf]
        %v837 = vld [vmem:[#allocation8 + $0xe0] sm:$0xf]
        %v838 = vld [vmem:[#allocation8 + $0xe4] sm:$0xf]
        %v839 = vld [vmem:[#allocation8 + $0xe8] sm:$0xf]
        %v840 = vld [vmem:[#allocation8 + $0xec] sm:$0xf]
        %v841 = vld [vmem:[#allocation8 + $0xf0] sm:$0xf]
        %v842 = vld [vmem:[#allocation8 + $0xf4] sm:$0xf]
        %v843 = vld [vmem:[#allocation8 + $0xf8] sm:$0xf]
        %v844 = vld [vmem:[#allocation8 + $0xfc] sm:$0xf]
        %v845 = vld [vmem:[#allocation10] sm:$0x1]
        %v847 = vlaneseq
        %v848 = vshrl.u32 %v847, 7
        %v849 = vsub.s32 0, %v848
        %v850 = vrot.slane %v845, %v849
        %v916 = vunpack.c.l.b16 %v781
        %v917 = vunpack.c.l.b16 %v782
        %v918 = vunpack.c.l.b16 %v783
        %v919 = vunpack.c.l.b16 %v784
        %v920 = vunpack.c.l.b16 %v785
        %v921 = vunpack.c.l.b16 %v786
        %v922 = vunpack.c.l.b16 %v787
        %v923 = vunpack.c.l.b16 %v788
        %v924 = vunpack.c.l.b16 %v789
        %v925 = vunpack.c.l.b16 %v790
        %v926 = vunpack.c.l.b16 %v791
        %v927 = vunpack.c.l.b16 %v792
        %v928 = vunpack.c.l.b16 %v793
        %v929 = vunpack.c.l.b16 %v794
        %v930 = vunpack.c.l.b16 %v795
        %v931 = vunpack.c.l.b16 %v796
        %v932 = vunpack.c.l.b16 %v797
        %v933 = vunpack.c.l.b16 %v798
        %v934 = vunpack.c.l.b16 %v799
        %v935 = vunpack.c.l.b16 %v800
        %v936 = vunpack.c.l.b16 %v801
        %v937 = vunpack.c.l.b16 %v802
        %v938 = vunpack.c.l.b16 %v803
        %v939 = vunpack.c.l.b16 %v804
        %v940 = vunpack.c.l.b16 %v805
        %v941 = vunpack.c.l.b16 %v806
        %v942 = vunpack.c.l.b16 %v807
        %v943 = vunpack.c.l.b16 %v808
        %v944 = vunpack.c.l.b16 %v809
        %v945 = vunpack.c.l.b16 %v810
        %v946 = vunpack.c.l.b16 %v811
        %v947 = vunpack.c.l.b16 %v812
        %v948 = vunpack.c.l.b16 %v813
        %v949 = vunpack.c.l.b16 %v814
        %v950 = vunpack.c.l.b16 %v815
        %v951 = vunpack.c.l.b16 %v816
        %v952 = vunpack.c.l.b16 %v817
        %v953 = vunpack.c.l.b16 %v818
        %v954 = vunpack.c.l.b16 %v819
        %v955 = vunpack.c.l.b16 %v820
        %v956 = vunpack.c.l.b16 %v821
        %v957 = vunpack.c.l.b16 %v822
        %v958 = vunpack.c.l.b16 %v823
        %v959 = vunpack.c.l.b16 %v824
        %v960 = vunpack.c.l.b16 %v825
        %v961 = vunpack.c.l.b16 %v826
        %v962 = vunpack.c.l.b16 %v827
        %v963 = vunpack.c.l.b16 %v828
        %v964 = vunpack.c.l.b16 %v829
        %v965 = vunpack.c.l.b16 %v830
        %v966 = vunpack.c.l.b16 %v831
        %v967 = vunpack.c.l.b16 %v832
        %v968 = vunpack.c.l.b16 %v833
        %v969 = vunpack.c.l.b16 %v834
        %v970 = vunpack.c.l.b16 %v835
        %v971 = vunpack.c.l.b16 %v836
        %v972 = vunpack.c.l.b16 %v837
        %v973 = vunpack.c.l.b16 %v838
        %v974 = vunpack.c.l.b16 %v839
        %v975 = vunpack.c.l.b16 %v840
        %v976 = vunpack.c.l.b16 %v841
        %v977 = vunpack.c.l.b16 %v842
        %v978 = vunpack.c.l.b16 %v843
        %v979 = vunpack.c.l.b16 %v844
        %v980 = vpack.c.b16 %v917, %v916
        %v981 = vpack.c.b16 %v919, %v918
        %v982 = vpack.c.b16 %v921, %v920
        %v983 = vpack.c.b16 %v923, %v922
        %v984 = vpack.c.b16 %v925, %v924
        %v985 = vpack.c.b16 %v927, %v926
        %v986 = vpack.c.b16 %v929, %v928
        %v987 = vpack.c.b16 %v931, %v930
        %v988 = vpack.c.b16 %v933, %v932
        %v989 = vpack.c.b16 %v935, %v934
        %v990 = vpack.c.b16 %v937, %v936
        %v991 = vpack.c.b16 %v939, %v938
        %v992 = vpack.c.b16 %v941, %v940
        %v993 = vpack.c.b16 %v943, %v942
        %v994 = vpack.c.b16 %v945, %v944
        %v995 = vpack.c.b16 %v947, %v946
        %v996 = vpack.c.b16 %v949, %v948
        %v997 = vpack.c.b16 %v951, %v950
        %v998 = vpack.c.b16 %v953, %v952
        %v999 = vpack.c.b16 %v955, %v954
        %v1000 = vpack.c.b16 %v957, %v956
        %v1001 = vpack.c.b16 %v959, %v958
        %v1002 = vpack.c.b16 %v961, %v960
        %v1003 = vpack.c.b16 %v963, %v962
        %v1004 = vpack.c.b16 %v965, %v964
        %v1005 = vpack.c.b16 %v967, %v966
        %v1006 = vpack.c.b16 %v969, %v968
        %v1007 = vpack.c.b16 %v971, %v970
        %v1008 = vpack.c.b16 %v973, %v972
        %v1009 = vpack.c.b16 %v975, %v974
        %v1010 = vpack.c.b16 %v977, %v976
        %v1011 = vpack.c.b16 %v979, %v978
        %1044 = vmatprep.subr.bf16.mxu0 0
        %1045 = vmatpush1.bf16.msra.mxu0 %v980
        %1046 = vmatprep.subr.bf16.mxu0 0
        %1047 = vmatpush1.bf16.msra.mxu0 %v981
        %1048 = vmatprep.subr.bf16.mxu0 0
        %1049 = vmatpush1.bf16.msra.mxu0 %v982
        %1050 = vmatprep.subr.bf16.mxu0 0
        %1051 = vmatpush1.bf16.msra.mxu0 %v983
        %1052 = vmatprep.subr.bf16.mxu0 0
        %1053 = vmatpush1.bf16.msra.mxu0 %v984
        %1054 = vmatprep.subr.bf16.mxu0 0
        %1055 = vmatpush1.bf16.msra.mxu0 %v985
        %1056 = vmatprep.subr.bf16.mxu0 0
        %1057 = vmatpush1.bf16.msra.mxu0 %v986
        %1058 = vmatprep.subr.bf16.mxu0 0
        %1059 = vmatpush1.bf16.msra.mxu0 %v987
        %1060 = vmatprep.subr.bf16.mxu0 0
        %1061 = vmatpush1.bf16.msra.mxu0 %v988
        %1062 = vmatprep.subr.bf16.mxu0 0
        %1063 = vmatpush1.bf16.msra.mxu0 %v989
        %1064 = vmatprep.subr.bf16.mxu0 0
        %1065 = vmatpush1.bf16.msra.mxu0 %v990
        %1066 = vmatprep.subr.bf16.mxu0 0
        %1067 = vmatpush1.bf16.msra.mxu0 %v991
        %1068 = vmatprep.subr.bf16.mxu0 0
        %1069 = vmatpush1.bf16.msra.mxu0 %v992
        %1070 = vmatprep.subr.bf16.mxu0 0
        %1071 = vmatpush1.bf16.msra.mxu0 %v993
        %1072 = vmatprep.subr.bf16.mxu0 0
        %1073 = vmatpush1.bf16.msra.mxu0 %v994
        %1074 = vmatprep.subr.bf16.mxu0 0
        %1075 = vmatpush1.bf16.msra.mxu0 %v995
        %1076 = vmatprep.mubr.bf16.mxu0 %v778
        %1077 = vmatmul.mubr.bf16.gmra.mrb[0].mxu0 %v777
        %v1078 = vpop.f32.mrb[0].mxu0
        %v1079 = vadd.f32 %v850, %v1078
        %v1080 = vpop.f32.mrb[0].mxu0
        %v1081 = vpop.f32.mrb[0].mxu0
        %v1082 = vadd.f32 %v850, %v1081
        %v1083 = vpop.f32.mrb[0].mxu0
        %1084 = vdwg.mxu0
        %1085 = vmatprep.subr.bf16.mxu0 0
        %1086 = vmatpush1.bf16.msra.mxu0 %v996
        %1087 = vmatprep.subr.bf16.mxu0 0
        %1088 = vmatpush1.bf16.msra.mxu0 %v997
        %1089 = vmatprep.subr.bf16.mxu0 0
        %1090 = vmatpush1.bf16.msra.mxu0 %v998
        %1091 = vmatprep.subr.bf16.mxu0 0
        %1092 = vmatpush1.bf16.msra.mxu0 %v999
        %1093 = vmatprep.subr.bf16.mxu0 0
        %1094 = vmatpush1.bf16.msra.mxu0 %v1000
        %1095 = vmatprep.subr.bf16.mxu0 0
        %1096 = vmatpush1.bf16.msra.mxu0 %v1001
        %1097 = vmatprep.subr.bf16.mxu0 0
        %1098 = vmatpush1.bf16.msra.mxu0 %v1002
        %1099 = vmatprep.subr.bf16.mxu0 0
        %1100 = vmatpush1.bf16.msra.mxu0 %v1003
        %1101 = vmatprep.subr.bf16.mxu0 0
        %1102 = vmatpush1.bf16.msra.mxu0 %v1004
        %1103 = vmatprep.subr.bf16.mxu0 0
        %1104 = vmatpush1.bf16.msra.mxu0 %v1005
        %1105 = vmatprep.subr.bf16.mxu0 0
        %1106 = vmatpush1.bf16.msra.mxu0 %v1006
        %1107 = vmatprep.subr.bf16.mxu0 0
        %1108 = vmatpush1.bf16.msra.mxu0 %v1007
        %1109 = vmatprep.subr.bf16.mxu0 0
        %1110 = vmatpush1.bf16.msra.mxu0 %v1008
        %1111 = vmatprep.subr.bf16.mxu0 0
        %1112 = vmatpush1.bf16.msra.mxu0 %v1009
        %1113 = vmatprep.subr.bf16.mxu0 0
        %1114 = vmatpush1.bf16.msra.mxu0 %v1010
        %1115 = vmatprep.subr.bf16.mxu0 0
        %1116 = vmatpush1.bf16.msra.mxu0 %v1011
        %1117 = vmatprep.mubr.bf16.mxu0 %v780
        %1118 = vmatmul.mubr.bf16.gmra.mrb[0].mxu0 %v779
        %v1119 = vpop.f32.mrb[0].mxu0
        %v1120 = vadd.f32 %v1079, %v1119
        %v1121 = vpop.f32.mrb[0].mxu0
        %v1122 = vpop.f32.mrb[0].mxu0
        %v1123 = vadd.f32 %v1082, %v1122
        %v1124 = vpop.f32.mrb[0].mxu0
        %1125 = vdwg.mxu0
        %v1126 = vunpack.c.l.bf16 %v397
        %v1127 = vunpack.c.l.bf16 %v398
        %v1128 = vadd.f32 %v1120, %v1126
        %v1129 = vadd.f32 %v1123, %v1127
        %v1130 = vld [vmem:[#allocation11] sm:$0x1]
        %v1131 = vld [vmem:[#allocation13] sm:$0x1]
        %1132 = vadd.xlane.f32.xlu0 %v1128
        %v1133 = vpop.xlane.xlu0 %1132
        %1134 = vadd.xlane.f32.xlu0 %v1129
        %v1135 = vpop.xlane.xlu0 %1134
        %v1136 = vrcp.pop 128.0
        %v1137 = vmul.f32 %v1133, %v1136
        %v1138 = vmul.f32 %v1135, %v1136
        %v1139 = vsub.f32 %v1128, %v1137
        %v1140 = vsub.f32 %v1129, %v1138
        %v1141 = vmul.f32 %v1139, %v1139
        %v1142 = vmul.f32 %v1140, %v1140
        %1143 = vadd.xlane.f32.xlu0 %v1141
        %v1144 = vpop.xlane.xlu0 %1143
        %1145 = vadd.xlane.f32.xlu0 %v1142
        %v1146 = vpop.xlane.xlu0 %1145
        %v1147 = vmul.f32 %v1144, %v1136
        %v1148 = vmul.f32 %v1146, %v1136
        %v1149 = vadd.f32 %v1147, 1e-12
        %v1150 = vadd.f32 %v1148, 1e-12
        %v1151 = vrsqrt.pop %v1149
        %v1152 = vrsqrt.pop %v1150
        %v1153 = vmul.f32 %v1139, %v1151
        %v1154 = vmul.f32 %v1140, %v1152
        %v1156 = vlaneseq
        %v1157 = vshrl.u32 %v1156, 7
        %v1158 = vsub.s32 0, %v1157
        %v1159 = vrot.slane %v1130, %v1158
        %v1161 = vmul.f32 %v1153, %v1159
        %v1162 = vmul.f32 %v1154, %v1159
        %v1164 = vlaneseq
        %v1165 = vshrl.u32 %v1164, 7
        %v1166 = vsub.s32 0, %v1165
        %v1167 = vrot.slane %v1131, %v1166
        %v1169 = vadd.f32 %v1161, %v1167
        %v1170 = vadd.f32 %v1162, %v1167
        %v1171 = vpack.c.bf16 %v1170, %v1169
        %v1173 = vunpack.c.l.b16 %v1171
        %v1174 = vunpack.c.h.b16 %v1171
        %v1175 = vpack.c.b16 %v1173, %v1173
        %v1176 = vpack.c.b16 %v1174, %v1174
        %1179 = vst [vmem:[%s393] sm:$0xf] %v1175
        %1180 = vst [vmem:[%s393 + $0x4] sm:$0xf] %v1176
        %s1181 = sand.u32 %s203, 1
        %s1182 = scalar_lea.sflag [#allocation4], %s1181
        %s1183 = sand.u32 %s203, 1
        %s1184 = smul.addr %s1183, 8
        %s1185 = scalar_lea.vmem [#allocation14], %s1184
        // Predicated region
        $region77: #{global_pointer_for_rel_forward.9} parent=47 // pred_check
          %p1186 = pneg %p213
        $region78: #{global_pointer_for_rel_forward.9} parent=47 // pred_check_branch
          %1188 = sbr.rel (%p1186) target = $region80
        $region79: #{global_pointer_for_rel_forward.9} parent=47 // pred_region
          %s1189 = smul.u32 2, %s32
          %s1191 = ssub.s32 128, 128
          %1192 = vsyncadd %s1182, %s1191
          %s1193 = smul.addr %s31, 2
          %s1194 = sadd.s32 %s1189, %s1193
          %s1195 = smul.addr %s1194, 64
          %s1196 = scalar_lea.hbm %s7, %s1195
          %s1197 = sshll.u32 %s1185, 4
          %s1198 = int_to_ptr.vmem [resolvable:$true] %s1197
          %1203 = dma.vmem_to_hbm [thread:$0]  %s1198, 128, %s1196, %s1182, 64, 64, 4
        $region80: #{global_pointer_for_rel_forward.9} parent=47 // pred_fallthru
          _
      $region48: #{global_pointer_for_rel_forward.9} parent=5 // pred_fallthru
        _
      %p1204 = scmp.le.s32.totalorder 2, %s22
      // Predicated region
      $region81: #{global_pointer_for_rel_forward.9} parent=5 // pred_check
        %p1205 = pneg %p1204
      $region82: #{global_pointer_for_rel_forward.9} parent=5 // pred_check_branch
        %1207 = sbr.rel (%p1205) target = $region84
      $region83: #{global_pointer_for_rel_forward.9} parent=5 // pred_region
        %s1208 = ssub.s32 %s22, 2
        // Predicated region
        $region85: #{global_pointer_for_rel_forward.9} parent=83 // pred_check
          %p1209 = pneg %p219
        $region86: #{global_pointer_for_rel_forward.9} parent=83 // pred_check_branch
          %1211 = sbr.rel (%p1209) target = $region88
        $region87: #{global_pointer_for_rel_forward.9} parent=83 // pred_region
          %s1212 = sand.u32 %s204, 1
          %s1213 = scalar_lea.sflag [#allocation4], %s1212
          %s1214 = sand.u32 %s204, 1
          %s1215 = smul.addr %s1214, 8
          %s1216 = scalar_lea.vmem [#allocation14], %s1215
          %1217 = dma.done %s1213, 128
        $region88: #{global_pointer_for_rel_forward.9} parent=83 // pred_fallthru
          _
      $region84: #{global_pointer_for_rel_forward.9} parent=5 // pred_fallthru
        _
    $region6: #{global_pointer_for_rel_forward.9} parent=1 // loop_footer
      %s26 = sadd.s32 1, %s22
    $region7: #{global_pointer_for_rel_forward.9} parent=1 // loop_footer_branch
      %21 = sbr.rel target = $region3
    $region8: #{global_pointer_for_rel_forward.9} parent=1 // loop_exit
      _
    %1218 = vsyncpa [#allocation3], 1
    %s1219 = scalar_lea.sflag [#allocation3], 1
    %1220 = vsyncpa %s1219, 1
    %1221 = vsyncpa [#allocation6], 1
    %1222 = vsyncpa [#allocation9], 1
    %1223 = vsyncpa [#allocation12], 1
    %1224 = vsyncpa [#allocation4], 1
    %s1225 = scalar_lea.sflag [#allocation4], 1
    %1226 = vsyncpa %s1225, 1

// kernel: global_pointer_for_rel_forward.12
$region0: #{global_pointer_for_rel_forward.12}
  #allocation0 [shape = 'u32[]', space=smem, size = 0x4, offset = 0x4, fixed_abs, tag = 'smem constant byte address 0x4 - core index']
  #allocation1 [shape = 'u32[144,128]{1,0:T(1,128)}', space=vmem, size = 0x12000, scoped, tag = 'internal scratch']
  #allocation2 [shape = 'f32[2,16,128]{2,1,0:T(8,128)}', space=vmem, size = 0x4000, scoped, tag = 'scratch operand']
  %s0 = inlined_call_operand.hbm [shape: bf16[2,16,128], index: 0, kind: input, shape index: {}]
  %s1 = inlined_call_operand.hbm [shape: bf16[128,256], index: 1, kind: input, shape index: {}]
  %s2 = inlined_call_operand.hbm [shape: f32[1,256], index: 2, kind: input, shape index: {}]
  %s3 = inlined_call_operand.hbm [shape: f32[16,32], index: 3, kind: input, shape index: {}]
  %s4 = inlined_call_operand.hbm [shape: f32[16,32], index: 4, kind: input, shape index: {}]
  %s5 = inlined_call_operand.hbm [shape: f32[2,16,1], index: 5, kind: input, shape index: {}]
  %s6 = inlined_call_operand.hbm [shape: f32[2,1,16], index: 6, kind: input, shape index: {}]
  %s7 = inlined_call_operand.hbm [shape: f32[2,2,16,16], index: 7, kind: output, shape index: {}]
  %s8 = sld [smem:[#allocation0]]
  $region89: #{global_pointer_for_rel_forward.12} parent=0
    _
  %s10 = ssub.s32 1, %s8
  %s11 = scalar_select 0, %s10, %s8
  $region1: #{global_pointer_for_rel_forward.12} parent=0
    #allocation3 [shape = 'u8[8192]{0}', space=vmem, size = 0x2000, scoped, tag = 'input window, operand 0']
    #allocation4 [shape = 's32[2]{0}', space=sflag, size = 0x8, scoped, tag = 'scoped memory for global_pointer_for_rel_forward.12']
    #allocation5 [shape = 's32[2]{0}', space=sflag, size = 0x8, scoped, tag = 'scoped memory for global_pointer_for_rel_forward.12']
    #allocation6 [shape = 'u8[65536]{0}', space=vmem, size = 0x10000, scoped, tag = 'input window, operand 1, single buffered']
    #allocation7 [shape = 's32[1]{0}', space=sflag, size = 0x4, scoped, tag = 'scoped memory for global_pointer_for_rel_forward.12']
    #allocation8 [shape = 'u8[1024]{0}', space=vmem, size = 0x400, scoped, tag = 'input window, operand 2, single buffered']
    #allocation9 [shape = 'u8[8192]{0}', space=vmem, size = 0x2000, scoped, tag = 'input window, operand 3, single buffered']
    #allocation10 [shape = 's32[1]{0}', space=sflag, size = 0x4, scoped, tag = 'scoped memory for global_pointer_for_rel_forward.12']
    #allocation11 [shape = 'u8[8192]{0}', space=vmem, size = 0x2000, scoped, tag = 'input window, operand 4, single buffered']
    #allocation12 [shape = 'u8[16384]{0}', space=vmem, size = 0x4000, scoped, tag = 'input window, operand 5']
    #allocation13 [shape = 's32[2]{0}', space=sflag, size = 0x8, scoped, tag = 'scoped memory for global_pointer_for_rel_forward.12']
    #allocation14 [shape = 'u8[1024]{0}', space=vmem, size = 0x400, scoped, tag = 'input window, operand 6']
    #allocation15 [shape = 'u8[32768]{0}', space=vmem, size = 0x8000, scoped, tag = 'output window, operand 0']
    %12 = vsyncpa [#allocation4], 0
    %s13 = scalar_lea.sflag [#allocation4], 1
    %14 = vsyncpa %s13, 0
    %15 = vsyncpa [#allocation7], 0
    %16 = vsyncpa [#allocation10], 0
    %17 = vsyncpa [#allocation13], 0
    %s18 = scalar_lea.sflag [#allocation13], 1
    %19 = vsyncpa %s18, 0
    %20 = vsyncpa [#allocation5], 0
    %s21 = scalar_lea.sflag [#allocation5], 1
    %22 = vsyncpa %s21, 0
    loop: start=0, step=1, limit=4
    $region2: #{global_pointer_for_rel_forward.12} parent=1 // loop_pre_header
      _
    $region3: #{global_pointer_for_rel_forward.12} parent=1 // loop_header
      %s24 = sphi 0, %s28
      %p25 = scmp.ge.s32.totalorder %s24, 4
      %s31 = sphi 0, %s43
      %s32 = sphi 0, %s39
      %s33 = sphi 0, %s31
      %s34 = sphi 0, %s32
      %s35 = sphi 0, %s33
      %s36 = sphi 0, %s34
      %s46 = sphi 0, %s48
      %s49 = sphi 0, %s46
      %s50 = sphi 0, %s49
      %s66 = sphi 0, %s50
      %s72 = sphi 0, %s74
      %s75 = sphi 0, %s72
      %s76 = sphi 0, %s75
      %s92 = sphi 0, %s76
      %s98 = sphi 0, %s100
      %s101 = sphi 0, %s98
      %s102 = sphi 0, %s101
      %s118 = sphi 0, %s102
      %s122 = sphi 0, %s122
      %s124 = sphi 0, %s122
      %s125 = sphi 0, %s124
      %s139 = sphi 0, %s125
      %s143 = sphi 0, %s143
      %s145 = sphi 0, %s143
      %s146 = sphi 0, %s145
      %s160 = sphi 0, %s146
      %s166 = sphi 0, %s168
      %s169 = sphi 0, %s166
      %s170 = sphi 0, %s169
      %s186 = sphi 0, %s170
      %s192 = sphi 0, %s194
      %s195 = sphi 0, %s192
      %s196 = sphi 0, %s195
      %s212 = sphi 0, %s196
      %s220 = sphi 0, %s222
      %s223 = sphi 0, %s220
      %s224 = sphi 0, %s223
      %s240 = sphi 0, %s224
    $region4: #{global_pointer_for_rel_forward.12} parent=1 // loop_header_branch
      %27 = sbr.rel (%p25) target = $region8
    $region5: #{global_pointer_for_rel_forward.12} parent=1 // loop_body
      %s29 = ssub.s32 %s24, 1
      %s30 = ssub.s32 %s24, 2
      %s37 = sadd.s32 1, %s32
      %p38 = scmp.ge.s32.totalorder %s37, 1
      %s39 = scalar_select %p38, 0, %s37
      %s40 = sadd.s32 1, %s31
      %s41 = scalar_select %p38, %s40, %s31
      %p42 = scmp.ge.s32.totalorder %s41, 2
      %s43 = scalar_select %p42, 0, %s41
      %s44 = ssub.s32 %s31, %s43
      %p45 = scmp.eq.s32.totalorder %s44, 0
      %s47 = sadd.s32 %s46, 1
      %s48 = scalar_select %p45, %s46, %s47
      %p51 = pneg %p45
      %p52 = scmp.eq.s32.totalorder %s24, 1
      %p53 = por %p51, %p52
      %p54 = scmp.ne.s32.totalorder %s46, %s49
      %p55 = scmp.eq.s32.totalorder %s24, 0
      %p56 = por %p54, %p55
      %p57 = scmp.ne.s32.totalorder %s46, %s49
      %p58 = scmp.eq.s32.totalorder %s29, 1
      %p59 = por %p57, %p58
      %p60 = scmp.ne.s32.totalorder %s49, %s50
      %p61 = scmp.eq.s32.totalorder %s29, 0
      %p62 = por %p60, %p61
      %p63 = scmp.ne.s32.totalorder %s49, %s50
      %p64 = scmp.eq.s32.totalorder %s30, 1
      %p65 = por %p63, %p64
      %p67 = scmp.ne.s32.totalorder %s50, %s66
      %p68 = scmp.eq.s32.totalorder %s30, 0
      %p69 = por %p67, %p68
      %s70 = ssub.s32 %s32, %s39
      %p71 = scmp.eq.s32.totalorder %s70, 0
      %s73 = sadd.s32 %s72, 1
      %s74 = scalar_select %p71, %s72, %s73
      %p77 = pneg %p71
      %p78 = scmp.eq.s32.totalorder %s24, 1
      %p79 = por %p77, %p78
      %p80 = scmp.ne.s32.totalorder %s72, %s75
      %p81 = scmp.eq.s32.totalorder %s24, 0
      %p82 = por %p80, %p81
      %p83 = scmp.ne.s32.totalorder %s72, %s75
      %p84 = scmp.eq.s32.totalorder %s29, 1
      %p85 = por %p83, %p84
      %p86 = scmp.ne.s32.totalorder %s75, %s76
      %p87 = scmp.eq.s32.totalorder %s29, 0
      %p88 = por %p86, %p87
      %p89 = scmp.ne.s32.totalorder %s75, %s76
      %p90 = scmp.eq.s32.totalorder %s30, 1
      %p91 = por %p89, %p90
      %p93 = scmp.ne.s32.totalorder %s76, %s92
      %p94 = scmp.eq.s32.totalorder %s30, 0
      %p95 = por %p93, %p94
      %s96 = ssub.s32 %s32, %s39
      %p97 = scmp.eq.s32.totalorder %s96, 0
      %s99 = sadd.s32 %s98, 1
      %s100 = scalar_select %p97, %s98, %s99
      %p103 = pneg %p97
      %p104 = scmp.eq.s32.totalorder %s24, 1
      %p105 = por %p103, %p104
      %p106 = scmp.ne.s32.totalorder %s98, %s101
      %p107 = scmp.eq.s32.totalorder %s24, 0
      %p108 = por %p106, %p107
      %p109 = scmp.ne.s32.totalorder %s98, %s101
      %p110 = scmp.eq.s32.totalorder %s29, 1
      %p111 = por %p109, %p110
      %p112 = scmp.ne.s32.totalorder %s101, %s102
      %p113 = scmp.eq.s32.totalorder %s29, 0
      %p114 = por %p112, %p113
      %p115 = scmp.ne.s32.totalorder %s101, %s102
      %p116 = scmp.eq.s32.totalorder %s30, 1
      %p117 = por %p115, %p116
      %p119 = scmp.ne.s32.totalorder %s102, %s118
      %p120 = scmp.eq.s32.totalorder %s30, 0
      %p121 = por %p119, %p120
      %s123 = sadd.s32 %s122, 1
      %p126 = scmp.eq.s32.totalorder %s24, 1
      %p127 = scmp.ne.s32.totalorder %s122, %s124
      %p128 = scmp.eq.s32.totalorder %s24, 0
      %p129 = por %p127, %p128
      %p130 = scmp.ne.s32.totalorder %s122, %s124
      %p131 = scmp.eq.s32.totalorder %s29, 1
      %p132 = por %p130, %p131
      %p133 = scmp.ne.s32.totalorder %s124, %s125
      %p134 = scmp.eq.s32.totalorder %s29, 0
      %p135 = por %p133, %p134
      %p136 = scmp.ne.s32.totalorder %s124, %s125
      %p137 = scmp.eq.s32.totalorder %s30, 1
      %p138 = por %p136, %p137
      %p140 = scmp.ne.s32.totalorder %s125, %s139
      %p141 = scmp.eq.s32.totalorder %s30, 0
      %p142 = por %p140, %p141
      %s144 = sadd.s32 %s143, 1
      %p147 = scmp.eq.s32.totalorder %s24, 1
      %p148 = scmp.ne.s32.totalorder %s143, %s145
      %p149 = scmp.eq.s32.totalorder %s24, 0
      %p150 = por %p148, %p149
      %p151 = scmp.ne.s32.totalorder %s143, %s145
      %p152 = scmp.eq.s32.totalorder %s29, 1
      %p153 = por %p151, %p152
      %p154 = scmp.ne.s32.totalorder %s145, %s146
      %p155 = scmp.eq.s32.totalorder %s29, 0
      %p156 = por %p154, %p155
      %p157 = scmp.ne.s32.totalorder %s145, %s146
      %p158 = scmp.eq.s32.totalorder %s30, 1
      %p159 = por %p157, %p158
      %p161 = scmp.ne.s32.totalorder %s146, %s160
      %p162 = scmp.eq.s32.totalorder %s30, 0
      %p163 = por %p161, %p162
      %s164 = ssub.s32 %s31, %s43
      %p165 = scmp.eq.s32.totalorder %s164, 0
      %s167 = sadd.s32 %s166, 1
      %s168 = scalar_select %p165, %s166, %s167
      %p171 = pneg %p165
      %p172 = scmp.eq.s32.totalorder %s24, 1
      %p173 = por %p171, %p172
      %p174 = scmp.ne.s32.totalorder %s166, %s169
      %p175 = scmp.eq.s32.totalorder %s24, 0
      %p176 = por %p174, %p175
      %p177 = scmp.ne.s32.totalorder %s166, %s169
      %p178 = scmp.eq.s32.totalorder %s29, 1
      %p179 = por %p177, %p178
      %p180 = scmp.ne.s32.totalorder %s169, %s170
      %p181 = scmp.eq.s32.totalorder %s29, 0
      %p182 = por %p180, %p181
      %p183 = scmp.ne.s32.totalorder %s169, %s170
      %p184 = scmp.eq.s32.totalorder %s30, 1
      %p185 = por %p183, %p184
      %p187 = scmp.ne.s32.totalorder %s170, %s186
      %p188 = scmp.eq.s32.totalorder %s30, 0
      %p189 = por %p187, %p188
      %s190 = ssub.s32 %s31, %s43
      %p191 = scmp.eq.s32.totalorder %s190, 0
      %s193 = sadd.s32 %s192, 1
      %s194 = scalar_select %p191, %s192, %s193
      %p197 = pneg %p191
      %p198 = scmp.eq.s32.totalorder %s24, 1
      %p199 = por %p197, %p198
      %p200 = scmp.ne.s32.totalorder %s192, %s195
      %p201 = scmp.eq.s32.totalorder %s24, 0
      %p202 = por %p200, %p201
      %p203 = scmp.ne.s32.totalorder %s192, %s195
      %p204 = scmp.eq.s32.totalorder %s29, 1
      %p205 = por %p203, %p204
      %p206 = scmp.ne.s32.totalorder %s195, %s196
      %p207 = scmp.eq.s32.totalorder %s29, 0
      %p208 = por %p206, %p207
      %p209 = scmp.ne.s32.totalorder %s195, %s196
      %p210 = scmp.eq.s32.totalorder %s30, 1
      %p211 = por %p209, %p210
      %p213 = scmp.ne.s32.totalorder %s196, %s212
      %p214 = scmp.eq.s32.totalorder %s30, 0
      %p215 = por %p213, %p214
      %s216 = ssub.s32 %s31, %s43
      %s217 = ssub.s32 %s32, %s39
      %s218 = sor.u32 %s216, %s217
      %p219 = scmp.eq.s32.totalorder %s218, 0
      %s221 = sadd.s32 %s220, 1
      %s222 = scalar_select %p219, %s220, %s221
      %p225 = pneg %p219
      %p226 = scmp.eq.s32.totalorder %s24, 1
      %p227 = por %p225, %p226
      %p228 = scmp.ne.s32.totalorder %s220, %s223
      %p229 = scmp.eq.s32.totalorder %s24, 0
      %p230 = por %p228, %p229
      %p231 = scmp.ne.s32.totalorder %s220, %s223
      %p232 = scmp.eq.s32.totalorder %s29, 1
      %p233 = por %p231, %p232
      %p234 = scmp.ne.s32.totalorder %s223, %s224
      %p235 = scmp.eq.s32.totalorder %s29, 0
      %p236 = por %p234, %p235
      %p237 = scmp.ne.s32.totalorder %s223, %s224
      %p238 = scmp.eq.s32.totalorder %s30, 1
      %p239 = por %p237, %p238
      %p241 = scmp.ne.s32.totalorder %s224, %s240
      %p242 = scmp.eq.s32.totalorder %s30, 0
      %p243 = por %p241, %p242
      %p244 = scmp.le.s32.totalorder 1, %s24
      %p245 = scmp.lt.s32.totalorder %s24, 3
      %p246 = pnand %p244, %p245
      %p247 = pneg %p246
      // Predicated region
      $region9: #{global_pointer_for_rel_forward.12} parent=5 // pred_check
        _
      $region10: #{global_pointer_for_rel_forward.12} parent=5 // pred_check_branch
        %249 = sbr.rel (%p246) target = $region12
      $region11: #{global_pointer_for_rel_forward.12} parent=5 // pred_region
        %s250 = ssub.s32 %s24, 1
        // Predicated region
        $region13: #{global_pointer_for_rel_forward.12} parent=11 // pred_check
          %p251 = pneg %p88
        $region14: #{global_pointer_for_rel_forward.12} parent=11 // pred_check_branch
          %253 = sbr.rel (%p251) target = $region16
        $region15: #{global_pointer_for_rel_forward.12} parent=11 // pred_region
          %s254 = smul.u32 2, %s34
          %s256 = ssub.s32 2048, 2048
          %257 = vsyncadd [#allocation7], %s256
          %s258 = smul.addr %s254, 64
          %s259 = scalar_lea.hbm %s1, %s258
          %s260 = sshll.u32 [#allocation6], 4
          %s261 = int_to_ptr.vmem [resolvable:$true] %s260
          %266 = dma.hbm_to_vmem [thread:$0]  %s259, 2048, %s261, [#allocation7], 128, 128, 8
        $region16: #{global_pointer_for_rel_forward.12} parent=11 // pred_fallthru
          _
        // Predicated region
        $region17: #{global_pointer_for_rel_forward.12} parent=11 // pred_check
          %p267 = pneg %p114
        $region18: #{global_pointer_for_rel_forward.12} parent=11 // pred_check_branch
          %269 = sbr.rel (%p267) target = $region20
        $region19: #{global_pointer_for_rel_forward.12} parent=11 // pred_region
          %s270 = smul.u32 2, %s34
          %s272 = ssub.s32 32, 32
          %273 = vsyncadd [#allocation7], %s272
          %s274 = smul.addr %s270, 16
          %s275 = scalar_lea.hbm %s2, %s274
          %s277 = sshll.u32 [#allocation8], 4
          %s278 = int_to_ptr.vmem [resolvable:$true] %s277
          %280 = dma.hbm_to_vmem [thread:$0]  %s275, 32, %s278, [#allocation7]
        $region20: #{global_pointer_for_rel_forward.12} parent=11 // pred_fallthru
          _
        // Predicated region
        $region21: #{global_pointer_for_rel_forward.12} parent=11 // pred_check
          %p281 = pneg %p135
        $region22: #{global_pointer_for_rel_forward.12} parent=11 // pred_check_branch
          %283 = sbr.rel (%p281) target = $region24
        $region23: #{global_pointer_for_rel_forward.12} parent=11 // pred_region
          %s285 = ssub.s32 256, 256
          %286 = vsyncadd [#allocation10], %s285
          %s287 = sshll.u32 [#allocation9], 4
          %s288 = int_to_ptr.vmem [resolvable:$true] %s287
          %293 = dma.hbm_to_vmem [thread:$0]  %s3, 256, %s288, [#allocation10], 128, 128, 8
        $region24: #{global_pointer_for_rel_forward.12} parent=11 // pred_fallthru
          _
        // Predicated region
        $region25: #{global_pointer_for_rel_forward.12} parent=11 // pred_check
          %p294 = pneg %p156
        $region26: #{global_pointer_for_rel_forward.12} parent=11 // pred_check_branch
          %296 = sbr.rel (%p294) target = $region28
        $region27: #{global_pointer_for_rel_forward.12} parent=11 // pred_region
          %s298 = ssub.s32 256, 256
          %299 = vsyncadd [#allocation10], %s298
          %s300 = sshll.u32 [#allocation11], 4
          %s301 = int_to_ptr.vmem [resolvable:$true] %s300
          %306 = dma.hbm_to_vmem [thread:$0]  %s4, 256, %s301, [#allocation10], 128, 128, 8
        $region28: #{global_pointer_for_rel_forward.12} parent=11 // pred_fallthru
          _
      $region12: #{global_pointer_for_rel_forward.12} parent=5 // pred_fallthru
        _
      %p307 = scmp.lt.s32.totalorder %s24, 2
      // Predicated region
      $region29: #{global_pointer_for_rel_forward.12} parent=5 // pred_check
        %p308 = pneg %p307
      $region30: #{global_pointer_for_rel_forward.12} parent=5 // pred_check_branch
        %310 = sbr.rel (%p308) target = $region32
      $region31: #{global_pointer_for_rel_forward.12} parent=5 // pred_region
        // Predicated region
        $region33: #{global_pointer_for_rel_forward.12} parent=31 // pred_check
          %p311 = pneg %p56
        $region34: #{global_pointer_for_rel_forward.12} parent=31 // pred_check_branch
          %313 = sbr.rel (%p311) target = $region36
        $region35: #{global_pointer_for_rel_forward.12} parent=31 // pred_region
          %s314 = sand.u32 %s46, 1
          %s315 = scalar_lea.sflag [#allocation4], %s314
          %s316 = sand.u32 %s46, 1
          %s317 = smul.addr %s316, 8
          %s318 = scalar_lea.vmem [#allocation3], %s317
          %s320 = ssub.s32 128, 128
          %321 = vsyncadd %s315, %s320
          %s322 = smul.addr %s31, 2
          %s323 = smul.addr %s322, 64
          %s324 = scalar_lea.hbm %s0, %s323
          %s325 = sshll.u32 %s318, 4
          %s326 = int_to_ptr.vmem [resolvable:$true] %s325
          %331 = dma.hbm_to_vmem [thread:$0]  %s324, 128, %s326, %s315, 64, 64, 4
        $region36: #{global_pointer_for_rel_forward.12} parent=31 // pred_fallthru
          _
        // Predicated region
        $region37: #{global_pointer_for_rel_forward.12} parent=31 // pred_check
          %p332 = pneg %p176
        $region38: #{global_pointer_for_rel_forward.12} parent=31 // pred_check_branch
          %334 = sbr.rel (%p332) target = $region40
        $region39: #{global_pointer_for_rel_forward.12} parent=31 // pred_region
          %s335 = sand.u32 %s24, 1
          %s336 = scalar_lea.sflag [#allocation13], %s335
          %s337 = sand.u32 %s166, 1
          %s338 = smul.addr %s337, 16
          %s339 = scalar_lea.vmem [#allocation12], %s338
          %s341 = ssub.s32 256, 256
          %342 = vsyncadd %s336, %s341
          %s343 = smul.addr %s31, 2
          %s344 = smul.addr %s343, 128
          %s345 = scalar_lea.hbm %s5, %s344
          %s346 = sshll.u32 %s339, 4
          %s347 = int_to_ptr.vmem [resolvable:$true] %s346
          %352 = dma.hbm_to_vmem [thread:$0]  %s345, 256, %s347, %s336, 128, 128, 8
        $region40: #{global_pointer_for_rel_forward.12} parent=31 // pred_fallthru
          _
        // Predicated region
        $region41: #{global_pointer_for_rel_forward.12} parent=31 // pred_check
          %p353 = pneg %p202
        $region42: #{global_pointer_for_rel_forward.12} parent=31 // pred_check_branch
          %355 = sbr.rel (%p353) target = $region44
        $region43: #{global_pointer_for_rel_forward.12} parent=31 // pred_region
          %s356 = sand.u32 %s24, 1
          %s357 = scalar_lea.sflag [#allocation13], %s356
          %s358 = sand.u32 %s192, 1
          %s359 = scalar_lea.vmem [#allocation14], %s358
          %s361 = ssub.s32 16, 16
          %362 = vsyncadd %s357, %s361
          %s363 = smul.addr %s31, 16
          %s364 = scalar_lea.hbm %s6, %s363
          %s366 = sshll.u32 %s359, 4
          %s367 = int_to_ptr.vmem [resolvable:$true] %s366
          %369 = dma.hbm_to_vmem [thread:$0]  %s364, 16, %s367, %s357
        $region44: #{global_pointer_for_rel_forward.12} parent=31 // pred_fallthru
          _
      $region32: #{global_pointer_for_rel_forward.12} parent=5 // pred_fallthru
        _
      %p370 = scmp.le.s32.totalorder 1, %s24
      %p371 = scmp.lt.s32.totalorder %s24, 3
      %p372 = pnand %p370, %p371
      %p373 = pneg %p372
      // Predicated region
      $region45: #{global_pointer_for_rel_forward.12} parent=5 // pred_check
        _
      $region46: #{global_pointer_for_rel_forward.12} parent=5 // pred_check_branch
        %375 = sbr.rel (%p372) target = $region48
      $region47: #{global_pointer_for_rel_forward.12} parent=5 // pred_region
        %s376 = ssub.s32 %s24, 1
        %s377 = sand.u32 %s49, 1
        %s378 = scalar_lea.sflag [#allocation4], %s377
        %s379 = sand.u32 %s49, 1
        %s380 = smul.addr %s379, 8
        %s381 = scalar_lea.vmem [#allocation3], %s380
        // Predicated region
        $region49: #{global_pointer_for_rel_forward.12} parent=47 // pred_check
          %p382 = pneg %p62
        $region50: #{global_pointer_for_rel_forward.12} parent=47 // pred_check_branch
          %384 = sbr.rel (%p382) target = $region52
        $region51: #{global_pointer_for_rel_forward.12} parent=47 // pred_region
          %385 = dma.done %s378, 128
        $region52: #{global_pointer_for_rel_forward.12} parent=47 // pred_fallthru
          _
        // Predicated region
        $region53: #{global_pointer_for_rel_forward.12} parent=47 // pred_check
          %p386 = pneg %p88
        $region54: #{global_pointer_for_rel_forward.12} parent=47 // pred_check_branch
          %388 = sbr.rel (%p386) target = $region56
        $region55: #{global_pointer_for_rel_forward.12} parent=47 // pred_region
          %389 = dma.done [#allocation7], 2048
        $region56: #{global_pointer_for_rel_forward.12} parent=47 // pred_fallthru
          _
        // Predicated region
        $region57: #{global_pointer_for_rel_forward.12} parent=47 // pred_check
          %p390 = pneg %p114
        $region58: #{global_pointer_for_rel_forward.12} parent=47 // pred_check_branch
          %392 = sbr.rel (%p390) target = $region60
        $region59: #{global_pointer_for_rel_forward.12} parent=47 // pred_region
          %393 = dma.done [#allocation7], 32
        $region60: #{global_pointer_for_rel_forward.12} parent=47 // pred_fallthru
          _
        // Predicated region
        $region61: #{global_pointer_for_rel_forward.12} parent=47 // pred_check
          %p394 = pneg %p135
        $region62: #{global_pointer_for_rel_forward.12} parent=47 // pred_check_branch
          %396 = sbr.rel (%p394) target = $region64
        $region63: #{global_pointer_for_rel_forward.12} parent=47 // pred_region
          %397 = dma.done [#allocation10], 256
        $region64: #{global_pointer_for_rel_forward.12} parent=47 // pred_fallthru
          _
        // Predicated region
        $region65: #{global_pointer_for_rel_forward.12} parent=47 // pred_check
          %p398 = pneg %p156
        $region66: #{global_pointer_for_rel_forward.12} parent=47 // pred_check_branch
          %400 = sbr.rel (%p398) target = $region68
        $region67: #{global_pointer_for_rel_forward.12} parent=47 // pred_region
          %401 = dma.done [#allocation10], 256
        $region68: #{global_pointer_for_rel_forward.12} parent=47 // pred_fallthru
          _
        %s402 = sand.u32 %s29, 1
        %s403 = scalar_lea.sflag [#allocation13], %s402
        %s404 = sand.u32 %s169, 1
        %s405 = smul.addr %s404, 16
        %s406 = scalar_lea.vmem [#allocation12], %s405
        // Predicated region
        $region69: #{global_pointer_for_rel_forward.12} parent=47 // pred_check
          %p407 = pneg %p182
        $region70: #{global_pointer_for_rel_forward.12} parent=47 // pred_check_branch
          %409 = sbr.rel (%p407) target = $region72
        $region71: #{global_pointer_for_rel_forward.12} parent=47 // pred_region
          %410 = dma.done %s403, 256
        $region72: #{global_pointer_for_rel_forward.12} parent=47 // pred_fallthru
          _
        %s411 = sand.u32 %s29, 1
        %s412 = scalar_lea.sflag [#allocation13], %s411
        %s413 = sand.u32 %s195, 1
        %s414 = scalar_lea.vmem [#allocation14], %s413
        // Predicated region
        $region73: #{global_pointer_for_rel_forward.12} parent=47 // pred_check
          %p415 = pneg %p208
        $region74: #{global_pointer_for_rel_forward.12} parent=47 // pred_check_branch
          %417 = sbr.rel (%p415) target = $region76
        $region75: #{global_pointer_for_rel_forward.12} parent=47 // pred_region
          %418 = dma.done %s412, 16
        $region76: #{global_pointer_for_rel_forward.12} parent=47 // pred_fallthru
          _
        %s419 = sand.u32 %s49, 1
        %s420 = scalar_lea.sflag [#allocation4], %s419
        %s421 = sand.u32 %s49, 1
        %s422 = smul.addr %s421, 8
        %s423 = scalar_lea.vmem [#allocation3], %s422
        %p424 = pneg %p62
        %p425 = pneg %p59
        %p426 = pneg %p88
        %p427 = pneg %p85
        %p428 = pneg %p114
        %p429 = pneg %p111
        %p430 = pneg %p135
        %p431 = pneg %p132
        %p432 = pneg %p156
        %p433 = pneg %p153
        %s434 = sand.u32 %s29, 1
        %s435 = scalar_lea.sflag [#allocation13], %s434
        %s436 = sand.u32 %s169, 1
        %s437 = smul.addr %s436, 16
        %s438 = scalar_lea.vmem [#allocation12], %s437
        %p439 = pneg %p182
        %p440 = pneg %p179
        %s441 = sand.u32 %s29, 1
        %s442 = scalar_lea.sflag [#allocation13], %s441
        %s443 = sand.u32 %s195, 1
        %s444 = scalar_lea.vmem [#allocation14], %s443
        %p445 = pneg %p208
        %p446 = pneg %p205
        %p447 = pneg %p236
        %p448 = pneg %p233
        %s449 = sand.u32 %s223, 1
        %s450 = scalar_lea.sflag [#allocation5], %s449
        %s451 = sand.u32 %s223, 1
        %s452 = smul.addr %s451, 32
        %s453 = scalar_lea.vmem [#allocation15], %s452
        %s454 = smul.u32 2, %s34
        %s455 = smul.u32 2, %s34
        %s456 = smul.u32 2, %s34
        %v458 = vld [vmem:[%s381] sm:$0xf]
        %v459 = vld [vmem:[%s381 + $0x4] sm:$0xf]
        %v460 = vld [vmem:[#allocation6] sm:$0xff]
        %v461 = vld [vmem:[#allocation6 + $0x8] sm:$0xff]
        %v462 = vld [vmem:[#allocation6 + $0x10] sm:$0xff]
        %v463 = vld [vmem:[#allocation6 + $0x18] sm:$0xff]
        %v464 = vld [vmem:[#allocation6 + $0x20] sm:$0xff]
        %v465 = vld [vmem:[#allocation6 + $0x28] sm:$0xff]
        %v466 = vld [vmem:[#allocation6 + $0x30] sm:$0xff]
        %v467 = vld [vmem:[#allocation6 + $0x38] sm:$0xff]
        %v468 = vld [vmem:[#allocation6 + $0x40] sm:$0xff]
        %v469 = vld [vmem:[#allocation6 + $0x48] sm:$0xff]
        %v470 = vld [vmem:[#allocation6 + $0x50] sm:$0xff]
        %v471 = vld [vmem:[#allocation6 + $0x58] sm:$0xff]
        %v472 = vld [vmem:[#allocation6 + $0x60] sm:$0xff]
        %v473 = vld [vmem:[#allocation6 + $0x68] sm:$0xff]
        %v474 = vld [vmem:[#allocation6 + $0x70] sm:$0xff]
        %v475 = vld [vmem:[#allocation6 + $0x78] sm:$0xff]
        %v476 = vld [vmem:[#allocation8] sm:$0x3]
        %v478 = vlaneseq
        %v479 = vshrl.u32 %v478, 7
        %v480 = vsub.s32 0, %v479
        %v481 = vrot.slane %v476, %v480
        %v482 = vlaneseq
        %v483 = vshrl.u32 %v482, 7
        %v484 = vsub.s32 1, %v483
        %v485 = vrot.slane %v476, %v484
        %v490 = vunpack.c.l.b16 %v458
        %v491 = vunpack.c.l.b16 %v459
        %v492 = vpack.c.b16 %v491, %v490
        %v510 = vunpack.c.l.b16 %v460
        %v511 = vunpack.c.h.b16 %v460
        %v512 = vunpack.c.l.b16 %v461
        %v513 = vunpack.c.h.b16 %v461
        %v514 = vunpack.c.l.b16 %v462
        %v515 = vunpack.c.h.b16 %v462
        %v516 = vunpack.c.l.b16 %v463
        %v517 = vunpack.c.h.b16 %v463
        %v518 = vunpack.c.l.b16 %v464
        %v519 = vunpack.c.h.b16 %v464
        %v520 = vunpack.c.l.b16 %v465
        %v521 = vunpack.c.h.b16 %v465
        %v522 = vunpack.c.l.b16 %v466
        %v523 = vunpack.c.h.b16 %v466
        %v524 = vunpack.c.l.b16 %v467
        %v525 = vunpack.c.h.b16 %v467
        %v526 = vunpack.c.l.b16 %v468
        %v527 = vunpack.c.h.b16 %v468
        %v528 = vunpack.c.l.b16 %v469
        %v529 = vunpack.c.h.b16 %v469
        %v530 = vunpack.c.l.b16 %v470
        %v531 = vunpack.c.h.b16 %v470
        %v532 = vunpack.c.l.b16 %v471
        %v533 = vunpack.c.h.b16 %v471
        %v534 = vunpack.c.l.b16 %v472
        %v535 = vunpack.c.h.b16 %v472
        %v536 = vunpack.c.l.b16 %v473
        %v537 = vunpack.c.h.b16 %v473
        %v538 = vunpack.c.l.b16 %v474
        %v539 = vunpack.c.h.b16 %v474
        %v540 = vunpack.c.l.b16 %v475
        %v541 = vunpack.c.h.b16 %v475
        %v542 = vpack.c.b16 %v512, %v510
        %v543 = vpack.c.b16 %v513, %v511
        %v544 = vpack.c.b16 %v516, %v514
        %v545 = vpack.c.b16 %v517, %v515
        %v546 = vpack.c.b16 %v520, %v518
        %v547 = vpack.c.b16 %v521, %v519
        %v548 = vpack.c.b16 %v524, %v522
        %v549 = vpack.c.b16 %v525, %v523
        %v550 = vpack.c.b16 %v528, %v526
        %v551 = vpack.c.b16 %v529, %v527
        %v552 = vpack.c.b16 %v532, %v530
        %v553 = vpack.c.b16 %v533, %v531
        %v554 = vpack.c.b16 %v536, %v534
        %v555 = vpack.c.b16 %v537, %v535
        %v556 = vpack.c.b16 %v540, %v538
        %v557 = vpack.c.b16 %v541, %v539
        %574 = vmatprep.subr.bf16.mxu0 %v543
        %575 = vmatpush1.bf16.msra.mxu0 %v542
        %576 = vmatprep.subr.bf16.mxu0 %v545
        %577 = vmatpush1.bf16.msra.mxu0 %v544
        %578 = vmatprep.subr.bf16.mxu0 %v547
        %579 = vmatpush1.bf16.msra.mxu0 %v546
        %580 = vmatprep.subr.bf16.mxu0 %v549
        %581 = vmatpush1.bf16.msra.mxu0 %v548
        %582 = vmatprep.subr.bf16.mxu0 %v551
        %583 = vmatpush1.bf16.msra.mxu0 %v550
        %584 = vmatprep.subr.bf16.mxu0 %v553
        %585 = vmatpush1.bf16.msra.mxu0 %v552
        %586 = vmatprep.subr.bf16.mxu0 %v555
        %587 = vmatpush1.bf16.msra.mxu0 %v554
        %588 = vmatprep.subr.bf16.mxu0 %v557
        %589 = vmatpush1.bf16.msra.mxu0 %v556
        %590 = vmatprep.subr.bf16.mxu0 0
        %591 = vmatpush1.bf16.msra.mxu0 0
        %592 = vmatprep.subr.bf16.mxu0 0
        %593 = vmatpush1.bf16.msra.mxu0 0
        %594 = vmatprep.subr.bf16.mxu0 0
        %595 = vmatpush1.bf16.msra.mxu0 0
        %596 = vmatprep.subr.bf16.mxu0 0
        %597 = vmatpush1.bf16.msra.mxu0 0
        %598 = vmatprep.subr.bf16.mxu0 0
        %599 = vmatpush1.bf16.msra.mxu0 0
        %600 = vmatprep.subr.bf16.mxu0 0
        %601 = vmatpush1.bf16.msra.mxu0 0
        %602 = vmatprep.subr.bf16.mxu0 0
        %603 = vmatpush1.bf16.msra.mxu0 0
        %604 = vmatprep.subr.bf16.mxu0 0
        %605 = vmatpush1.bf16.msra.mxu0 0
        %606 = vmatprep.mubr.bf16.mxu0 0
        %607 = vmatmul.mubr.bf16.gmra.mrb[0].mxu0 %v492
        %v608 = vpop.f32.mrb[0].mxu0
        %v609 = vadd.f32 %v481, %v608
        %v610 = vpop.f32.mrb[0].mxu0
        %v611 = vadd.f32 %v485, %v610
        %v612 = vpop.f32.mrb[0].mxu0
        %v613 = vadd.f32 %v481, %v612
        %v614 = vpop.f32.mrb[0].mxu0
        %v615 = vadd.f32 %v485, %v614
        %616 = vdwg.mxu0
        %v617 = vld [vmem:[#allocation9] sm:$0xff]
        %v618 = vld [vmem:[#allocation9 + $0x8] sm:$0xff]
        %v619 = vld [vmem:[#allocation11] sm:$0xff]
        %v620 = vld [vmem:[#allocation11 + $0x8] sm:$0xff]
        %v621 = vld [vmem:[%s406] sm:$0xff]
        %v622 = vld [vmem:[%s406 + $0x8] sm:$0xff]
        %v623 = vld [vmem:[%s414] sm:$0x1]
        %625 = vset.pattern.permute.xlu0 0
        %626 = vperm.xlu0 %625, %v621
        %v627 = vpop.permute.xlu0 %626
        %630 = vset.pattern.permute.xlu0 0
        %631 = vperm.xlu0 %630, %v622
        %v632 = vpop.permute.xlu0 %631
        %v635 = vlaneseq
        %v636 = vshrl.u32 %v635, 7
        %v637 = vsub.s32 0, %v636
        %v638 = vrot.slane %v623, %v637
        %v640 = vmul.f32 %v627, %v638
        %v641 = vmul.f32 %v632, %v638
        %v642 = vlaneseq
        %v643 = vshrl.u32 %v642, 7
        %v644 = vadd.s32 %v643, 8
        %v645 = vlaneseq
        %v646 = vand.u32 %v645, 127
        %v647 = vsub.f32 %v640, 1.0
        %v648 = vsub.f32 %v641, 1.0
        %v649 = vmul.f32 %v647, 1.25e+11
        %v650 = vmul.f32 %v648, 1.25e+11
        %vm651 = vcmp.gt.s32.totalorder %v643, %v646
        %vm652 = vcmp.gt.s32.totalorder %v644, %v646
        %v653 = vsel %vm651, 1.25e+11, 0.0
        %v654 = vsel %vm652, 1.25e+11, 0.0
        %v655 = vsub.f32 %v649, %v653
        %v656 = vsub.f32 %v650, %v654
        %v657 = vmul.f32 %v609, %v617
        %v658 = vmul.f32 %v613, %v618
        %661 = vrot.lane.b32.xlu0 %v619, 32
        %v662 = vpop.permute.xlu0 %661
        %663 = vrot.lane.b32.xlu0 %v620, 32
        %v664 = vpop.permute.xlu0 %663
        %v667 = vmul.f32 %v609, %v662
        %v668 = vmul.f32 %v613, %v664
        %671 = vrot.lane.b32.xlu0 %v667, 96
        %v672 = vpop.permute.xlu0 %671
        %673 = vrot.lane.b32.xlu0 %v668, 96
        %v674 = vpop.permute.xlu0 %673
        %v677 = vsub.f32 %v657, %v672
        %v678 = vsub.f32 %v658, %v674
        %vm679 = vcmask 261120
        %680 = vst.msk [vmem:[#allocation2] sm:$0xff] %vm679, %v677
        %681 = vst.msk [vmem:[#allocation2 + $0x8] sm:$0xff] %vm679, %v678
        %684 = vrot.lane.b32.xlu0 %v617, 32
        %v685 = vpop.permute.xlu0 %684
        %686 = vrot.lane.b32.xlu0 %v618, 32
        %v687 = vpop.permute.xlu0 %686
        %v690 = vmul.f32 %v609, %v685
        %v691 = vmul.f32 %v613, %v687
        %v692 = vmul.f32 %v609, %v619
        %v693 = vmul.f32 %v613, %v620
        %696 = vrot.lane.b32.xlu0 %v692, 32
        %v697 = vpop.permute.xlu0 %696
        %698 = vrot.lane.b32.xlu0 %v693, 32
        %v699 = vpop.permute.xlu0 %698
        %v702 = vadd.f32 %v690, %v697
        %v703 = vadd.f32 %v691, %v699
        %vm704 = vcmask 523520
        %705 = vst.msk [vmem:[#allocation2] sm:$0xff] %vm704, %v702
        %706 = vst.msk [vmem:[#allocation2 + $0x8] sm:$0xff] %vm704, %v703
        %707 = vrot.lane.b32.xlu0 %v617, 64
        %v708 = vpop.permute.xlu0 %707
        %709 = vrot.lane.b32.xlu0 %v618, 64
        %v710 = vpop.permute.xlu0 %709
        %v713 = vmul.f32 %v609, %v708
        %v714 = vmul.f32 %v613, %v710
        %715 = vrot.lane.b32.xlu0 %v619, 96
        %v716 = vpop.permute.xlu0 %715
        %717 = vrot.lane.b32.xlu0 %v620, 96
        %v718 = vpop.permute.xlu0 %717
        %v721 = vmul.f32 %v609, %v716
        %v722 = vmul.f32 %v613, %v718
        %725 = vrot.lane.b32.xlu0 %v721, 96
        %v726 = vpop.permute.xlu0 %725
        %727 = vrot.lane.b32.xlu0 %v722, 96
        %v728 = vpop.permute.xlu0 %727
        %v731 = vsub.f32 %v713, %v726
        %v732 = vsub.f32 %v714, %v728
        %vm733 = vcmask 785920
        %734 = vst.msk [vmem:[#allocation2] sm:$0xff] %vm733, %v731
        %735 = vst.msk [vmem:[#allocation2 + $0x8] sm:$0xff] %vm733, %v732
        %736 = vrot.lane.b32.xlu0 %v617, 96
        %v737 = vpop.permute.xlu0 %736
        %738 = vrot.lane.b32.xlu0 %v618, 96
        %v739 = vpop.permute.xlu0 %738
        %v742 = vmul.f32 %v609, %v737
        %v743 = vmul.f32 %v613, %v739
        %744 = vrot.lane.b32.xlu0 %v619, 64
        %v745 = vpop.permute.xlu0 %744
        %746 = vrot.lane.b32.xlu0 %v620, 64
        %v747 = vpop.permute.xlu0 %746
        %v750 = vmul.f32 %v609, %v745
        %v751 = vmul.f32 %v613, %v747
        %754 = vrot.lane.b32.xlu0 %v750, 32
        %v755 = vpop.permute.xlu0 %754
        %756 = vrot.lane.b32.xlu0 %v751, 32
        %v757 = vpop.permute.xlu0 %756
        %v760 = vadd.f32 %v742, %v755
        %v761 = vadd.f32 %v743, %v757
        %vm762 = vcmask 1048320
        %763 = vst.msk [vmem:[#allocation2] sm:$0xff] %vm762, %v760
        %764 = vst.msk [vmem:[#allocation2 + $0x8] sm:$0xff] %vm762, %v761
        %v765 = vld [vmem:[#allocation2] sm:$0xff]
        %v766 = vld [vmem:[#allocation2 + $0x8] sm:$0xff]
        %v767 = vpack.c.bf16 %v766, %v765
        %769 = vrot.lane.b32.xlu0 %v767, 64
        %v770 = vpop.permute.xlu0 %769
        %vm771 = vcmask 523264
        %v773 = vsel %vm771, %v767, 0
        %v776 = vsel %vm771, %v770, 0
        %778 = vmatprep.subr.bf16.mxu0 0
        %779 = vmatpush1.bf16.xpose.msra.mxu0 %v776
        %780 = vmatprep.subr.bf16.mxu0 0
        %781 = vmatpush1.bf16.xpose.msra.mxu0 0
        %782 = vmatprep.subr.bf16.mxu0 0
        %783 = vmatpush1.bf16.xpose.msra.mxu0 0
        %784 = vmatprep.subr.bf16.mxu0 0
        %785 = vmatpush1.bf16.xpose.msra.mxu0 0
        %786 = vmatprep.subr.bf16.mxu0 0
        %787 = vmatpush1.bf16.xpose.msra.mxu0 0
        %788 = vmatprep.subr.bf16.mxu0 0
        %789 = vmatpush1.bf16.xpose.msra.mxu0 0
        %790 = vmatprep.subr.bf16.mxu0 0
        %791 = vmatpush1.bf16.xpose.msra.mxu0 0
        %792 = vmatprep.subr.bf16.mxu0 0
        %793 = vmatpush1.bf16.xpose.msra.mxu0 0
        %794 = vmatprep.subr.bf16.mxu0 0
        %795 = vmatpush1.bf16.xpose.msra.mxu0 0
        %796 = vmatprep.subr.bf16.mxu0 0
        %797 = vmatpush1.bf16.xpose.msra.mxu0 0
        %798 = vmatprep.subr.bf16.mxu0 0
        %799 = vmatpush1.bf16.xpose.msra.mxu0 0
        %800 = vmatprep.subr.bf16.mxu0 0
        %801 = vmatpush1.bf16.xpose.msra.mxu0 0
        %802 = vmatprep.subr.bf16.mxu0 0
        %803 = vmatpush1.bf16.xpose.msra.mxu0 0
        %804 = vmatprep.subr.bf16.mxu0 0
        %805 = vmatpush1.bf16.xpose.msra.mxu0 0
        %806 = vmatprep.subr.bf16.mxu0 0
        %807 = vmatpush1.bf16.xpose.msra.mxu0 0
        %808 = vmatprep.subr.bf16.mxu0 0
        %809 = vmatpush1.bf16.xpose.msra.mxu0 0
        %810 = vmatprep.mubr.bf16.mxu0 0
        %811 = vmatmul.mubr.bf16.gmra.mrb[0].mxu0 %v773
        %v812 = vpop.f32.mrb[0].mxu0
        %v813 = vadd.f32 0.0, %v812
        %v814 = vpop.f32.mrb[0].mxu0
        %v815 = vpop.f32.mrb[0].mxu0
        %v816 = vadd.f32 0.0, %v815
        %v817 = vpop.f32.mrb[0].mxu0
        %818 = vdwg.mxu0
        %v819 = vmul.f32 %v813, %v640
        %v820 = vmul.f32 %v816, %v641
        %v821 = vadd.f32 %v819, %v655
        %v822 = vadd.f32 %v820, %v656
        %vm823 = vcmask 130048
        %824 = vst.msk [vmem:[%s453] sm:$0xff] %vm823, %v821
        %825 = vst.msk [vmem:[%s453 + $0x8] sm:$0xff] %vm823, %v822
        %v826 = vmul.f32 %v611, %v617
        %v827 = vmul.f32 %v615, %v618
        %v828 = vmul.f32 %v611, %v662
        %v829 = vmul.f32 %v615, %v664
        %832 = vrot.lane.b32.xlu0 %v828, 96
        %v833 = vpop.permute.xlu0 %832
        %834 = vrot.lane.b32.xlu0 %v829, 96
        %v835 = vpop.permute.xlu0 %834
        %v838 = vsub.f32 %v826, %v833
        %v839 = vsub.f32 %v827, %v835
        %s840 = scalar_lea.vmem [#allocation2], 16
        %841 = vst.msk [vmem:[%s840] sm:$0xff] %vm679, %v838
        %842 = vst.msk [vmem:[%s840 + $0x8] sm:$0xff] %vm679, %v839
        %v843 = vmul.f32 %v611, %v685
        %v844 = vmul.f32 %v615, %v687
        %v845 = vmul.f32 %v611, %v619
        %v846 = vmul.f32 %v615, %v620
        %849 = vrot.lane.b32.xlu0 %v845, 32
        %v850 = vpop.permute.xlu0 %849
        %851 = vrot.lane.b32.xlu0 %v846, 32
        %v852 = vpop.permute.xlu0 %851
        %v855 = vadd.f32 %v843, %v850
        %v856 = vadd.f32 %v844, %v852
        %857 = vst.msk [vmem:[%s840] sm:$0xff] %vm704, %v855
        %858 = vst.msk [vmem:[%s840 + $0x8] sm:$0xff] %vm704, %v856
        %v859 = vmul.f32 %v611, %v708
        %v860 = vmul.f32 %v615, %v710
        %v861 = vmul.f32 %v611, %v716
        %v862 = vmul.f32 %v615, %v718
        %865 = vrot.lane.b32.xlu0 %v861, 96
        %v866 = vpop.permute.xlu0 %865
        %867 = vrot.lane.b32.xlu0 %v862, 96
        %v868 = vpop.permute.xlu0 %867
        %v871 = vsub.f32 %v859, %v866
        %v872 = vsub.f32 %v860, %v868
        %873 = vst.msk [vmem:[%s840] sm:$0xff] %vm733, %v871
        %874 = vst.msk [vmem:[%s840 + $0x8] sm:$0xff] %vm733, %v872
        %v875 = vmul.f32 %v611, %v737
        %v876 = vmul.f32 %v615, %v739
        %v877 = vmul.f32 %v611, %v745
        %v878 = vmul.f32 %v615, %v747
        %881 = vrot.lane.b32.xlu0 %v877, 32
        %v882 = vpop.permute.xlu0 %881
        %883 = vrot.lane.b32.xlu0 %v878, 32
        %v884 = vpop.permute.xlu0 %883
        %v887 = vadd.f32 %v875, %v882
        %v888 = vadd.f32 %v876, %v884
        %889 = vst.msk [vmem:[%s840] sm:$0xff] %vm762, %v887
        %890 = vst.msk [vmem:[%s840 + $0x8] sm:$0xff] %vm762, %v888
        %v891 = vld [vmem:[%s840] sm:$0xff]
        %v892 = vld [vmem:[%s840 + $0x8] sm:$0xff]
        %v893 = vpack.c.bf16 %v892, %v891
        %895 = vrot.lane.b32.xlu0 %v893, 64
        %v896 = vpop.permute.xlu0 %895
        %v898 = vsel %vm771, %v893, 0
        %v901 = vsel %vm771, %v896, 0
        %903 = vmatprep.subr.bf16.mxu0 0
        %904 = vmatpush1.bf16.xpose.msra.mxu0 %v901
        %905 = vmatprep.subr.bf16.mxu0 0
        %906 = vmatpush1.bf16.xpose.msra.mxu0 0
        %907 = vmatprep.subr.bf16.mxu0 0
        %908 = vmatpush1.bf16.xpose.msra.mxu0 0
        %909 = vmatprep.subr.bf16.mxu0 0
        %910 = vmatpush1.bf16.xpose.msra.mxu0 0
        %911 = vmatprep.subr.bf16.mxu0 0
        %912 = vmatpush1.bf16.xpose.msra.mxu0 0
        %913 = vmatprep.subr.bf16.mxu0 0
        %914 = vmatpush1.bf16.xpose.msra.mxu0 0
        %915 = vmatprep.subr.bf16.mxu0 0
        %916 = vmatpush1.bf16.xpose.msra.mxu0 0
        %917 = vmatprep.subr.bf16.mxu0 0
        %918 = vmatpush1.bf16.xpose.msra.mxu0 0
        %919 = vmatprep.subr.bf16.mxu0 0
        %920 = vmatpush1.bf16.xpose.msra.mxu0 0
        %921 = vmatprep.subr.bf16.mxu0 0
        %922 = vmatpush1.bf16.xpose.msra.mxu0 0
        %923 = vmatprep.subr.bf16.mxu0 0
        %924 = vmatpush1.bf16.xpose.msra.mxu0 0
        %925 = vmatprep.subr.bf16.mxu0 0
        %926 = vmatpush1.bf16.xpose.msra.mxu0 0
        %927 = vmatprep.subr.bf16.mxu0 0
        %928 = vmatpush1.bf16.xpose.msra.mxu0 0
        %929 = vmatprep.subr.bf16.mxu0 0
        %930 = vmatpush1.bf16.xpose.msra.mxu0 0
        %931 = vmatprep.subr.bf16.mxu0 0
        %932 = vmatpush1.bf16.xpose.msra.mxu0 0
        %933 = vmatprep.subr.bf16.mxu0 0
        %934 = vmatpush1.bf16.xpose.msra.mxu0 0
        %935 = vmatprep.mubr.bf16.mxu0 0
        %936 = vmatmul.mubr.bf16.gmra.mrb[0].mxu0 %v898
        %v937 = vpop.f32.mrb[0].mxu0
        %v938 = vadd.f32 0.0, %v937
        %v939 = vpop.f32.mrb[0].mxu0
        %v940 = vpop.f32.mrb[0].mxu0
        %v941 = vadd.f32 0.0, %v940
        %v942 = vpop.f32.mrb[0].mxu0
        %943 = vdwg.mxu0
        %v944 = vmul.f32 %v938, %v640
        %v945 = vmul.f32 %v941, %v641
        %v946 = vadd.f32 %v944, %v655
        %v947 = vadd.f32 %v945, %v656
        %s948 = scalar_lea.vmem %s453, 16 [#allocation15]
        %949 = vst.msk [vmem:[%s948] sm:$0xff] %vm823, %v946
        %950 = vst.msk [vmem:[%s948 + $0x8] sm:$0xff] %vm823, %v947
        %s951 = sand.u32 %s223, 1
        %s952 = scalar_lea.sflag [#allocation5], %s951
        %s953 = sand.u32 %s223, 1
        %s954 = smul.addr %s953, 32
        %s955 = scalar_lea.vmem [#allocation15], %s954
        // Predicated region
        $region77: #{global_pointer_for_rel_forward.12} parent=47 // pred_check
          %p956 = pneg %p233
        $region78: #{global_pointer_for_rel_forward.12} parent=47 // pred_check_branch
          %958 = sbr.rel (%p956) target = $region80
        $region79: #{global_pointer_for_rel_forward.12} parent=47 // pred_region
          %s959 = smul.u32 2, %s34
          %s961 = ssub.s32 512, 512
          %962 = vsyncadd %s952, %s961
          %s963 = smul.addr %s959, 2
          %s964 = smul.addr %s33, 4
          %s965 = sadd.s32 %s963, %s964
          %s966 = smul.addr %s965, 128
          %s967 = scalar_lea.hbm %s7, %s966
          %s968 = sshll.u32 %s955, 4
          %s969 = int_to_ptr.vmem [resolvable:$true] %s968
          %974 = dma.vmem_to_hbm [thread:$0]  %s969, 512, %s967, %s952, 128, 128, 8
        $region80: #{global_pointer_for_rel_forward.12} parent=47 // pred_fallthru
          _
      $region48: #{global_pointer_for_rel_forward.12} parent=5 // pred_fallthru
        _
      %p975 = scmp.le.s32.totalorder 2, %s24
      // Predicated region
      $region81: #{global_pointer_for_rel_forward.12} parent=5 // pred_check
        %p976 = pneg %p975
      $region82: #{global_pointer_for_rel_forward.12} parent=5 // pred_check_branch
        %978 = sbr.rel (%p976) target = $region84
      $region83: #{global_pointer_for_rel_forward.12} parent=5 // pred_region
        %s979 = ssub.s32 %s24, 2
        // Predicated region
        $region85: #{global_pointer_for_rel_forward.12} parent=83 // pred_check
          %p980 = pneg %p239
        $region86: #{global_pointer_for_rel_forward.12} parent=83 // pred_check_branch
          %982 = sbr.rel (%p980) target = $region88
        $region87: #{global_pointer_for_rel_forward.12} parent=83 // pred_region
          %s983 = sand.u32 %s224, 1
          %s984 = scalar_lea.sflag [#allocation5], %s983
          %s985 = sand.u32 %s224, 1
          %s986 = smul.addr %s985, 32
          %s987 = scalar_lea.vmem [#allocation15], %s986
          %988 = dma.done %s984, 512
        $region88: #{global_pointer_for_rel_forward.12} parent=83 // pred_fallthru
          _
      $region84: #{global_pointer_for_rel_forward.12} parent=5 // pred_fallthru
        _
    $region6: #{global_pointer_for_rel_forward.12} parent=1 // loop_footer
      %s28 = sadd.s32 1, %s24
    $region7: #{global_pointer_for_rel_forward.12} parent=1 // loop_footer_branch
      %23 = sbr.rel target = $region3
    $region8: #{global_pointer_for_rel_forward.12} parent=1 // loop_exit
      _
    %989 = vsyncpa [#allocation4], 1
    %s990 = scalar_lea.sflag [#allocation4], 1
    %991 = vsyncpa %s990, 1
    %992 = vsyncpa [#allocation7], 1
    %993 = vsyncpa [#allocation10], 1
    %994 = vsyncpa [#allocation13], 1
    %s995 = scalar_lea.sflag [#allocation13], 1
    %996 = vsyncpa %s995, 1
    %997 = vsyncpa [#allocation5], 1
    %s998 = scalar_lea.sflag [#allocation5], 1
    %999 = vsyncpa %s998, 1

</llo_original>
